<compile_context>
chip_gen: v6e
topology: v6e:2x2x1
jax: 0.10.0
libtpu: 0.0.40
codegen_flags: <defaults>
</compile_context>

<pallas_src>
import functools

import jax
import jax.numpy as jnp
from jax.experimental import pallas as pl
from jax.experimental.pallas import tpu as pltpu

LANE = 128                       # all kernel output widths padded to this
_VMEM_LIMIT = 32 * 1024 * 1024   # safe on v5e/v6e/v7x; blocks below use << this


# ----------------------------- Pallas kernels ------------------------------ #

def _matmul_bias_kernel(x_ref, w_ref, b_ref, o_ref, *, relu):
    """One M-tile of  y = x @ w + b (+ReLU).  bf16 inputs, f32 accumulate."""
    acc = jnp.dot(x_ref[...], w_ref[...], preferred_element_type=jnp.float32)
    acc = acc + b_ref[...]                       # (1, N) f32 broadcast
    if relu:
        acc = jnp.maximum(acc, 0.0)
    o_ref[...] = acc.astype(o_ref.dtype)


def _head_kernel(p3_ref, w3_ref, b3_ref, w1_ref, b1_ref, w2_ref, b2_ref,
                 o_ref, *, spatial):
    """Fused conv3 (as im2col matmul) + fc1 + fc2 for one batch tile.

    p3_ref: (S, tb, K3) conv3 patches, one leading slot per output spatial
    position, so the NHWC flatten feeding fc1 becomes a static unrolled
    accumulation over S (no in-kernel reshape / relayout needed).
    """
    tb = o_ref.shape[0]
    acc = jnp.zeros((tb, w1_ref.shape[-1]), jnp.float32)
    for s in range(spatial):                     # static unroll, S is small
        h = jnp.dot(p3_ref[s], w3_ref[...], preferred_element_type=jnp.float32)
        h = jnp.maximum(h + b3_ref[...], 0.0).astype(jnp.bfloat16)
        acc = acc + jnp.dot(h, w1_ref[s], preferred_element_type=jnp.float32)
    h1 = jnp.maximum(acc + b1_ref[...], 0.0).astype(jnp.bfloat16)
    out = jnp.dot(h1, w2_ref[...], preferred_element_type=jnp.float32)
    o_ref[...] = (out + b2_ref[...]).astype(o_ref.dtype)


# ------------------------------ kernel wrappers ----------------------------- #

def linear_pallas(x, w, b, *, relu, out_dtype, tile_m=512):
    """y = x @ w + b (+ReLU), tiled over M.
    x:(M,K) bf16, w:(K,N) bf16, b:(1,N) f32; N must be a multiple of 128."""
    M, K = x.shape
    K2, N = w.shape
    assert K == K2 and N % LANE == 0, (K, K2, N)
    if M <= tile_m:
        tm, Mp = M, M                            # single full-extent block
    else:
        tm = tile_m                              # multiple of 8
        Mp = pl.cdiv(M, tm) * tm
        x = jnp.pad(x, ((0, Mp - M), (0, 0)))
    out = pl.pallas_call(
        functools.partial(_matmul_bias_kernel, relu=relu),
        out_shape=jax.ShapeDtypeStruct((Mp, N), out_dtype),
        grid=(Mp // tm,),
        in_specs=[
            pl.BlockSpec((tm, K), lambda i: (i, 0)),
            pl.BlockSpec((K, N), lambda i: (0, 0)),
            pl.BlockSpec((1, N), lambda i: (0, 0)),
        ],
        out_specs=pl.BlockSpec((tm, N), lambda i: (i, 0)),
        compiler_params=pltpu.CompilerParams(
            dimension_semantics=("parallel",),
            vmem_limit_bytes=_VMEM_LIMIT),
    )(x, w, b)
    return out if Mp == M else out[:M]


def mlp_head_pallas(p3, pp):
    """Fused conv3 + fc1 + fc2.  p3: (S, B, K3) bf16 conv3 im2col patches of
    conv2's padded-channel NHWC output.  Returns (B, 128) f32 (columns past
    num_actions are zero and sliced off by the caller)."""
    S, B, K3 = p3.shape
    if B <= 64:
        tb = B                                   # single full-extent block
    else:                                        # keep patch slab small in VMEM
        tb = max(8, (min(128, (4 * 1024 * 1024) // (S * K3 * 2)) // 8) * 8)
    Bp = pl.cdiv(B, tb) * tb
    if Bp != B:
        p3 = jnp.pad(p3, ((0, 0), (0, Bp - B), (0, 0)))
    out = pl.pallas_call(
        functools.partial(_head_kernel, spatial=S),
        out_shape=jax.ShapeDtypeStruct((Bp, LANE), jnp.float32),
        grid=(Bp // tb,),
        in_specs=[
            pl.BlockSpec((S, tb, K3), lambda i: (0, i, 0)),
            pl.BlockSpec(pp["c3_w"].shape, lambda i: (0, 0)),
            pl.BlockSpec((1, LANE), lambda i: (0, 0)),
            pl.BlockSpec(pp["fc1_w"].shape, lambda i: (0, 0, 0)),
            pl.BlockSpec((1, 512), lambda i: (0, 0)),
            pl.BlockSpec(pp["fc2_w"].shape, lambda i: (0, 0)),
            pl.BlockSpec((1, LANE), lambda i: (0, 0)),
        ],
        out_specs=pl.BlockSpec((tb, LANE), lambda i: (i, 0)),
        compiler_params=pltpu.CompilerParams(
            dimension_semantics=("parallel",),
            vmem_limit_bytes=_VMEM_LIMIT),
    )(p3, pp["c3_w"], pp["c3_b"], pp["fc1_w"], pp["fc1_b"],
      pp["fc2_w"], pp["fc2_b"])
    return out if Bp == B else out[:B]


# ------------------------------ conv via im2col ----------------------------- #

def _im2col_nhwc(x, kh, kw, stride):
    """x:(B,H,W,C) -> (B*OH*OW, kh*kw*C); columns ordered (kh, kw, C)."""
    B, H, W, C = x.shape
    OH = (H - kh) // stride + 1
    OW = (W - kw) // stride + 1
    cols = []
    for i in range(kh):
        for j in range(kw):
            cols.append(x[:, i:i + stride * OH:stride,
                          j:j + stride * OW:stride, :])
    cols = jnp.stack(cols, axis=3)               # (B, OH, OW, kh*kw, C)
    return cols.reshape(B * OH * OW, kh * kw * C), OH, OW


# ------------------------------- CNNDQN model ------------------------------- #

def _conv_out(n, k, s):
    return (n - k) // s + 1


def feature_size(input_shape):
    c, h, w = input_shape
    h1, w1 = _conv_out(h, 8, 4), _conv_out(w, 8, 4)
    h2, w2 = _conv_out(h1, 4, 2), _conv_out(w1, 4, 2)
    h3, w3 = _conv_out(h2, 3, 1), _conv_out(w2, 3, 1)
    return 64 * h3 * w3, (h3, w3)


def init_params(key, input_shape, num_actions):
    """Deterministic PyTorch-layout params (Conv: OIHW; Linear stored (in,out))."""
    c_in = input_shape[0]
    fs, _ = feature_size(input_shape)

    def uni(key, shape, fan_in):
        bound = 1.0 / jnp.sqrt(jnp.float32(fan_in))
        return jax.random.uniform(key, shape, jnp.float32, -bound, bound)

    ks = jax.random.split(key, 10)
    return {
        "c1_w": uni(ks[0], (32, c_in, 8, 8), c_in * 64),
        "c1_b": uni(ks[1], (32,), c_in * 64),
        "c2_w": uni(ks[2], (64, 32, 4, 4), 32 * 16),
        "c2_b": uni(ks[3], (64,), 32 * 16),
        "c3_w": uni(ks[4], (64, 64, 3, 3), 64 * 9),
        "c3_b": uni(ks[5], (64,), 64 * 9),
        "fc1_w": uni(ks[6], (fs, 512), fs),
        "fc1_b": uni(ks[7], (512,), fs),
        "fc2_w": uni(ks[8], (512, num_actions), 512),
        "fc2_b": uni(ks[9], (num_actions,), 512),
    }


def prepare_params(params, input_shape, num_actions):
    """One-time transform to kernel-friendly layouts (done at init, not per call):
       conv w -> (kh*kw*Cin_pad, 128) bf16, rows ordered (kh, kw, c);
       fc1 w rows permuted from NCHW-flatten to padded-NHWC-flatten order and
       reshaped to (S, 128, 512); fc2 padded to 128 cols;
       all biases f32, shape (1, N_pad)."""
    _, (h3, w3) = feature_size(input_shape)

    def conv_w(w_oihw, cin_pad):
        cout, cin, kh, kw = w_oihw.shape
        wm = jnp.transpose(w_oihw, (2, 3, 1, 0))              # (kh, kw, cin, cout)
        wm = jnp.pad(wm, ((0, 0), (0, 0), (0, cin_pad - cin), (0, LANE - cout)))
        return wm.reshape(kh * kw * cin_pad, LANE).astype(jnp.bfloat16)

    def bias(b, n_pad):
        return jnp.pad(b, (0, n_pad - b.shape[0])).reshape(1, n_pad).astype(
            jnp.float32)

    fc1 = params["fc1_w"].reshape(64, h3, w3, 512)
    fc1 = jnp.transpose(fc1, (1, 2, 0, 3))                    # (h3, w3, 64, 512)
    fc1 = jnp.pad(fc1, ((0, 0), (0, 0), (0, LANE - 64), (0, 0)))
    fc1 = fc1.reshape(h3 * w3, LANE, 512).astype(jnp.bfloat16)

    fc2 = jnp.pad(params["fc2_w"],
                  ((0, 0), (0, LANE - num_actions))).astype(jnp.bfloat16)

    return {
        "c1_w": conv_w(params["c1_w"], params["c1_w"].shape[1]),
        "c1_b": bias(params["c1_b"], LANE),
        "c2_w": conv_w(params["c2_w"], LANE),
        "c2_b": bias(params["c2_b"], LANE),
        "c3_w": conv_w(params["c3_w"], LANE),
        "c3_b": bias(params["c3_b"], LANE),
        "fc1_w": fc1,
        "fc1_b": params["fc1_b"].reshape(1, 512).astype(jnp.float32),
        "fc2_w": fc2,
        "fc2_b": bias(params["fc2_b"], LANE),
    }


def cnndqn_forward(pp, x, num_actions):
    """x: (B, C, H, W) float32 (PyTorch NCHW) -> (B, num_actions) float32."""
    B = x.shape[0]
    h = jnp.transpose(x, (0, 2, 3, 1)).astype(jnp.bfloat16)   # NHWC, bf16

    # conv1 (+ReLU): 8x8 stride 4, output channels padded to 128
    p, oh, ow = _im2col_nhwc(h, 8, 8, 4)
    h = linear_pallas(p, pp["c1_w"], pp["c1_b"], relu=True,
                      out_dtype=jnp.bfloat16).reshape(B, oh, ow, LANE)

    # conv2 (+ReLU): 4x4 stride 2
    p, oh, ow = _im2col_nhwc(h, 4, 4, 2)
    h = linear_pallas(p, pp["c2_w"], pp["c2_b"], relu=True,
                      out_dtype=jnp.bfloat16).reshape(B, oh, ow, LANE)

    # fused conv3 (+ReLU) + fc1 (+ReLU) + fc2
    p, oh, ow = _im2col_nhwc(h, 3, 3, 1)
    S = oh * ow
    p3 = p.reshape(B, S, p.shape[-1]).transpose(1, 0, 2)      # (S, B, K3)
    q = mlp_head_pallas(p3, pp)
    return q[:, :num_actions]


# ----------------------------- pure-JAX reference --------------------------- #

def reference_forward(params, x):
    """Reference with the same mixed-precision policy (bf16 MXU inputs, f32
    accumulation, f32 bias+ReLU, bf16 activations between layers)."""
    def conv(x, w, b, s):
        y = jax.lax.conv_general_dilated(
            x.astype(jnp.bfloat16), w.astype(jnp.bfloat16), (s, s), "VALID",
            dimension_numbers=("NCHW", "OIHW", "NCHW"),
            preferred_element_type=jnp.float32)
        return jax.nn.relu(y + b[None, :, None, None]).astype(jnp.bfloat16)

    h = conv(x, params["c1_w"], params["c1_b"], 4)
    h = conv(h, params["c2_w"], params["c2_b"], 2)
    h = conv(h, params["c3_w"], params["c3_b"], 1)
    h = h.reshape(h.shape[0], -1)                 # torch .view(B, -1) on NCHW
    h = jnp.dot(h, params["fc1_w"].astype(jnp.bfloat16),
                preferred_element_type=jnp.float32) + params["fc1_b"]
    h = jax.nn.relu(h).astype(jnp.bfloat16)
    return jnp.dot(h, params["fc2_w"].astype(jnp.bfloat16),
                   preferred_element_type=jnp.float32) + params["fc2_b"]


# ------------------------------------ main ----------------------------------- #

if __name__ == "__main__":
    # Small shapes consistent with the conv chain (8/4 -> 4/2 -> 3/1):
    # 44 -> 10 -> 4 -> 2 spatially; feature_size = 64*2*2 = 256, so the
    # NHWC-flatten weight permutation and the fused head's spatial loop are
    # both exercised.
    batch = 2
    input_shape = (4, 44, 44)          # (C, H, W)
    num_actions = 25                   # the act() dict reads indices 0..24

    key = jax.random.PRNGKey(0)
    k_param, k_x = jax.random.split(key)
    params = init_params(k_param, input_shape, num_actions)
    pp = prepare_params(params, input_shape, num_actions)
    x = jax.random.normal(k_x, (batch,) + input_shape, jnp.float32)

    fwd = jax.jit(cnndqn_forward, static_argnames="num_actions")
    q = jax.block_until_ready(fwd(pp, x, num_actions=num_actions))

    q_ref = reference_forward(params, x)
    assert q.shape == (batch, num_actions), q.shape
    max_err = float(jnp.max(jnp.abs(q - q_ref)))
    assert jnp.allclose(q, q_ref, atol=5e-3, rtol=5e-3), max_err

    print("KERNEL_OK")
</pallas_src>

<mosaic_0001>
module attributes {stable_mosaic.version = 11 : i64} {
  func.func @_matmul_bias_kernel(%arg0: i32, %arg1: memref<200x256xbf16, #tpu.memory_space<vmem>>, %arg2: memref<256x128xbf16, #tpu.memory_space<vmem>>, %arg3: memref<1x128xf32, #tpu.memory_space<vmem>>, %arg4: memref<200x128xbf16, #tpu.memory_space<vmem>>) attributes {dimension_semantics = [#tpu.dimension_semantics<parallel>], iteration_bounds = array<i64: 1>, scalar_prefetch = 0 : i64, scratch_operands = 0 : i64, tpu.core_type = #tpu.core_type<tc>, window_params = [{transform_indices = @transform_0, window_bounds = array<i64: 200, 256>}, {pipeline_mode = #tpu.pipeline_mode<synchronous>, transform_indices = @transform_1, window_bounds = array<i64: 256, 128>}, {pipeline_mode = #tpu.pipeline_mode<synchronous>, transform_indices = @transform_2, window_bounds = array<i64: 1, 128>}, {transform_indices = @transform_3, window_bounds = array<i64: 200, 128>}]} {
    %c0 = arith.constant 0 : index
    %c0_0 = arith.constant 0 : index
    %0 = vector.load %arg1[%c0, %c0_0] : memref<200x256xbf16, #tpu.memory_space<vmem>>, vector<200x256xbf16>
    %c0_1 = arith.constant 0 : index
    %c0_2 = arith.constant 0 : index
    %1 = vector.load %arg2[%c0_1, %c0_2] : memref<256x128xbf16, #tpu.memory_space<vmem>>, vector<256x128xbf16>
    %cst = arith.constant dense<0.000000e+00> : vector<200x128xf32>
    %2 = tpu.matmul %0, %1, %cst {dimension_numbers = #tpu.dot_dimension_numbers<[1], [0], [0], [1], [0, 0, 1, 1], [], []>} : vector<200x256xbf16>, vector<256x128xbf16>, vector<200x128xf32> -> vector<200x128xf32>
    %c0_3 = arith.constant 0 : index
    %c0_4 = arith.constant 0 : index
    %3 = vector.load %arg3[%c0_3, %c0_4] : memref<1x128xf32, #tpu.memory_space<vmem>>, vector<1x128xf32>
    %4 = vector.broadcast %3 : vector<1x128xf32> to vector<200x128xf32>
    %5 = arith.addf %2, %4 : vector<200x128xf32>
    %cst_5 = arith.constant 0.000000e+00 : f32
    %6 = vector.broadcast %cst_5 : f32 to vector<200x128xf32>
    %7 = arith.maximumf %5, %6 : vector<200x128xf32>
    %8 = arith.truncf %7 : vector<200x128xf32> to vector<200x128xbf16>
    %c0_6 = arith.constant 0 : index
    %c0_7 = arith.constant 0 : index
    %9 = vector.load %arg4[%c0_6, %c0_7] : memref<200x128xbf16, #tpu.memory_space<vmem>>, vector<200x128xbf16>
    tpu.vector_store %arg4[%c0_6, %c0_7], %8 {strides = array<i32>} : memref<200x128xbf16, #tpu.memory_space<vmem>>, vector<200x128xbf16>,
    return
  }
  func.func @transform_0(%arg0: i32) -> (i32, i32) {
    %c0_i32 = arith.constant 0 : i32
    %c0_i32_0 = arith.constant 0 : i32
    return %arg0, %c0_i32 : i32, i32
  }
  func.func @transform_1(%arg0: i32) -> (i32, i32) {
    %c0_i32 = arith.constant 0 : i32
    %c0_i32_0 = arith.constant 0 : i32
    %c0_i32_1 = arith.constant 0 : i32
    return %c0_i32, %c0_i32_0 : i32, i32
  }
  func.func @transform_2(%arg0: i32) -> (i32, i32) {
    %c0_i32 = arith.constant 0 : i32
    %c0_i32_0 = arith.constant 0 : i32
    %c0_i32_1 = arith.constant 0 : i32
    return %c0_i32, %c0_i32_0 : i32, i32
  }
  func.func @transform_3(%arg0: i32) -> (i32, i32) {
    %c0_i32 = arith.constant 0 : i32
    %c0_i32_0 = arith.constant 0 : i32
    return %arg0, %c0_i32 : i32, i32
  }
}

module attributes {stable_mosaic.version = 11 : i64} {
  func.func @_matmul_bias_kernel(%arg0: i32, %arg1: memref<32x2048xbf16, #tpu.memory_space<vmem>>, %arg2: memref<2048x128xbf16, #tpu.memory_space<vmem>>, %arg3: memref<1x128xf32, #tpu.memory_space<vmem>>, %arg4: memref<32x128xbf16, #tpu.memory_space<vmem>>) attributes {dimension_semantics = [#tpu.dimension_semantics<parallel>], iteration_bounds = array<i64: 1>, scalar_prefetch = 0 : i64, scratch_operands = 0 : i64, tpu.core_type = #tpu.core_type<tc>, window_params = [{transform_indices = @transform_0, window_bounds = array<i64: 32, 2048>}, {pipeline_mode = #tpu.pipeline_mode<synchronous>, transform_indices = @transform_1, window_bounds = array<i64: 2048, 128>}, {pipeline_mode = #tpu.pipeline_mode<synchronous>, transform_indices = @transform_2, window_bounds = array<i64: 1, 128>}, {transform_indices = @transform_3, window_bounds = array<i64: 32, 128>}]} {
    %c0 = arith.constant 0 : index
    %c0_0 = arith.constant 0 : index
    %0 = vector.load %arg1[%c0, %c0_0] : memref<32x2048xbf16, #tpu.memory_space<vmem>>, vector<32x2048xbf16>
    %c0_1 = arith.constant 0 : index
    %c0_2 = arith.constant 0 : index
    %1 = vector.load %arg2[%c0_1, %c0_2] : memref<2048x128xbf16, #tpu.memory_space<vmem>>, vector<2048x128xbf16>
    %cst = arith.constant dense<0.000000e+00> : vector<32x128xf32>
    %2 = tpu.matmul %0, %1, %cst {dimension_numbers = #tpu.dot_dimension_numbers<[1], [0], [0], [1], [0, 0, 1, 1], [], []>} : vector<32x2048xbf16>, vector<2048x128xbf16>, vector<32x128xf32> -> vector<32x128xf32>
    %c0_3 = arith.constant 0 : index
    %c0_4 = arith.constant 0 : index
    %3 = vector.load %arg3[%c0_3, %c0_4] : memref<1x128xf32, #tpu.memory_space<vmem>>, vector<1x128xf32>
    %4 = vector.broadcast %3 : vector<1x128xf32> to vector<32x128xf32>
    %5 = arith.addf %2, %4 : vector<32x128xf32>
    %cst_5 = arith.constant 0.000000e+00 : f32
    %6 = vector.broadcast %cst_5 : f32 to vector<32x128xf32>
    %7 = arith.maximumf %5, %6 : vector<32x128xf32>
    %8 = arith.truncf %7 : vector<32x128xf32> to vector<32x128xbf16>
    %c0_6 = arith.constant 0 : index
    %c0_7 = arith.constant 0 : index
    %9 = vector.load %arg4[%c0_6, %c0_7] : memref<32x128xbf16, #tpu.memory_space<vmem>>, vector<32x128xbf16>
    tpu.vector_store %arg4[%c0_6, %c0_7], %8 {strides = array<i32>} : memref<32x128xbf16, #tpu.memory_space<vmem>>, vector<32x128xbf16>,
    return
  }
  func.func @transform_0(%arg0: i32) -> (i32, i32) {
    %c0_i32 = arith.constant 0 : i32
    %c0_i32_0 = arith.constant 0 : i32
    return %arg0, %c0_i32 : i32, i32
  }
  func.func @transform_1(%arg0: i32) -> (i32, i32) {
    %c0_i32 = arith.constant 0 : i32
    %c0_i32_0 = arith.constant 0 : i32
    %c0_i32_1 = arith.constant 0 : i32
    return %c0_i32, %c0_i32_0 : i32, i32
  }
  func.func @transform_2(%arg0: i32) -> (i32, i32) {
    %c0_i32 = arith.constant 0 : i32
    %c0_i32_0 = arith.constant 0 : i32
    %c0_i32_1 = arith.constant 0 : i32
    return %c0_i32, %c0_i32_0 : i32, i32
  }
  func.func @transform_3(%arg0: i32) -> (i32, i32) {
    %c0_i32 = arith.constant 0 : i32
    %c0_i32_0 = arith.constant 0 : i32
    return %arg0, %c0_i32 : i32, i32
  }
}

module attributes {stable_mosaic.version = 11 : i64} {
  func.func @_head_kernel(%arg0: i32, %arg1: memref<4x2x1152xbf16, #tpu.memory_space<vmem>>, %arg2: memref<1152x128xbf16, #tpu.memory_space<vmem>>, %arg3: memref<1x128xf32, #tpu.memory_space<vmem>>, %arg4: memref<4x128x512xbf16, #tpu.memory_space<vmem>>, %arg5: memref<1x512xf32, #tpu.memory_space<vmem>>, %arg6: memref<512x128xbf16, #tpu.memory_space<vmem>>, %arg7: memref<1x128xf32, #tpu.memory_space<vmem>>, %arg8: memref<2x128xf32, #tpu.memory_space<vmem>>) attributes {dimension_semantics = [#tpu.dimension_semantics<parallel>], iteration_bounds = array<i64: 1>, scalar_prefetch = 0 : i64, scratch_operands = 0 : i64, tpu.core_type = #tpu.core_type<tc>, window_params = [{transform_indices = @transform_0, window_bounds = array<i64: 4, 2, 1152>}, {pipeline_mode = #tpu.pipeline_mode<synchronous>, transform_indices = @transform_1, window_bounds = array<i64: 1152, 128>}, {pipeline_mode = #tpu.pipeline_mode<synchronous>, transform_indices = @transform_2, window_bounds = array<i64: 1, 128>}, {pipeline_mode = #tpu.pipeline_mode<synchronous>, transform_indices = @transform_3, window_bounds = array<i64: 4, 128, 512>}, {pipeline_mode = #tpu.pipeline_mode<synchronous>, transform_indices = @transform_4, window_bounds = array<i64: 1, 512>}, {pipeline_mode = #tpu.pipeline_mode<synchronous>, transform_indices = @transform_5, window_bounds = array<i64: 512, 128>}, {pipeline_mode = #tpu.pipeline_mode<synchronous>, transform_indices = @transform_6, window_bounds = array<i64: 1, 128>}, {transform_indices = @transform_7, window_bounds = array<i64: 2, 128>}]} {
    %cst = arith.constant 0.000000e+00 : f32
    %0 = vector.broadcast %cst : f32 to vector<2x512xf32>
    %c0 = arith.constant 0 : index
    %c0_0 = arith.constant 0 : index
    %c0_1 = arith.constant 0 : index
    %1 = vector.load %arg1[%c0, %c0_0, %c0_1] : memref<4x2x1152xbf16, #tpu.memory_space<vmem>>, vector<1x2x1152xbf16>
    %2 = vector.shape_cast %1 : vector<1x2x1152xbf16> to vector<2x1152xbf16>
    %c0_2 = arith.constant 0 : index
    %c0_3 = arith.constant 0 : index
    %3 = vector.load %arg2[%c0_2, %c0_3] : memref<1152x128xbf16, #tpu.memory_space<vmem>>, vector<1152x128xbf16>
    %cst_4 = arith.constant dense<0.000000e+00> : vector<2x128xf32>
    %4 = tpu.matmul %2, %3, %cst_4 {dimension_numbers = #tpu.dot_dimension_numbers<[1], [0], [0], [1], [0, 0, 1, 1], [], []>} : vector<2x1152xbf16>, vector<1152x128xbf16>, vector<2x128xf32> -> vector<2x128xf32>
    %c0_5 = arith.constant 0 : index
    %c0_6 = arith.constant 0 : index
    %5 = vector.load %arg3[%c0_5, %c0_6] : memref<1x128xf32, #tpu.memory_space<vmem>>, vector<1x128xf32>
    %6 = vector.broadcast %5 : vector<1x128xf32> to vector<2x128xf32>
    %7 = arith.addf %4, %6 : vector<2x128xf32>
    %cst_7 = arith.constant 0.000000e+00 : f32
    %8 = vector.broadcast %cst_7 : f32 to vector<2x128xf32>
    %9 = arith.maximumf %7, %8 : vector<2x128xf32>
    %10 = arith.truncf %9 : vector<2x128xf32> to vector<2x128xbf16>
    %c0_8 = arith.constant 0 : index
    %c0_9 = arith.constant 0 : index
    %c0_10 = arith.constant 0 : index
    %11 = vector.load %arg4[%c0_8, %c0_9, %c0_10] : memref<4x128x512xbf16, #tpu.memory_space<vmem>>, vector<1x128x512xbf16>
    %12 = vector.shape_cast %11 : vector<1x128x512xbf16> to vector<128x512xbf16>
    %cst_11 = arith.constant dense<0.000000e+00> : vector<2x512xf32>
    %13 = tpu.matmul %10, %12, %cst_11 {dimension_numbers = #tpu.dot_dimension_numbers<[1], [0], [0], [1], [0, 0, 1, 1], [], []>} : vector<2x128xbf16>, vector<128x512xbf16>, vector<2x512xf32> -> vector<2x512xf32>
    %14 = arith.addf %0, %13 : vector<2x512xf32>
    %c1 = arith.constant 1 : index
    %c0_12 = arith.constant 0 : index
    %c0_13 = arith.constant 0 : index
    %15 = vector.load %arg1[%c1, %c0_12, %c0_13] : memref<4x2x1152xbf16, #tpu.memory_space<vmem>>, vector<1x2x1152xbf16>
    %16 = vector.shape_cast %15 : vector<1x2x1152xbf16> to vector<2x1152xbf16>
    %c0_14 = arith.constant 0 : index
    %c0_15 = arith.constant 0 : index
    %17 = vector.load %arg2[%c0_14, %c0_15] : memref<1152x128xbf16, #tpu.memory_space<vmem>>, vector<1152x128xbf16>
    %cst_16 = arith.constant dense<0.000000e+00> : vector<2x128xf32>
    %18 = tpu.matmul %16, %17, %cst_16 {dimension_numbers = #tpu.dot_dimension_numbers<[1], [0], [0], [1], [0, 0, 1, 1], [], []>} : vector<2x1152xbf16>, vector<1152x128xbf16>, vector<2x128xf32> -> vector<2x128xf32>
    %c0_17 = arith.constant 0 : index
    %c0_18 = arith.constant 0 : index
    %19 = vector.load %arg3[%c0_17, %c0_18] : memref<1x128xf32, #tpu.memory_space<vmem>>, vector<1x128xf32>
    %20 = vector.broadcast %19 : vector<1x128xf32> to vector<2x128xf32>
    %21 = arith.addf %18, %20 : vector<2x128xf32>
    %cst_19 = arith.constant 0.000000e+00 : f32
    %22 = vector.broadcast %cst_19 : f32 to vector<2x128xf32>
    %23 = arith.maximumf %21, %22 : vector<2x128xf32>
    %24 = arith.truncf %23 : vector<2x128xf32> to vector<2x128xbf16>
    %c1_20 = arith.constant 1 : index
    %c0_21 = arith.constant 0 : index
    %c0_22 = arith.constant 0 : index
    %25 = vector.load %arg4[%c1_20, %c0_21, %c0_22] : memref<4x128x512xbf16, #tpu.memory_space<vmem>>, vector<1x128x512xbf16>
    %26 = vector.shape_cast %25 : vector<1x128x512xbf16> to vector<128x512xbf16>
    %cst_23 = arith.constant dense<0.000000e+00> : vector<2x512xf32>
    %27 = tpu.matmul %24, %26, %cst_23 {dimension_numbers = #tpu.dot_dimension_numbers<[1], [0], [0], [1], [0, 0, 1, 1], [], []>} : vector<2x128xbf16>, vector<128x512xbf16>, vector<2x512xf32> -> vector<2x512xf32>
    %28 = arith.addf %14, %27 : vector<2x512xf32>
    %c2 = arith.constant 2 : index
    %c0_24 = arith.constant 0 : index
    %c0_25 = arith.constant 0 : index
    %29 = vector.load %arg1[%c2, %c0_24, %c0_25] : memref<4x2x1152xbf16, #tpu.memory_space<vmem>>, vector<1x2x1152xbf16>
    %30 = vector.shape_cast %29 : vector<1x2x1152xbf16> to vector<2x1152xbf16>
    %c0_26 = arith.constant 0 : index
    %c0_27 = arith.constant 0 : index
    %31 = vector.load %arg2[%c0_26, %c0_27] : memref<1152x128xbf16, #tpu.memory_space<vmem>>, vector<1152x128xbf16>
    %cst_28 = arith.constant dense<0.000000e+00> : vector<2x128xf32>
    %32 = tpu.matmul %30, %31, %cst_28 {dimension_numbers = #tpu.dot_dimension_numbers<[1], [0], [0], [1], [0, 0, 1, 1], [], []>} : vector<2x1152xbf16>, vector<1152x128xbf16>, vector<2x128xf32> -> vector<2x128xf32>
    %c0_29 = arith.constant 0 : index
    %c0_30 = arith.constant 0 : index
    %33 = vector.load %arg3[%c0_29, %c0_30] : memref<1x128xf32, #tpu.memory_space<vmem>>, vector<1x128xf32>
    %34 = vector.broadcast %33 : vector<1x128xf32> to vector<2x128xf32>
    %35 = arith.addf %32, %34 : vector<2x128xf32>
    %cst_31 = arith.constant 0.000000e+00 : f32
    %36 = vector.broadcast %cst_31 : f32 to vector<2x128xf32>
    %37 = arith.maximumf %35, %36 : vector<2x128xf32>
    %38 = arith.truncf %37 : vector<2x128xf32> to vector<2x128xbf16>
    %c2_32 = arith.constant 2 : index
    %c0_33 = arith.constant 0 : index
    %c0_34 = arith.constant 0 : index
    %39 = vector.load %arg4[%c2_32, %c0_33, %c0_34] : memref<4x128x512xbf16, #tpu.memory_space<vmem>>, vector<1x128x512xbf16>
    %40 = vector.shape_cast %39 : vector<1x128x512xbf16> to vector<128x512xbf16>
    %cst_35 = arith.constant dense<0.000000e+00> : vector<2x512xf32>
    %41 = tpu.matmul %38, %40, %cst_35 {dimension_numbers = #tpu.dot_dimension_numbers<[1], [0], [0], [1], [0, 0, 1, 1], [], []>} : vector<2x128xbf16>, vector<128x512xbf16>, vector<2x512xf32> -> vector<2x512xf32>
    %42 = arith.addf %28, %41 : vector<2x512xf32>
    %c3 = arith.constant 3 : index
    %c0_36 = arith.constant 0 : index
    %c0_37 = arith.constant 0 : index
    %43 = vector.load %arg1[%c3, %c0_36, %c0_37] : memref<4x2x1152xbf16, #tpu.memory_space<vmem>>, vector<1x2x1152xbf16>
    %44 = vector.shape_cast %43 : vector<1x2x1152xbf16> to vector<2x1152xbf16>
    %c0_38 = arith.constant 0 : index
    %c0_39 = arith.constant 0 : index
    %45 = vector.load %arg2[%c0_38, %c0_39] : memref<1152x128xbf16, #tpu.memory_space<vmem>>, vector<1152x128xbf16>
    %cst_40 = arith.constant dense<0.000000e+00> : vector<2x128xf32>
    %46 = tpu.matmul %44, %45, %cst_40 {dimension_numbers = #tpu.dot_dimension_numbers<[1], [0], [0], [1], [0, 0, 1, 1], [], []>} : vector<2x1152xbf16>, vector<1152x128xbf16>, vector<2x128xf32> -> vector<2x128xf32>
    %c0_41 = arith.constant 0 : index
    %c0_42 = arith.constant 0 : index
    %47 = vector.load %arg3[%c0_41, %c0_42] : memref<1x128xf32, #tpu.memory_space<vmem>>, vector<1x128xf32>
    %48 = vector.broadcast %47 : vector<1x128xf32> to vector<2x128xf32>
    %49 = arith.addf %46, %48 : vector<2x128xf32>
    %cst_43 = arith.constant 0.000000e+00 : f32
    %50 = vector.broadcast %cst_43 : f32 to vector<2x128xf32>
    %51 = arith.maximumf %49, %50 : vector<2x128xf32>
    %52 = arith.truncf %51 : vector<2x128xf32> to vector<2x128xbf16>
    %c3_44 = arith.constant 3 : index
    %c0_45 = arith.constant 0 : index
    %c0_46 = arith.constant 0 : index
    %53 = vector.load %arg4[%c3_44, %c0_45, %c0_46] : memref<4x128x512xbf16, #tpu.memory_space<vmem>>, vector<1x128x512xbf16>
    %54 = vector.shape_cast %53 : vector<1x128x512xbf16> to vector<128x512xbf16>
    %cst_47 = arith.constant dense<0.000000e+00> : vector<2x512xf32>
    %55 = tpu.matmul %52, %54, %cst_47 {dimension_numbers = #tpu.dot_dimension_numbers<[1], [0], [0], [1], [0, 0, 1, 1], [], []>} : vector<2x128xbf16>, vector<128x512xbf16>, vector<2x512xf32> -> vector<2x512xf32>
    %56 = arith.addf %42, %55 : vector<2x512xf32>
    %c0_48 = arith.constant 0 : index
    %c0_49 = arith.constant 0 : index
    %57 = vector.load %arg5[%c0_48, %c0_49] : memref<1x512xf32, #tpu.memory_space<vmem>>, vector<1x512xf32>
    %58 = vector.broadcast %57 : vector<1x512xf32> to vector<2x512xf32>
    %59 = arith.addf %56, %58 : vector<2x512xf32>
    %cst_50 = arith.constant 0.000000e+00 : f32
    %60 = vector.broadcast %cst_50 : f32 to vector<2x512xf32>
    %61 = arith.maximumf %59, %60 : vector<2x512xf32>
    %62 = arith.truncf %61 : vector<2x512xf32> to vector<2x512xbf16>
    %c0_51 = arith.constant 0 : index
    %c0_52 = arith.constant 0 : index
    %63 = vector.load %arg6[%c0_51, %c0_52] : memref<512x128xbf16, #tpu.memory_space<vmem>>, vector<512x128xbf16>
    %cst_53 = arith.constant dense<0.000000e+00> : vector<2x128xf32>
    %64 = tpu.matmul %62, %63, %cst_53 {dimension_numbers = #tpu.dot_dimension_numbers<[1], [0], [0], [1], [0, 0, 1, 1], [], []>} : vector<2x512xbf16>, vector<512x128xbf16>, vector<2x128xf32> -> vector<2x128xf32>
    %c0_54 = arith.constant 0 : index
    %c0_55 = arith.constant 0 : index
    %65 = vector.load %arg7[%c0_54, %c0_55] : memref<1x128xf32, #tpu.memory_space<vmem>>, vector<1x128xf32>
    %66 = vector.broadcast %65 : vector<1x128xf32> to vector<2x128xf32>
    %67 = arith.addf %64, %66 : vector<2x128xf32>
    %c0_56 = arith.constant 0 : index
    %c0_57 = arith.constant 0 : index
    %68 = vector.load %arg8[%c0_56, %c0_57] : memref<2x128xf32, #tpu.memory_space<vmem>>, vector<2x128xf32>
    tpu.vector_store %arg8[%c0_56, %c0_57], %67 {strides = array<i32>} : memref<2x128xf32, #tpu.memory_space<vmem>>, vector<2x128xf32>,
    return
  }
  func.func @transform_0(%arg0: i32) -> (i32, i32, i32) {
    %c0_i32 = arith.constant 0 : i32
    %c0_i32_0 = arith.constant 0 : i32
    %c0_i32_1 = arith.constant 0 : i32
    return %c0_i32, %arg0, %c0_i32_0 : i32, i32, i32
  }
  func.func @transform_1(%arg0: i32) -> (i32, i32) {
    %c0_i32 = arith.constant 0 : i32
    %c0_i32_0 = arith.constant 0 : i32
    %c0_i32_1 = arith.constant 0 : i32
    return %c0_i32, %c0_i32_0 : i32, i32
  }
  func.func @transform_2(%arg0: i32) -> (i32, i32) {
    %c0_i32 = arith.constant 0 : i32
    %c0_i32_0 = arith.constant 0 : i32
    %c0_i32_1 = arith.constant 0 : i32
    return %c0_i32, %c0_i32_0 : i32, i32
  }
  func.func @transform_3(%arg0: i32) -> (i32, i32, i32) {
    %c0_i32 = arith.constant 0 : i32
    %c0_i32_0 = arith.constant 0 : i32
    %c0_i32_1 = arith.constant 0 : i32
    %c0_i32_2 = arith.constant 0 : i32
    return %c0_i32, %c0_i32_0, %c0_i32_1 : i32, i32, i32
  }
  func.func @transform_4(%arg0: i32) -> (i32, i32) {
    %c0_i32 = arith.constant 0 : i32
    %c0_i32_0 = arith.constant 0 : i32
    %c0_i32_1 = arith.constant 0 : i32
    return %c0_i32, %c0_i32_0 : i32, i32
  }
  func.func @transform_5(%arg0: i32) -> (i32, i32) {
    %c0_i32 = arith.constant 0 : i32
    %c0_i32_0 = arith.constant 0 : i32
    %c0_i32_1 = arith.constant 0 : i32
    return %c0_i32, %c0_i32_0 : i32, i32
  }
  func.func @transform_6(%arg0: i32) -> (i32, i32) {
    %c0_i32 = arith.constant 0 : i32
    %c0_i32_0 = arith.constant 0 : i32
    %c0_i32_1 = arith.constant 0 : i32
    return %c0_i32, %c0_i32_0 : i32, i32
  }
  func.func @transform_7(%arg0: i32) -> (i32, i32) {
    %c0_i32 = arith.constant 0 : i32
    %c0_i32_0 = arith.constant 0 : i32
    return %arg0, %c0_i32 : i32, i32
  }
}

</mosaic_0001>

<llo_original>
// kernel: cnndqn_forward.3
$region0: #{cnndqn_forward.3}
  #allocation0 [shape = 'u32[]', space=smem, size = 0x4, offset = 0x4, fixed_abs, tag = 'smem constant byte address 0x4 - core index']
  #allocation1 [shape = 'u32[144,128]{1,0:T(1,128)}', space=vmem, size = 0x12000, scoped, tag = 'internal scratch']
  %s0 = inlined_call_operand.vmem [shape: bf16[200,256], index: 0, kind: input, shape index: {}]
  %s1 = inlined_call_operand.vmem [shape: bf16[256,128], index: 1, kind: input, shape index: {}]
  %s2 = inlined_call_operand.vmem [shape: f32[1,128], index: 2, kind: input, shape index: {}]
  %s3 = inlined_call_operand.vmem [shape: bf16[200,128], index: 3, kind: output, shape index: {}]
  %s4 = sld [smem:[#allocation0]]
  $region22: #{cnndqn_forward.3} parent=0
    _
  %s6 = ssub.s32 1, %s4
  %s7 = scalar_select 0, %s6, %s4
  // Predicated region
  $region2: #{cnndqn_forward.3} parent=0 // pred_check
    _
  $region3: #{cnndqn_forward.3} parent=0 // pred_check_branch
    %9 = sbr.rel (0) target = $region5
  $region4: #{cnndqn_forward.3} parent=0 // pred_region
    _
  $region5: #{cnndqn_forward.3} parent=0 // pred_fallthru
    _
  // Predicated region
  $region6: #{cnndqn_forward.3} parent=0 // pred_check
    _
  $region7: #{cnndqn_forward.3} parent=0 // pred_check_branch
    %11 = sbr.rel (0) target = $region9
  $region8: #{cnndqn_forward.3} parent=0 // pred_region
    _
  $region9: #{cnndqn_forward.3} parent=0 // pred_fallthru
    _
  // Predicated region
  $region10: #{cnndqn_forward.3} parent=0 // pred_check
    _
  $region11: #{cnndqn_forward.3} parent=0 // pred_check_branch
    %13 = sbr.rel (0) target = $region13
  $region12: #{cnndqn_forward.3} parent=0 // pred_region
    _
  $region13: #{cnndqn_forward.3} parent=0 // pred_fallthru
    _
  %v15 = vld [vmem:[%s0] sm:$0xff]
  %v16 = vld [vmem:[%s0 + $0x8] sm:$0xff]
  %v17 = vld [vmem:[%s0 + $0x10] sm:$0xff]
  %v18 = vld [vmem:[%s0 + $0x18] sm:$0xff]
  %v19 = vld [vmem:[%s0 + $0x20] sm:$0xff]
  %v20 = vld [vmem:[%s0 + $0x28] sm:$0xff]
  %v21 = vld [vmem:[%s0 + $0x30] sm:$0xff]
  %v22 = vld [vmem:[%s0 + $0x38] sm:$0xff]
  %v23 = vld [vmem:[%s0 + $0x40] sm:$0xff]
  %v24 = vld [vmem:[%s0 + $0x48] sm:$0xff]
  %v25 = vld [vmem:[%s0 + $0x50] sm:$0xff]
  %v26 = vld [vmem:[%s0 + $0x58] sm:$0xff]
  %v27 = vld [vmem:[%s0 + $0x60] sm:$0xff]
  %v28 = vld [vmem:[%s0 + $0x68] sm:$0xff]
  %v29 = vld [vmem:[%s0 + $0x70] sm:$0xff]
  %v30 = vld [vmem:[%s0 + $0x78] sm:$0xff]
  %v31 = vld [vmem:[%s0 + $0x80] sm:$0xff]
  %v32 = vld [vmem:[%s0 + $0x88] sm:$0xff]
  %v33 = vld [vmem:[%s0 + $0x90] sm:$0xff]
  %v34 = vld [vmem:[%s0 + $0x98] sm:$0xff]
  %v35 = vld [vmem:[%s0 + $0xa0] sm:$0xff]
  %v36 = vld [vmem:[%s0 + $0xa8] sm:$0xff]
  %v37 = vld [vmem:[%s0 + $0xb0] sm:$0xff]
  %v38 = vld [vmem:[%s0 + $0xb8] sm:$0xff]
  %v39 = vld [vmem:[%s0 + $0xc0] sm:$0xff]
  %v40 = vld [vmem:[%s1] sm:$0xf]
  %v41 = vld [vmem:[%s1 + $0x4] sm:$0xf]
  %v42 = vld [vmem:[%s1 + $0x8] sm:$0xf]
  %v43 = vld [vmem:[%s1 + $0xc] sm:$0xf]
  %v44 = vld [vmem:[%s1 + $0x10] sm:$0xf]
  %v45 = vld [vmem:[%s1 + $0x14] sm:$0xf]
  %v46 = vld [vmem:[%s1 + $0x18] sm:$0xf]
  %v47 = vld [vmem:[%s1 + $0x1c] sm:$0xf]
  %v48 = vld [vmem:[%s1 + $0x20] sm:$0xf]
  %v49 = vld [vmem:[%s1 + $0x24] sm:$0xf]
  %v50 = vld [vmem:[%s1 + $0x28] sm:$0xf]
  %v51 = vld [vmem:[%s1 + $0x2c] sm:$0xf]
  %v52 = vld [vmem:[%s1 + $0x30] sm:$0xf]
  %v53 = vld [vmem:[%s1 + $0x34] sm:$0xf]
  %v54 = vld [vmem:[%s1 + $0x38] sm:$0xf]
  %v55 = vld [vmem:[%s1 + $0x3c] sm:$0xf]
  %v56 = vld [vmem:[%s1 + $0x40] sm:$0xf]
  %v57 = vld [vmem:[%s1 + $0x44] sm:$0xf]
  %v58 = vld [vmem:[%s1 + $0x48] sm:$0xf]
  %v59 = vld [vmem:[%s1 + $0x4c] sm:$0xf]
  %v60 = vld [vmem:[%s1 + $0x50] sm:$0xf]
  %v61 = vld [vmem:[%s1 + $0x54] sm:$0xf]
  %v62 = vld [vmem:[%s1 + $0x58] sm:$0xf]
  %v63 = vld [vmem:[%s1 + $0x5c] sm:$0xf]
  %v64 = vld [vmem:[%s1 + $0x60] sm:$0xf]
  %v65 = vld [vmem:[%s1 + $0x64] sm:$0xf]
  %v66 = vld [vmem:[%s1 + $0x68] sm:$0xf]
  %v67 = vld [vmem:[%s1 + $0x6c] sm:$0xf]
  %v68 = vld [vmem:[%s1 + $0x70] sm:$0xf]
  %v69 = vld [vmem:[%s1 + $0x74] sm:$0xf]
  %v70 = vld [vmem:[%s1 + $0x78] sm:$0xf]
  %v71 = vld [vmem:[%s1 + $0x7c] sm:$0xf]
  %v72 = vld [vmem:[%s2] sm:$0x1]
  %v74 = vlaneseq
  %v75 = vshrl.u32 %v74, 7
  %v76 = vsub.s32 0, %v75
  %v77 = vrot.slane %v72, %v76
  %v104 = vunpack.c.l.b16 %v15
  %v105 = vunpack.c.h.b16 %v15
  %v106 = vunpack.c.l.b16 %v16
  %v107 = vunpack.c.h.b16 %v16
  %v108 = vunpack.c.l.b16 %v17
  %v109 = vunpack.c.h.b16 %v17
  %v110 = vunpack.c.l.b16 %v18
  %v111 = vunpack.c.h.b16 %v18
  %v112 = vunpack.c.l.b16 %v19
  %v113 = vunpack.c.h.b16 %v19
  %v114 = vunpack.c.l.b16 %v20
  %v115 = vunpack.c.h.b16 %v20
  %v116 = vunpack.c.l.b16 %v21
  %v117 = vunpack.c.h.b16 %v21
  %v118 = vunpack.c.l.b16 %v22
  %v119 = vunpack.c.h.b16 %v22
  %v120 = vunpack.c.l.b16 %v23
  %v121 = vunpack.c.h.b16 %v23
  %v122 = vunpack.c.l.b16 %v24
  %v123 = vunpack.c.h.b16 %v24
  %v124 = vunpack.c.l.b16 %v25
  %v125 = vunpack.c.h.b16 %v25
  %v126 = vunpack.c.l.b16 %v26
  %v127 = vunpack.c.h.b16 %v26
  %v128 = vunpack.c.l.b16 %v27
  %v129 = vunpack.c.h.b16 %v27
  %v130 = vunpack.c.l.b16 %v28
  %v131 = vunpack.c.h.b16 %v28
  %v132 = vunpack.c.l.b16 %v29
  %v133 = vunpack.c.h.b16 %v29
  %v134 = vunpack.c.l.b16 %v30
  %v135 = vunpack.c.h.b16 %v30
  %v136 = vunpack.c.l.b16 %v31
  %v137 = vunpack.c.h.b16 %v31
  %v138 = vunpack.c.l.b16 %v32
  %v139 = vunpack.c.h.b16 %v32
  %v140 = vunpack.c.l.b16 %v33
  %v141 = vunpack.c.h.b16 %v33
  %v142 = vunpack.c.l.b16 %v34
  %v143 = vunpack.c.h.b16 %v34
  %v144 = vunpack.c.l.b16 %v35
  %v145 = vunpack.c.h.b16 %v35
  %v146 = vunpack.c.l.b16 %v36
  %v147 = vunpack.c.h.b16 %v36
  %v148 = vunpack.c.l.b16 %v37
  %v149 = vunpack.c.h.b16 %v37
  %v150 = vunpack.c.l.b16 %v38
  %v151 = vunpack.c.h.b16 %v38
  %v152 = vunpack.c.l.b16 %v39
  %v153 = vunpack.c.h.b16 %v39
  %v154 = vpack.c.b16 %v106, %v104
  %v155 = vpack.c.b16 %v107, %v105
  %v156 = vpack.c.b16 %v110, %v108
  %v157 = vpack.c.b16 %v111, %v109
  %v158 = vpack.c.b16 %v114, %v112
  %v159 = vpack.c.b16 %v115, %v113
  %v160 = vpack.c.b16 %v118, %v116
  %v161 = vpack.c.b16 %v119, %v117
  %v162 = vpack.c.b16 %v122, %v120
  %v163 = vpack.c.b16 %v123, %v121
  %v164 = vpack.c.b16 %v126, %v124
  %v165 = vpack.c.b16 %v127, %v125
  %v166 = vpack.c.b16 %v130, %v128
  %v167 = vpack.c.b16 %v131, %v129
  %v168 = vpack.c.b16 %v134, %v132
  %v169 = vpack.c.b16 %v135, %v133
  %v170 = vpack.c.b16 %v138, %v136
  %v171 = vpack.c.b16 %v139, %v137
  %v172 = vpack.c.b16 %v142, %v140
  %v173 = vpack.c.b16 %v143, %v141
  %v174 = vpack.c.b16 %v146, %v144
  %v175 = vpack.c.b16 %v147, %v145
  %v176 = vpack.c.b16 %v150, %v148
  %v177 = vpack.c.b16 %v151, %v149
  %v178 = vpack.c.b16 %v152, %v152
  %v179 = vpack.c.b16 %v153, %v153
  %v238 = vunpack.c.l.b16 %v40
  %v239 = vunpack.c.l.b16 %v41
  %v240 = vunpack.c.l.b16 %v42
  %v241 = vunpack.c.l.b16 %v43
  %v242 = vunpack.c.l.b16 %v44
  %v243 = vunpack.c.l.b16 %v45
  %v244 = vunpack.c.l.b16 %v46
  %v245 = vunpack.c.l.b16 %v47
  %v246 = vunpack.c.l.b16 %v48
  %v247 = vunpack.c.l.b16 %v49
  %v248 = vunpack.c.l.b16 %v50
  %v249 = vunpack.c.l.b16 %v51
  %v250 = vunpack.c.l.b16 %v52
  %v251 = vunpack.c.l.b16 %v53
  %v252 = vunpack.c.l.b16 %v54
  %v253 = vunpack.c.l.b16 %v55
  %v254 = vunpack.c.l.b16 %v56
  %v255 = vunpack.c.l.b16 %v57
  %v256 = vunpack.c.l.b16 %v58
  %v257 = vunpack.c.l.b16 %v59
  %v258 = vunpack.c.l.b16 %v60
  %v259 = vunpack.c.l.b16 %v61
  %v260 = vunpack.c.l.b16 %v62
  %v261 = vunpack.c.l.b16 %v63
  %v262 = vunpack.c.l.b16 %v64
  %v263 = vunpack.c.l.b16 %v65
  %v264 = vunpack.c.l.b16 %v66
  %v265 = vunpack.c.l.b16 %v67
  %v266 = vunpack.c.l.b16 %v68
  %v267 = vunpack.c.l.b16 %v69
  %v268 = vunpack.c.l.b16 %v70
  %v269 = vunpack.c.l.b16 %v71
  %v270 = vpack.c.b16 %v239, %v238
  %v271 = vpack.c.b16 %v241, %v240
  %v272 = vpack.c.b16 %v243, %v242
  %v273 = vpack.c.b16 %v245, %v244
  %v274 = vpack.c.b16 %v247, %v246
  %v275 = vpack.c.b16 %v249, %v248
  %v276 = vpack.c.b16 %v251, %v250
  %v277 = vpack.c.b16 %v253, %v252
  %v278 = vpack.c.b16 %v255, %v254
  %v279 = vpack.c.b16 %v257, %v256
  %v280 = vpack.c.b16 %v259, %v258
  %v281 = vpack.c.b16 %v261, %v260
  %v282 = vpack.c.b16 %v263, %v262
  %v283 = vpack.c.b16 %v265, %v264
  %v284 = vpack.c.b16 %v267, %v266
  %v285 = vpack.c.b16 %v269, %v268
  %302 = vmatprep.subr.bf16.mxu0 0
  %303 = vmatpush1.bf16.msra.mxu0 %v277
  %304 = vmatprep.subr.bf16.mxu0 0
  %305 = vmatpush1.bf16.msra.mxu0 %v276
  %306 = vmatprep.subr.bf16.mxu0 0
  %307 = vmatpush1.bf16.msra.mxu0 %v275
  %308 = vmatprep.subr.bf16.mxu0 0
  %309 = vmatpush1.bf16.msra.mxu0 %v274
  %310 = vmatprep.subr.bf16.mxu0 0
  %311 = vmatpush1.bf16.msra.mxu0 %v273
  %312 = vmatprep.subr.bf16.mxu0 0
  %313 = vmatpush1.bf16.msra.mxu0 %v272
  %314 = vmatprep.subr.bf16.mxu0 0
  %315 = vmatpush1.bf16.msra.mxu0 %v271
  %316 = vmatprep.subr.bf16.mxu0 0
  %317 = vmatpush1.bf16.msra.mxu0 %v270
  %318 = vmatprep.subr.bf16.mxu0 0
  %319 = vmatpush2.bf16.msra.mxu0 %v285
  %320 = vmatprep.subr.bf16.mxu0 0
  %321 = vmatpush2.bf16.msra.mxu0 %v284
  %322 = vmatprep.subr.bf16.mxu0 0
  %323 = vmatpush2.bf16.msra.mxu0 %v283
  %324 = vmatprep.subr.bf16.mxu0 0
  %325 = vmatpush2.bf16.msra.mxu0 %v282
  %326 = vmatprep.subr.bf16.mxu0 0
  %327 = vmatpush2.bf16.msra.mxu0 %v281
  %328 = vmatprep.subr.bf16.mxu0 0
  %329 = vmatpush2.bf16.msra.mxu0 %v280
  %330 = vmatprep.subr.bf16.mxu0 0
  %331 = vmatpush2.bf16.msra.mxu0 %v279
  %332 = vmatprep.subr.bf16.mxu0 0
  %333 = vmatpush2.bf16.msra.mxu0 %v278
  %334 = vmatprep.mubr.bf16.mxu0 %v155
  %335 = vmatmul.mubr.bf16.gmra.mxu0 %v154
  %v336 = vpop.f32.mrf.mxu0
  %v337 = vadd.f32 %v77, %v336
  %v338 = vpop.f32.mrf.mxu0
  %v339 = vpop.f32.mrf.mxu0
  %v340 = vadd.f32 %v77, %v339
  %v341 = vpop.f32.mrf.mxu0
  %342 = vmatprep.mubr.bf16.mxu0 %v157
  %343 = vmatmul.mubr.bf16.gmra.mxu0 %v156
  %v344 = vpop.f32.mrf.mxu0
  %v345 = vadd.f32 %v77, %v344
  %v346 = vpop.f32.mrf.mxu0
  %v347 = vpop.f32.mrf.mxu0
  %v348 = vadd.f32 %v77, %v347
  %v349 = vpop.f32.mrf.mxu0
  %350 = vmatprep.mubr.bf16.mxu0 %v159
  %351 = vmatmul.mubr.bf16.gmra.mxu0 %v158
  %v352 = vpop.f32.mrf.mxu0
  %v353 = vadd.f32 %v77, %v352
  %v354 = vpop.f32.mrf.mxu0
  %v355 = vpop.f32.mrf.mxu0
  %v356 = vadd.f32 %v77, %v355
  %v357 = vpop.f32.mrf.mxu0
  %358 = vmatprep.mubr.bf16.mxu0 %v161
  %359 = vmatmul.mubr.bf16.gmra.mxu0 %v160
  %v360 = vpop.f32.mrf.mxu0
  %v361 = vadd.f32 %v77, %v360
  %v362 = vpop.f32.mrf.mxu0
  %v363 = vpop.f32.mrf.mxu0
  %v364 = vadd.f32 %v77, %v363
  %v365 = vpop.f32.mrf.mxu0
  %366 = vmatprep.mubr.bf16.mxu0 %v163
  %367 = vmatmul.mubr.bf16.gmra.mxu0 %v162
  %v368 = vpop.f32.mrf.mxu0
  %v369 = vadd.f32 %v77, %v368
  %v370 = vpop.f32.mrf.mxu0
  %v371 = vpop.f32.mrf.mxu0
  %v372 = vadd.f32 %v77, %v371
  %v373 = vpop.f32.mrf.mxu0
  %374 = vmatprep.mubr.bf16.mxu0 %v165
  %375 = vmatmul.mubr.bf16.gmra.mxu0 %v164
  %v376 = vpop.f32.mrf.mxu0
  %v377 = vadd.f32 %v77, %v376
  %v378 = vpop.f32.mrf.mxu0
  %v379 = vpop.f32.mrf.mxu0
  %v380 = vadd.f32 %v77, %v379
  %v381 = vpop.f32.mrf.mxu0
  %382 = vmatprep.mubr.bf16.mxu0 %v167
  %383 = vmatmul.mubr.bf16.gmra.mxu0 %v166
  %v384 = vpop.f32.mrf.mxu0
  %v385 = vadd.f32 %v77, %v384
  %v386 = vpop.f32.mrf.mxu0
  %v387 = vpop.f32.mrf.mxu0
  %v388 = vadd.f32 %v77, %v387
  %v389 = vpop.f32.mrf.mxu0
  %390 = vmatprep.mubr.bf16.mxu0 %v169
  %391 = vmatmul.mubr.bf16.gmra.mxu0 %v168
  %v392 = vpop.f32.mrf.mxu0
  %v393 = vadd.f32 %v77, %v392
  %v394 = vpop.f32.mrf.mxu0
  %v395 = vpop.f32.mrf.mxu0
  %v396 = vadd.f32 %v77, %v395
  %v397 = vpop.f32.mrf.mxu0
  %398 = vmatprep.mubr.bf16.mxu0 %v171
  %399 = vmatmul.mubr.bf16.gmra.mxu0 %v170
  %v400 = vpop.f32.mrf.mxu0
  %v401 = vadd.f32 %v77, %v400
  %v402 = vpop.f32.mrf.mxu0
  %v403 = vpop.f32.mrf.mxu0
  %v404 = vadd.f32 %v77, %v403
  %v405 = vpop.f32.mrf.mxu0
  %406 = vmatprep.mubr.bf16.mxu0 %v173
  %407 = vmatmul.mubr.bf16.gmra.mxu0 %v172
  %v408 = vpop.f32.mrf.mxu0
  %v409 = vadd.f32 %v77, %v408
  %v410 = vpop.f32.mrf.mxu0
  %v411 = vpop.f32.mrf.mxu0
  %v412 = vadd.f32 %v77, %v411
  %v413 = vpop.f32.mrf.mxu0
  %414 = vmatprep.mubr.bf16.mxu0 %v175
  %415 = vmatmul.mubr.bf16.gmra.mxu0 %v174
  %v416 = vpop.f32.mrf.mxu0
  %v417 = vadd.f32 %v77, %v416
  %v418 = vpop.f32.mrf.mxu0
  %v419 = vpop.f32.mrf.mxu0
  %v420 = vadd.f32 %v77, %v419
  %v421 = vpop.f32.mrf.mxu0
  %422 = vmatprep.mubr.bf16.mxu0 %v177
  %423 = vmatmul.mubr.bf16.gmra.mxu0 %v176
  %v424 = vpop.f32.mrf.mxu0
  %v425 = vadd.f32 %v77, %v424
  %v426 = vpop.f32.mrf.mxu0
  %v427 = vpop.f32.mrf.mxu0
  %v428 = vadd.f32 %v77, %v427
  %v429 = vpop.f32.mrf.mxu0
  %430 = vmatprep.mubr.bf16.mxu0 %v179
  %431 = vmatmul.mubr.bf16.gmra.mxu0 %v178
  %v432 = vpop.f32.mrf.mxu0
  %v433 = vadd.f32 %v77, %v432
  %v434 = vpop.f32.mrf.mxu0
  %v435 = vpop.f32.mrf.mxu0
  %v436 = vpop.f32.mrf.mxu0
  %437 = vdwg.mxu0
  %v438 = vmax.f32 %v337, 0.0
  %v439 = vmax.f32 %v340, 0.0
  %v440 = vmax.f32 %v345, 0.0
  %v441 = vmax.f32 %v348, 0.0
  %v442 = vmax.f32 %v353, 0.0
  %v443 = vmax.f32 %v356, 0.0
  %v444 = vmax.f32 %v361, 0.0
  %v445 = vmax.f32 %v364, 0.0
  %v446 = vmax.f32 %v369, 0.0
  %v447 = vmax.f32 %v372, 0.0
  %v448 = vmax.f32 %v377, 0.0
  %v449 = vmax.f32 %v380, 0.0
  %v450 = vmax.f32 %v385, 0.0
  %v451 = vmax.f32 %v388, 0.0
  %v452 = vmax.f32 %v393, 0.0
  %v453 = vmax.f32 %v396, 0.0
  %v454 = vmax.f32 %v401, 0.0
  %v455 = vmax.f32 %v404, 0.0
  %v456 = vmax.f32 %v409, 0.0
  %v457 = vmax.f32 %v412, 0.0
  %v458 = vmax.f32 %v417, 0.0
  %v459 = vmax.f32 %v420, 0.0
  %v460 = vmax.f32 %v425, 0.0
  %v461 = vmax.f32 %v428, 0.0
  %v462 = vmax.f32 %v433, 0.0
  %v463 = vpack.c.bf16 %v439, %v438
  %v464 = vpack.c.bf16 %v441, %v440
  %v465 = vpack.c.bf16 %v443, %v442
  %v466 = vpack.c.bf16 %v445, %v444
  %v467 = vpack.c.bf16 %v447, %v446
  %v468 = vpack.c.bf16 %v449, %v448
  %v469 = vpack.c.bf16 %v451, %v450
  %v470 = vpack.c.bf16 %v453, %v452
  %v471 = vpack.c.bf16 %v455, %v454
  %v472 = vpack.c.bf16 %v457, %v456
  %v473 = vpack.c.bf16 %v459, %v458
  %v474 = vpack.c.bf16 %v461, %v460
  %v475 = vpack.c.bf16 %v462, %v462
  %v489 = vunpack.c.l.b16 %v463
  %v490 = vunpack.c.h.b16 %v463
  %v491 = vunpack.c.l.b16 %v464
  %v492 = vunpack.c.h.b16 %v464
  %v493 = vunpack.c.l.b16 %v465
  %v494 = vunpack.c.h.b16 %v465
  %v495 = vunpack.c.l.b16 %v466
  %v496 = vunpack.c.h.b16 %v466
  %v497 = vunpack.c.l.b16 %v467
  %v498 = vunpack.c.h.b16 %v467
  %v499 = vunpack.c.l.b16 %v468
  %v500 = vunpack.c.h.b16 %v468
  %v501 = vunpack.c.l.b16 %v469
  %v502 = vunpack.c.h.b16 %v469
  %v503 = vunpack.c.l.b16 %v470
  %v504 = vunpack.c.h.b16 %v470
  %v505 = vunpack.c.l.b16 %v471
  %v506 = vunpack.c.h.b16 %v471
  %v507 = vunpack.c.l.b16 %v472
  %v508 = vunpack.c.h.b16 %v472
  %v509 = vunpack.c.l.b16 %v473
  %v510 = vunpack.c.h.b16 %v473
  %v511 = vunpack.c.l.b16 %v474
  %v512 = vunpack.c.h.b16 %v474
  %v513 = vunpack.c.l.b16 %v475
  %v514 = vpack.c.b16 %v489, %v489
  %v515 = vpack.c.b16 %v490, %v490
  %v516 = vpack.c.b16 %v491, %v491
  %v517 = vpack.c.b16 %v492, %v492
  %v518 = vpack.c.b16 %v493, %v493
  %v519 = vpack.c.b16 %v494, %v494
  %v520 = vpack.c.b16 %v495, %v495
  %v521 = vpack.c.b16 %v496, %v496
  %v522 = vpack.c.b16 %v497, %v497
  %v523 = vpack.c.b16 %v498, %v498
  %v524 = vpack.c.b16 %v499, %v499
  %v525 = vpack.c.b16 %v500, %v500
  %v526 = vpack.c.b16 %v501, %v501
  %v527 = vpack.c.b16 %v502, %v502
  %v528 = vpack.c.b16 %v503, %v503
  %v529 = vpack.c.b16 %v504, %v504
  %v530 = vpack.c.b16 %v505, %v505
  %v531 = vpack.c.b16 %v506, %v506
  %v532 = vpack.c.b16 %v507, %v507
  %v533 = vpack.c.b16 %v508, %v508
  %v534 = vpack.c.b16 %v509, %v509
  %v535 = vpack.c.b16 %v510, %v510
  %v536 = vpack.c.b16 %v511, %v511
  %v537 = vpack.c.b16 %v512, %v512
  %v538 = vpack.c.b16 %v513, %v513
  %564 = vst [vmem:[%s3] sm:$0xf] %v514
  %565 = vst [vmem:[%s3 + $0x4] sm:$0xf] %v515
  %566 = vst [vmem:[%s3 + $0x8] sm:$0xf] %v516
  %567 = vst [vmem:[%s3 + $0xc] sm:$0xf] %v517
  %568 = vst [vmem:[%s3 + $0x10] sm:$0xf] %v518
  %569 = vst [vmem:[%s3 + $0x14] sm:$0xf] %v519
  %570 = vst [vmem:[%s3 + $0x18] sm:$0xf] %v520
  %571 = vst [vmem:[%s3 + $0x1c] sm:$0xf] %v521
  %572 = vst [vmem:[%s3 + $0x20] sm:$0xf] %v522
  %573 = vst [vmem:[%s3 + $0x24] sm:$0xf] %v523
  %574 = vst [vmem:[%s3 + $0x28] sm:$0xf] %v524
  %575 = vst [vmem:[%s3 + $0x2c] sm:$0xf] %v525
  %576 = vst [vmem:[%s3 + $0x30] sm:$0xf] %v526
  %577 = vst [vmem:[%s3 + $0x34] sm:$0xf] %v527
  %578 = vst [vmem:[%s3 + $0x38] sm:$0xf] %v528
  %579 = vst [vmem:[%s3 + $0x3c] sm:$0xf] %v529
  %580 = vst [vmem:[%s3 + $0x40] sm:$0xf] %v530
  %581 = vst [vmem:[%s3 + $0x44] sm:$0xf] %v531
  %582 = vst [vmem:[%s3 + $0x48] sm:$0xf] %v532
  %583 = vst [vmem:[%s3 + $0x4c] sm:$0xf] %v533
  %584 = vst [vmem:[%s3 + $0x50] sm:$0xf] %v534
  %585 = vst [vmem:[%s3 + $0x54] sm:$0xf] %v535
  %586 = vst [vmem:[%s3 + $0x58] sm:$0xf] %v536
  %587 = vst [vmem:[%s3 + $0x5c] sm:$0xf] %v537
  %588 = vst [vmem:[%s3 + $0x60] sm:$0xf] %v538
  // Predicated region
  $region14: #{cnndqn_forward.3} parent=0 // pred_check
    _
  $region15: #{cnndqn_forward.3} parent=0 // pred_check_branch
    %590 = sbr.rel (0) target = $region17
  $region16: #{cnndqn_forward.3} parent=0 // pred_region
    _
  $region17: #{cnndqn_forward.3} parent=0 // pred_fallthru
    _
  // Predicated region
  $region18: #{cnndqn_forward.3} parent=0 // pred_check
    _
  $region19: #{cnndqn_forward.3} parent=0 // pred_check_branch
    %592 = sbr.rel (0) target = $region21
  $region20: #{cnndqn_forward.3} parent=0 // pred_region
    _
  $region21: #{cnndqn_forward.3} parent=0 // pred_fallthru
    _

// kernel: cnndqn_forward.4
$region0: #{cnndqn_forward.4}
  #allocation0 [shape = 'u32[]', space=smem, size = 0x4, offset = 0x4, fixed_abs, tag = 'smem constant byte address 0x4 - core index']
  #allocation1 [shape = 'u32[144,128]{1,0:T(1,128)}', space=vmem, size = 0x12000, scoped, tag = 'internal scratch']
  %s0 = inlined_call_operand.vmem [shape: bf16[32,2048], index: 0, kind: input, shape index: {}]
  %s1 = inlined_call_operand.vmem [shape: bf16[2048,128], index: 1, kind: input, shape index: {}]
  %s2 = inlined_call_operand.vmem [shape: f32[1,128], index: 2, kind: input, shape index: {}]
  %s3 = inlined_call_operand.vmem [shape: bf16[32,128], index: 3, kind: output, shape index: {}]
  %s4 = sld [smem:[#allocation0]]
  $region22: #{cnndqn_forward.4} parent=0
    _
  %s6 = ssub.s32 1, %s4
  %s7 = scalar_select 0, %s6, %s4
  // Predicated region
  $region2: #{cnndqn_forward.4} parent=0 // pred_check
    _
  $region3: #{cnndqn_forward.4} parent=0 // pred_check_branch
    %9 = sbr.rel (0) target = $region5
  $region4: #{cnndqn_forward.4} parent=0 // pred_region
    _
  $region5: #{cnndqn_forward.4} parent=0 // pred_fallthru
    _
  // Predicated region
  $region6: #{cnndqn_forward.4} parent=0 // pred_check
    _
  $region7: #{cnndqn_forward.4} parent=0 // pred_check_branch
    %11 = sbr.rel (0) target = $region9
  $region8: #{cnndqn_forward.4} parent=0 // pred_region
    _
  $region9: #{cnndqn_forward.4} parent=0 // pred_fallthru
    _
  // Predicated region
  $region10: #{cnndqn_forward.4} parent=0 // pred_check
    _
  $region11: #{cnndqn_forward.4} parent=0 // pred_check_branch
    %13 = sbr.rel (0) target = $region13
  $region12: #{cnndqn_forward.4} parent=0 // pred_region
    _
  $region13: #{cnndqn_forward.4} parent=0 // pred_fallthru
    _
  %v15 = vld [vmem:[%s0] sm:$0xff]
  %v16 = vld [vmem:[%s0 + $0x8] sm:$0xff]
  %v17 = vld [vmem:[%s0 + $0x10] sm:$0xff]
  %v18 = vld [vmem:[%s0 + $0x18] sm:$0xff]
  %v19 = vld [vmem:[%s0 + $0x20] sm:$0xff]
  %v20 = vld [vmem:[%s0 + $0x28] sm:$0xff]
  %v21 = vld [vmem:[%s0 + $0x30] sm:$0xff]
  %v22 = vld [vmem:[%s0 + $0x38] sm:$0xff]
  %v23 = vld [vmem:[%s0 + $0x40] sm:$0xff]
  %v24 = vld [vmem:[%s0 + $0x48] sm:$0xff]
  %v25 = vld [vmem:[%s0 + $0x50] sm:$0xff]
  %v26 = vld [vmem:[%s0 + $0x58] sm:$0xff]
  %v27 = vld [vmem:[%s0 + $0x60] sm:$0xff]
  %v28 = vld [vmem:[%s0 + $0x68] sm:$0xff]
  %v29 = vld [vmem:[%s0 + $0x70] sm:$0xff]
  %v30 = vld [vmem:[%s0 + $0x78] sm:$0xff]
  %v31 = vld [vmem:[%s0 + $0x80] sm:$0xff]
  %v32 = vld [vmem:[%s0 + $0x88] sm:$0xff]
  %v33 = vld [vmem:[%s0 + $0x90] sm:$0xff]
  %v34 = vld [vmem:[%s0 + $0x98] sm:$0xff]
  %v35 = vld [vmem:[%s0 + $0xa0] sm:$0xff]
  %v36 = vld [vmem:[%s0 + $0xa8] sm:$0xff]
  %v37 = vld [vmem:[%s0 + $0xb0] sm:$0xff]
  %v38 = vld [vmem:[%s0 + $0xb8] sm:$0xff]
  %v39 = vld [vmem:[%s0 + $0xc0] sm:$0xff]
  %v40 = vld [vmem:[%s0 + $0xc8] sm:$0xff]
  %v41 = vld [vmem:[%s0 + $0xd0] sm:$0xff]
  %v42 = vld [vmem:[%s0 + $0xd8] sm:$0xff]
  %v43 = vld [vmem:[%s0 + $0xe0] sm:$0xff]
  %v44 = vld [vmem:[%s0 + $0xe8] sm:$0xff]
  %v45 = vld [vmem:[%s0 + $0xf0] sm:$0xff]
  %v46 = vld [vmem:[%s0 + $0xf8] sm:$0xff]
  %v47 = vld [vmem:[%s1] sm:$0xf]
  %v48 = vld [vmem:[%s1 + $0x4] sm:$0xf]
  %v49 = vld [vmem:[%s1 + $0x8] sm:$0xf]
  %v50 = vld [vmem:[%s1 + $0xc] sm:$0xf]
  %v51 = vld [vmem:[%s1 + $0x10] sm:$0xf]
  %v52 = vld [vmem:[%s1 + $0x14] sm:$0xf]
  %v53 = vld [vmem:[%s1 + $0x18] sm:$0xf]
  %v54 = vld [vmem:[%s1 + $0x1c] sm:$0xf]
  %v55 = vld [vmem:[%s1 + $0x20] sm:$0xf]
  %v56 = vld [vmem:[%s1 + $0x24] sm:$0xf]
  %v57 = vld [vmem:[%s1 + $0x28] sm:$0xf]
  %v58 = vld [vmem:[%s1 + $0x2c] sm:$0xf]
  %v59 = vld [vmem:[%s1 + $0x30] sm:$0xf]
  %v60 = vld [vmem:[%s1 + $0x34] sm:$0xf]
  %v61 = vld [vmem:[%s1 + $0x38] sm:$0xf]
  %v62 = vld [vmem:[%s1 + $0x3c] sm:$0xf]
  %v63 = vld [vmem:[%s1 + $0x40] sm:$0xf]
  %v64 = vld [vmem:[%s1 + $0x44] sm:$0xf]
  %v65 = vld [vmem:[%s1 + $0x48] sm:$0xf]
  %v66 = vld [vmem:[%s1 + $0x4c] sm:$0xf]
  %v67 = vld [vmem:[%s1 + $0x50] sm:$0xf]
  %v68 = vld [vmem:[%s1 + $0x54] sm:$0xf]
  %v69 = vld [vmem:[%s1 + $0x58] sm:$0xf]
  %v70 = vld [vmem:[%s1 + $0x5c] sm:$0xf]
  %v71 = vld [vmem:[%s1 + $0x60] sm:$0xf]
  %v72 = vld [vmem:[%s1 + $0x64] sm:$0xf]
  %v73 = vld [vmem:[%s1 + $0x68] sm:$0xf]
  %v74 = vld [vmem:[%s1 + $0x6c] sm:$0xf]
  %v75 = vld [vmem:[%s1 + $0x70] sm:$0xf]
  %v76 = vld [vmem:[%s1 + $0x74] sm:$0xf]
  %v77 = vld [vmem:[%s1 + $0x78] sm:$0xf]
  %v78 = vld [vmem:[%s1 + $0x7c] sm:$0xf]
  %v79 = vld [vmem:[%s1 + $0x80] sm:$0xf]
  %v80 = vld [vmem:[%s1 + $0x84] sm:$0xf]
  %v81 = vld [vmem:[%s1 + $0x88] sm:$0xf]
  %v82 = vld [vmem:[%s1 + $0x8c] sm:$0xf]
  %v83 = vld [vmem:[%s1 + $0x90] sm:$0xf]
  %v84 = vld [vmem:[%s1 + $0x94] sm:$0xf]
  %v85 = vld [vmem:[%s1 + $0x98] sm:$0xf]
  %v86 = vld [vmem:[%s1 + $0x9c] sm:$0xf]
  %v87 = vld [vmem:[%s1 + $0xa0] sm:$0xf]
  %v88 = vld [vmem:[%s1 + $0xa4] sm:$0xf]
  %v89 = vld [vmem:[%s1 + $0xa8] sm:$0xf]
  %v90 = vld [vmem:[%s1 + $0xac] sm:$0xf]
  %v91 = vld [vmem:[%s1 + $0xb0] sm:$0xf]
  %v92 = vld [vmem:[%s1 + $0xb4] sm:$0xf]
  %v93 = vld [vmem:[%s1 + $0xb8] sm:$0xf]
  %v94 = vld [vmem:[%s1 + $0xbc] sm:$0xf]
  %v95 = vld [vmem:[%s1 + $0xc0] sm:$0xf]
  %v96 = vld [vmem:[%s1 + $0xc4] sm:$0xf]
  %v97 = vld [vmem:[%s1 + $0xc8] sm:$0xf]
  %v98 = vld [vmem:[%s1 + $0xcc] sm:$0xf]
  %v99 = vld [vmem:[%s1 + $0xd0] sm:$0xf]
  %v100 = vld [vmem:[%s1 + $0xd4] sm:$0xf]
  %v101 = vld [vmem:[%s1 + $0xd8] sm:$0xf]
  %v102 = vld [vmem:[%s1 + $0xdc] sm:$0xf]
  %v103 = vld [vmem:[%s1 + $0xe0] sm:$0xf]
  %v104 = vld [vmem:[%s1 + $0xe4] sm:$0xf]
  %v105 = vld [vmem:[%s1 + $0xe8] sm:$0xf]
  %v106 = vld [vmem:[%s1 + $0xec] sm:$0xf]
  %v107 = vld [vmem:[%s1 + $0xf0] sm:$0xf]
  %v108 = vld [vmem:[%s1 + $0xf4] sm:$0xf]
  %v109 = vld [vmem:[%s1 + $0xf8] sm:$0xf]
  %v110 = vld [vmem:[%s1 + $0xfc] sm:$0xf]
  %v111 = vld [vmem:[%s1 + $0x100] sm:$0xf]
  %v112 = vld [vmem:[%s1 + $0x104] sm:$0xf]
  %v113 = vld [vmem:[%s1 + $0x108] sm:$0xf]
  %v114 = vld [vmem:[%s1 + $0x10c] sm:$0xf]
  %v115 = vld [vmem:[%s1 + $0x110] sm:$0xf]
  %v116 = vld [vmem:[%s1 + $0x114] sm:$0xf]
  %v117 = vld [vmem:[%s1 + $0x118] sm:$0xf]
  %v118 = vld [vmem:[%s1 + $0x11c] sm:$0xf]
  %v119 = vld [vmem:[%s1 + $0x120] sm:$0xf]
  %v120 = vld [vmem:[%s1 + $0x124] sm:$0xf]
  %v121 = vld [vmem:[%s1 + $0x128] sm:$0xf]
  %v122 = vld [vmem:[%s1 + $0x12c] sm:$0xf]
  %v123 = vld [vmem:[%s1 + $0x130] sm:$0xf]
  %v124 = vld [vmem:[%s1 + $0x134] sm:$0xf]
  %v125 = vld [vmem:[%s1 + $0x138] sm:$0xf]
  %v126 = vld [vmem:[%s1 + $0x13c] sm:$0xf]
  %v127 = vld [vmem:[%s1 + $0x140] sm:$0xf]
  %v128 = vld [vmem:[%s1 + $0x144] sm:$0xf]
  %v129 = vld [vmem:[%s1 + $0x148] sm:$0xf]
  %v130 = vld [vmem:[%s1 + $0x14c] sm:$0xf]
  %v131 = vld [vmem:[%s1 + $0x150] sm:$0xf]
  %v132 = vld [vmem:[%s1 + $0x154] sm:$0xf]
  %v133 = vld [vmem:[%s1 + $0x158] sm:$0xf]
  %v134 = vld [vmem:[%s1 + $0x15c] sm:$0xf]
  %v135 = vld [vmem:[%s1 + $0x160] sm:$0xf]
  %v136 = vld [vmem:[%s1 + $0x164] sm:$0xf]
  %v137 = vld [vmem:[%s1 + $0x168] sm:$0xf]
  %v138 = vld [vmem:[%s1 + $0x16c] sm:$0xf]
  %v139 = vld [vmem:[%s1 + $0x170] sm:$0xf]
  %v140 = vld [vmem:[%s1 + $0x174] sm:$0xf]
  %v141 = vld [vmem:[%s1 + $0x178] sm:$0xf]
  %v142 = vld [vmem:[%s1 + $0x17c] sm:$0xf]
  %v143 = vld [vmem:[%s1 + $0x180] sm:$0xf]
  %v144 = vld [vmem:[%s1 + $0x184] sm:$0xf]
  %v145 = vld [vmem:[%s1 + $0x188] sm:$0xf]
  %v146 = vld [vmem:[%s1 + $0x18c] sm:$0xf]
  %v147 = vld [vmem:[%s1 + $0x190] sm:$0xf]
  %v148 = vld [vmem:[%s1 + $0x194] sm:$0xf]
  %v149 = vld [vmem:[%s1 + $0x198] sm:$0xf]
  %v150 = vld [vmem:[%s1 + $0x19c] sm:$0xf]
  %v151 = vld [vmem:[%s1 + $0x1a0] sm:$0xf]
  %v152 = vld [vmem:[%s1 + $0x1a4] sm:$0xf]
  %v153 = vld [vmem:[%s1 + $0x1a8] sm:$0xf]
  %v154 = vld [vmem:[%s1 + $0x1ac] sm:$0xf]
  %v155 = vld [vmem:[%s1 + $0x1b0] sm:$0xf]
  %v156 = vld [vmem:[%s1 + $0x1b4] sm:$0xf]
  %v157 = vld [vmem:[%s1 + $0x1b8] sm:$0xf]
  %v158 = vld [vmem:[%s1 + $0x1bc] sm:$0xf]
  %v159 = vld [vmem:[%s1 + $0x1c0] sm:$0xf]
  %v160 = vld [vmem:[%s1 + $0x1c4] sm:$0xf]
  %v161 = vld [vmem:[%s1 + $0x1c8] sm:$0xf]
  %v162 = vld [vmem:[%s1 + $0x1cc] sm:$0xf]
  %v163 = vld [vmem:[%s1 + $0x1d0] sm:$0xf]
  %v164 = vld [vmem:[%s1 + $0x1d4] sm:$0xf]
  %v165 = vld [vmem:[%s1 + $0x1d8] sm:$0xf]
  %v166 = vld [vmem:[%s1 + $0x1dc] sm:$0xf]
  %v167 = vld [vmem:[%s1 + $0x1e0] sm:$0xf]
  %v168 = vld [vmem:[%s1 + $0x1e4] sm:$0xf]
  %v169 = vld [vmem:[%s1 + $0x1e8] sm:$0xf]
  %v170 = vld [vmem:[%s1 + $0x1ec] sm:$0xf]
  %v171 = vld [vmem:[%s1 + $0x1f0] sm:$0xf]
  %v172 = vld [vmem:[%s1 + $0x1f4] sm:$0xf]
  %v173 = vld [vmem:[%s1 + $0x1f8] sm:$0xf]
  %v174 = vld [vmem:[%s1 + $0x1fc] sm:$0xf]
  %v175 = vld [vmem:[%s1 + $0x200] sm:$0xf]
  %v176 = vld [vmem:[%s1 + $0x204] sm:$0xf]
  %v177 = vld [vmem:[%s1 + $0x208] sm:$0xf]
  %v178 = vld [vmem:[%s1 + $0x20c] sm:$0xf]
  %v179 = vld [vmem:[%s1 + $0x210] sm:$0xf]
  %v180 = vld [vmem:[%s1 + $0x214] sm:$0xf]
  %v181 = vld [vmem:[%s1 + $0x218] sm:$0xf]
  %v182 = vld [vmem:[%s1 + $0x21c] sm:$0xf]
  %v183 = vld [vmem:[%s1 + $0x220] sm:$0xf]
  %v184 = vld [vmem:[%s1 + $0x224] sm:$0xf]
  %v185 = vld [vmem:[%s1 + $0x228] sm:$0xf]
  %v186 = vld [vmem:[%s1 + $0x22c] sm:$0xf]
  %v187 = vld [vmem:[%s1 + $0x230] sm:$0xf]
  %v188 = vld [vmem:[%s1 + $0x234] sm:$0xf]
  %v189 = vld [vmem:[%s1 + $0x238] sm:$0xf]
  %v190 = vld [vmem:[%s1 + $0x23c] sm:$0xf]
  %v191 = vld [vmem:[%s1 + $0x240] sm:$0xf]
  %v192 = vld [vmem:[%s1 + $0x244] sm:$0xf]
  %v193 = vld [vmem:[%s1 + $0x248] sm:$0xf]
  %v194 = vld [vmem:[%s1 + $0x24c] sm:$0xf]
  %v195 = vld [vmem:[%s1 + $0x250] sm:$0xf]
  %v196 = vld [vmem:[%s1 + $0x254] sm:$0xf]
  %v197 = vld [vmem:[%s1 + $0x258] sm:$0xf]
  %v198 = vld [vmem:[%s1 + $0x25c] sm:$0xf]
  %v199 = vld [vmem:[%s1 + $0x260] sm:$0xf]
  %v200 = vld [vmem:[%s1 + $0x264] sm:$0xf]
  %v201 = vld [vmem:[%s1 + $0x268] sm:$0xf]
  %v202 = vld [vmem:[%s1 + $0x26c] sm:$0xf]
  %v203 = vld [vmem:[%s1 + $0x270] sm:$0xf]
  %v204 = vld [vmem:[%s1 + $0x274] sm:$0xf]
  %v205 = vld [vmem:[%s1 + $0x278] sm:$0xf]
  %v206 = vld [vmem:[%s1 + $0x27c] sm:$0xf]
  %v207 = vld [vmem:[%s1 + $0x280] sm:$0xf]
  %v208 = vld [vmem:[%s1 + $0x284] sm:$0xf]
  %v209 = vld [vmem:[%s1 + $0x288] sm:$0xf]
  %v210 = vld [vmem:[%s1 + $0x28c] sm:$0xf]
  %v211 = vld [vmem:[%s1 + $0x290] sm:$0xf]
  %v212 = vld [vmem:[%s1 + $0x294] sm:$0xf]
  %v213 = vld [vmem:[%s1 + $0x298] sm:$0xf]
  %v214 = vld [vmem:[%s1 + $0x29c] sm:$0xf]
  %v215 = vld [vmem:[%s1 + $0x2a0] sm:$0xf]
  %v216 = vld [vmem:[%s1 + $0x2a4] sm:$0xf]
  %v217 = vld [vmem:[%s1 + $0x2a8] sm:$0xf]
  %v218 = vld [vmem:[%s1 + $0x2ac] sm:$0xf]
  %v219 = vld [vmem:[%s1 + $0x2b0] sm:$0xf]
  %v220 = vld [vmem:[%s1 + $0x2b4] sm:$0xf]
  %v221 = vld [vmem:[%s1 + $0x2b8] sm:$0xf]
  %v222 = vld [vmem:[%s1 + $0x2bc] sm:$0xf]
  %v223 = vld [vmem:[%s1 + $0x2c0] sm:$0xf]
  %v224 = vld [vmem:[%s1 + $0x2c4] sm:$0xf]
  %v225 = vld [vmem:[%s1 + $0x2c8] sm:$0xf]
  %v226 = vld [vmem:[%s1 + $0x2cc] sm:$0xf]
  %v227 = vld [vmem:[%s1 + $0x2d0] sm:$0xf]
  %v228 = vld [vmem:[%s1 + $0x2d4] sm:$0xf]
  %v229 = vld [vmem:[%s1 + $0x2d8] sm:$0xf]
  %v230 = vld [vmem:[%s1 + $0x2dc] sm:$0xf]
  %v231 = vld [vmem:[%s1 + $0x2e0] sm:$0xf]
  %v232 = vld [vmem:[%s1 + $0x2e4] sm:$0xf]
  %v233 = vld [vmem:[%s1 + $0x2e8] sm:$0xf]
  %v234 = vld [vmem:[%s1 + $0x2ec] sm:$0xf]
  %v235 = vld [vmem:[%s1 + $0x2f0] sm:$0xf]
  %v236 = vld [vmem:[%s1 + $0x2f4] sm:$0xf]
  %v237 = vld [vmem:[%s1 + $0x2f8] sm:$0xf]
  %v238 = vld [vmem:[%s1 + $0x2fc] sm:$0xf]
  %v239 = vld [vmem:[%s1 + $0x300] sm:$0xf]
  %v240 = vld [vmem:[%s1 + $0x304] sm:$0xf]
  %v241 = vld [vmem:[%s1 + $0x308] sm:$0xf]
  %v242 = vld [vmem:[%s1 + $0x30c] sm:$0xf]
  %v243 = vld [vmem:[%s1 + $0x310] sm:$0xf]
  %v244 = vld [vmem:[%s1 + $0x314] sm:$0xf]
  %v245 = vld [vmem:[%s1 + $0x318] sm:$0xf]
  %v246 = vld [vmem:[%s1 + $0x31c] sm:$0xf]
  %v247 = vld [vmem:[%s1 + $0x320] sm:$0xf]
  %v248 = vld [vmem:[%s1 + $0x324] sm:$0xf]
  %v249 = vld [vmem:[%s1 + $0x328] sm:$0xf]
  %v250 = vld [vmem:[%s1 + $0x32c] sm:$0xf]
  %v251 = vld [vmem:[%s1 + $0x330] sm:$0xf]
  %v252 = vld [vmem:[%s1 + $0x334] sm:$0xf]
  %v253 = vld [vmem:[%s1 + $0x338] sm:$0xf]
  %v254 = vld [vmem:[%s1 + $0x33c] sm:$0xf]
  %v255 = vld [vmem:[%s1 + $0x340] sm:$0xf]
  %v256 = vld [vmem:[%s1 + $0x344] sm:$0xf]
  %v257 = vld [vmem:[%s1 + $0x348] sm:$0xf]
  %v258 = vld [vmem:[%s1 + $0x34c] sm:$0xf]
  %v259 = vld [vmem:[%s1 + $0x350] sm:$0xf]
  %v260 = vld [vmem:[%s1 + $0x354] sm:$0xf]
  %v261 = vld [vmem:[%s1 + $0x358] sm:$0xf]
  %v262 = vld [vmem:[%s1 + $0x35c] sm:$0xf]
  %v263 = vld [vmem:[%s1 + $0x360] sm:$0xf]
  %v264 = vld [vmem:[%s1 + $0x364] sm:$0xf]
  %v265 = vld [vmem:[%s1 + $0x368] sm:$0xf]
  %v266 = vld [vmem:[%s1 + $0x36c] sm:$0xf]
  %v267 = vld [vmem:[%s1 + $0x370] sm:$0xf]
  %v268 = vld [vmem:[%s1 + $0x374] sm:$0xf]
  %v269 = vld [vmem:[%s1 + $0x378] sm:$0xf]
  %v270 = vld [vmem:[%s1 + $0x37c] sm:$0xf]
  %v271 = vld [vmem:[%s1 + $0x380] sm:$0xf]
  %v272 = vld [vmem:[%s1 + $0x384] sm:$0xf]
  %v273 = vld [vmem:[%s1 + $0x388] sm:$0xf]
  %v274 = vld [vmem:[%s1 + $0x38c] sm:$0xf]
  %v275 = vld [vmem:[%s1 + $0x390] sm:$0xf]
  %v276 = vld [vmem:[%s1 + $0x394] sm:$0xf]
  %v277 = vld [vmem:[%s1 + $0x398] sm:$0xf]
  %v278 = vld [vmem:[%s1 + $0x39c] sm:$0xf]
  %v279 = vld [vmem:[%s1 + $0x3a0] sm:$0xf]
  %v280 = vld [vmem:[%s1 + $0x3a4] sm:$0xf]
  %v281 = vld [vmem:[%s1 + $0x3a8] sm:$0xf]
  %v282 = vld [vmem:[%s1 + $0x3ac] sm:$0xf]
  %v283 = vld [vmem:[%s1 + $0x3b0] sm:$0xf]
  %v284 = vld [vmem:[%s1 + $0x3b4] sm:$0xf]
  %v285 = vld [vmem:[%s1 + $0x3b8] sm:$0xf]
  %v286 = vld [vmem:[%s1 + $0x3bc] sm:$0xf]
  %v287 = vld [vmem:[%s1 + $0x3c0] sm:$0xf]
  %v288 = vld [vmem:[%s1 + $0x3c4] sm:$0xf]
  %v289 = vld [vmem:[%s1 + $0x3c8] sm:$0xf]
  %v290 = vld [vmem:[%s1 + $0x3cc] sm:$0xf]
  %v291 = vld [vmem:[%s1 + $0x3d0] sm:$0xf]
  %v292 = vld [vmem:[%s1 + $0x3d4] sm:$0xf]
  %v293 = vld [vmem:[%s1 + $0x3d8] sm:$0xf]
  %v294 = vld [vmem:[%s1 + $0x3dc] sm:$0xf]
  %v295 = vld [vmem:[%s1 + $0x3e0] sm:$0xf]
  %v296 = vld [vmem:[%s1 + $0x3e4] sm:$0xf]
  %v297 = vld [vmem:[%s1 + $0x3e8] sm:$0xf]
  %v298 = vld [vmem:[%s1 + $0x3ec] sm:$0xf]
  %v299 = vld [vmem:[%s1 + $0x3f0] sm:$0xf]
  %v300 = vld [vmem:[%s1 + $0x3f4] sm:$0xf]
  %v301 = vld [vmem:[%s1 + $0x3f8] sm:$0xf]
  %v302 = vld [vmem:[%s1 + $0x3fc] sm:$0xf]
  %v303 = vld [vmem:[%s2] sm:$0x1]
  %v305 = vlaneseq
  %v306 = vshrl.u32 %v305, 7
  %v307 = vsub.s32 0, %v306
  %v308 = vrot.slane %v303, %v307
  %v342 = vunpack.c.l.b16 %v15
  %v343 = vunpack.c.h.b16 %v15
  %v344 = vunpack.c.l.b16 %v16
  %v345 = vunpack.c.h.b16 %v16
  %v346 = vunpack.c.l.b16 %v17
  %v347 = vunpack.c.h.b16 %v17
  %v348 = vunpack.c.l.b16 %v18
  %v349 = vunpack.c.h.b16 %v18
  %v350 = vunpack.c.l.b16 %v19
  %v351 = vunpack.c.h.b16 %v19
  %v352 = vunpack.c.l.b16 %v20
  %v353 = vunpack.c.h.b16 %v20
  %v354 = vunpack.c.l.b16 %v21
  %v355 = vunpack.c.h.b16 %v21
  %v356 = vunpack.c.l.b16 %v22
  %v357 = vunpack.c.h.b16 %v22
  %v358 = vunpack.c.l.b16 %v23
  %v359 = vunpack.c.h.b16 %v23
  %v360 = vunpack.c.l.b16 %v24
  %v361 = vunpack.c.h.b16 %v24
  %v362 = vunpack.c.l.b16 %v25
  %v363 = vunpack.c.h.b16 %v25
  %v364 = vunpack.c.l.b16 %v26
  %v365 = vunpack.c.h.b16 %v26
  %v366 = vunpack.c.l.b16 %v27
  %v367 = vunpack.c.h.b16 %v27
  %v368 = vunpack.c.l.b16 %v28
  %v369 = vunpack.c.h.b16 %v28
  %v370 = vunpack.c.l.b16 %v29
  %v371 = vunpack.c.h.b16 %v29
  %v372 = vunpack.c.l.b16 %v30
  %v373 = vunpack.c.h.b16 %v30
  %v374 = vunpack.c.l.b16 %v31
  %v375 = vunpack.c.h.b16 %v31
  %v376 = vunpack.c.l.b16 %v32
  %v377 = vunpack.c.h.b16 %v32
  %v378 = vunpack.c.l.b16 %v33
  %v379 = vunpack.c.h.b16 %v33
  %v380 = vunpack.c.l.b16 %v34
  %v381 = vunpack.c.h.b16 %v34
  %v382 = vunpack.c.l.b16 %v35
  %v383 = vunpack.c.h.b16 %v35
  %v384 = vunpack.c.l.b16 %v36
  %v385 = vunpack.c.h.b16 %v36
  %v386 = vunpack.c.l.b16 %v37
  %v387 = vunpack.c.h.b16 %v37
  %v388 = vunpack.c.l.b16 %v38
  %v389 = vunpack.c.h.b16 %v38
  %v390 = vunpack.c.l.b16 %v39
  %v391 = vunpack.c.h.b16 %v39
  %v392 = vunpack.c.l.b16 %v40
  %v393 = vunpack.c.h.b16 %v40
  %v394 = vunpack.c.l.b16 %v41
  %v395 = vunpack.c.h.b16 %v41
  %v396 = vunpack.c.l.b16 %v42
  %v397 = vunpack.c.h.b16 %v42
  %v398 = vunpack.c.l.b16 %v43
  %v399 = vunpack.c.h.b16 %v43
  %v400 = vunpack.c.l.b16 %v44
  %v401 = vunpack.c.h.b16 %v44
  %v402 = vunpack.c.l.b16 %v45
  %v403 = vunpack.c.h.b16 %v45
  %v404 = vunpack.c.l.b16 %v46
  %v405 = vunpack.c.h.b16 %v46
  %v406 = vpack.c.b16 %v358, %v342
  %v407 = vpack.c.b16 %v359, %v343
  %v408 = vpack.c.b16 %v360, %v344
  %v409 = vpack.c.b16 %v361, %v345
  %v410 = vpack.c.b16 %v362, %v346
  %v411 = vpack.c.b16 %v363, %v347
  %v412 = vpack.c.b16 %v364, %v348
  %v413 = vpack.c.b16 %v365, %v349
  %v414 = vpack.c.b16 %v366, %v350
  %v415 = vpack.c.b16 %v367, %v351
  %v416 = vpack.c.b16 %v368, %v352
  %v417 = vpack.c.b16 %v369, %v353
  %v418 = vpack.c.b16 %v370, %v354
  %v419 = vpack.c.b16 %v371, %v355
  %v420 = vpack.c.b16 %v372, %v356
  %v421 = vpack.c.b16 %v373, %v357
  %v422 = vpack.c.b16 %v390, %v374
  %v423 = vpack.c.b16 %v391, %v375
  %v424 = vpack.c.b16 %v392, %v376
  %v425 = vpack.c.b16 %v393, %v377
  %v426 = vpack.c.b16 %v394, %v378
  %v427 = vpack.c.b16 %v395, %v379
  %v428 = vpack.c.b16 %v396, %v380
  %v429 = vpack.c.b16 %v397, %v381
  %v430 = vpack.c.b16 %v398, %v382
  %v431 = vpack.c.b16 %v399, %v383
  %v432 = vpack.c.b16 %v400, %v384
  %v433 = vpack.c.b16 %v401, %v385
  %v434 = vpack.c.b16 %v402, %v386
  %v435 = vpack.c.b16 %v403, %v387
  %v436 = vpack.c.b16 %v404, %v388
  %v437 = vpack.c.b16 %v405, %v389
  %v726 = vunpack.c.l.b16 %v47
  %v727 = vunpack.c.l.b16 %v48
  %v728 = vunpack.c.l.b16 %v49
  %v729 = vunpack.c.l.b16 %v50
  %v730 = vunpack.c.l.b16 %v51
  %v731 = vunpack.c.l.b16 %v52
  %v732 = vunpack.c.l.b16 %v53
  %v733 = vunpack.c.l.b16 %v54
  %v734 = vunpack.c.l.b16 %v55
  %v735 = vunpack.c.l.b16 %v56
  %v736 = vunpack.c.l.b16 %v57
  %v737 = vunpack.c.l.b16 %v58
  %v738 = vunpack.c.l.b16 %v59
  %v739 = vunpack.c.l.b16 %v60
  %v740 = vunpack.c.l.b16 %v61
  %v741 = vunpack.c.l.b16 %v62
  %v742 = vunpack.c.l.b16 %v63
  %v743 = vunpack.c.l.b16 %v64
  %v744 = vunpack.c.l.b16 %v65
  %v745 = vunpack.c.l.b16 %v66
  %v746 = vunpack.c.l.b16 %v67
  %v747 = vunpack.c.l.b16 %v68
  %v748 = vunpack.c.l.b16 %v69
  %v749 = vunpack.c.l.b16 %v70
  %v750 = vunpack.c.l.b16 %v71
  %v751 = vunpack.c.l.b16 %v72
  %v752 = vunpack.c.l.b16 %v73
  %v753 = vunpack.c.l.b16 %v74
  %v754 = vunpack.c.l.b16 %v75
  %v755 = vunpack.c.l.b16 %v76
  %v756 = vunpack.c.l.b16 %v77
  %v757 = vunpack.c.l.b16 %v78
  %v758 = vunpack.c.l.b16 %v79
  %v759 = vunpack.c.l.b16 %v80
  %v760 = vunpack.c.l.b16 %v81
  %v761 = vunpack.c.l.b16 %v82
  %v762 = vunpack.c.l.b16 %v83
  %v763 = vunpack.c.l.b16 %v84
  %v764 = vunpack.c.l.b16 %v85
  %v765 = vunpack.c.l.b16 %v86
  %v766 = vunpack.c.l.b16 %v87
  %v767 = vunpack.c.l.b16 %v88
  %v768 = vunpack.c.l.b16 %v89
  %v769 = vunpack.c.l.b16 %v90
  %v770 = vunpack.c.l.b16 %v91
  %v771 = vunpack.c.l.b16 %v92
  %v772 = vunpack.c.l.b16 %v93
  %v773 = vunpack.c.l.b16 %v94
  %v774 = vunpack.c.l.b16 %v95
  %v775 = vunpack.c.l.b16 %v96
  %v776 = vunpack.c.l.b16 %v97
  %v777 = vunpack.c.l.b16 %v98
  %v778 = vunpack.c.l.b16 %v99
  %v779 = vunpack.c.l.b16 %v100
  %v780 = vunpack.c.l.b16 %v101
  %v781 = vunpack.c.l.b16 %v102
  %v782 = vunpack.c.l.b16 %v103
  %v783 = vunpack.c.l.b16 %v104
  %v784 = vunpack.c.l.b16 %v105
  %v785 = vunpack.c.l.b16 %v106
  %v786 = vunpack.c.l.b16 %v107
  %v787 = vunpack.c.l.b16 %v108
  %v788 = vunpack.c.l.b16 %v109
  %v789 = vunpack.c.l.b16 %v110
  %v790 = vunpack.c.l.b16 %v111
  %v791 = vunpack.c.l.b16 %v112
  %v792 = vunpack.c.l.b16 %v113
  %v793 = vunpack.c.l.b16 %v114
  %v794 = vunpack.c.l.b16 %v115
  %v795 = vunpack.c.l.b16 %v116
  %v796 = vunpack.c.l.b16 %v117
  %v797 = vunpack.c.l.b16 %v118
  %v798 = vunpack.c.l.b16 %v119
  %v799 = vunpack.c.l.b16 %v120
  %v800 = vunpack.c.l.b16 %v121
  %v801 = vunpack.c.l.b16 %v122
  %v802 = vunpack.c.l.b16 %v123
  %v803 = vunpack.c.l.b16 %v124
  %v804 = vunpack.c.l.b16 %v125
  %v805 = vunpack.c.l.b16 %v126
  %v806 = vunpack.c.l.b16 %v127
  %v807 = vunpack.c.l.b16 %v128
  %v808 = vunpack.c.l.b16 %v129
  %v809 = vunpack.c.l.b16 %v130
  %v810 = vunpack.c.l.b16 %v131
  %v811 = vunpack.c.l.b16 %v132
  %v812 = vunpack.c.l.b16 %v133
  %v813 = vunpack.c.l.b16 %v134
  %v814 = vunpack.c.l.b16 %v135
  %v815 = vunpack.c.l.b16 %v136
  %v816 = vunpack.c.l.b16 %v137
  %v817 = vunpack.c.l.b16 %v138
  %v818 = vunpack.c.l.b16 %v139
  %v819 = vunpack.c.l.b16 %v140
  %v820 = vunpack.c.l.b16 %v141
  %v821 = vunpack.c.l.b16 %v142
  %v822 = vunpack.c.l.b16 %v143
  %v823 = vunpack.c.l.b16 %v144
  %v824 = vunpack.c.l.b16 %v145
  %v825 = vunpack.c.l.b16 %v146
  %v826 = vunpack.c.l.b16 %v147
  %v827 = vunpack.c.l.b16 %v148
  %v828 = vunpack.c.l.b16 %v149
  %v829 = vunpack.c.l.b16 %v150
  %v830 = vunpack.c.l.b16 %v151
  %v831 = vunpack.c.l.b16 %v152
  %v832 = vunpack.c.l.b16 %v153
  %v833 = vunpack.c.l.b16 %v154
  %v834 = vunpack.c.l.b16 %v155
  %v835 = vunpack.c.l.b16 %v156
  %v836 = vunpack.c.l.b16 %v157
  %v837 = vunpack.c.l.b16 %v158
  %v838 = vunpack.c.l.b16 %v159
  %v839 = vunpack.c.l.b16 %v160
  %v840 = vunpack.c.l.b16 %v161
  %v841 = vunpack.c.l.b16 %v162
  %v842 = vunpack.c.l.b16 %v163
  %v843 = vunpack.c.l.b16 %v164
  %v844 = vunpack.c.l.b16 %v165
  %v845 = vunpack.c.l.b16 %v166
  %v846 = vunpack.c.l.b16 %v167
  %v847 = vunpack.c.l.b16 %v168
  %v848 = vunpack.c.l.b16 %v169
  %v849 = vunpack.c.l.b16 %v170
  %v850 = vunpack.c.l.b16 %v171
  %v851 = vunpack.c.l.b16 %v172
  %v852 = vunpack.c.l.b16 %v173
  %v853 = vunpack.c.l.b16 %v174
  %v854 = vunpack.c.l.b16 %v175
  %v855 = vunpack.c.l.b16 %v176
  %v856 = vunpack.c.l.b16 %v177
  %v857 = vunpack.c.l.b16 %v178
  %v858 = vunpack.c.l.b16 %v179
  %v859 = vunpack.c.l.b16 %v180
  %v860 = vunpack.c.l.b16 %v181
  %v861 = vunpack.c.l.b16 %v182
  %v862 = vunpack.c.l.b16 %v183
  %v863 = vunpack.c.l.b16 %v184
  %v864 = vunpack.c.l.b16 %v185
  %v865 = vunpack.c.l.b16 %v186
  %v866 = vunpack.c.l.b16 %v187
  %v867 = vunpack.c.l.b16 %v188
  %v868 = vunpack.c.l.b16 %v189
  %v869 = vunpack.c.l.b16 %v190
  %v870 = vunpack.c.l.b16 %v191
  %v871 = vunpack.c.l.b16 %v192
  %v872 = vunpack.c.l.b16 %v193
  %v873 = vunpack.c.l.b16 %v194
  %v874 = vunpack.c.l.b16 %v195
  %v875 = vunpack.c.l.b16 %v196
  %v876 = vunpack.c.l.b16 %v197
  %v877 = vunpack.c.l.b16 %v198
  %v878 = vunpack.c.l.b16 %v199
  %v879 = vunpack.c.l.b16 %v200
  %v880 = vunpack.c.l.b16 %v201
  %v881 = vunpack.c.l.b16 %v202
  %v882 = vunpack.c.l.b16 %v203
  %v883 = vunpack.c.l.b16 %v204
  %v884 = vunpack.c.l.b16 %v205
  %v885 = vunpack.c.l.b16 %v206
  %v886 = vunpack.c.l.b16 %v207
  %v887 = vunpack.c.l.b16 %v208
  %v888 = vunpack.c.l.b16 %v209
  %v889 = vunpack.c.l.b16 %v210
  %v890 = vunpack.c.l.b16 %v211
  %v891 = vunpack.c.l.b16 %v212
  %v892 = vunpack.c.l.b16 %v213
  %v893 = vunpack.c.l.b16 %v214
  %v894 = vunpack.c.l.b16 %v215
  %v895 = vunpack.c.l.b16 %v216
  %v896 = vunpack.c.l.b16 %v217
  %v897 = vunpack.c.l.b16 %v218
  %v898 = vunpack.c.l.b16 %v219
  %v899 = vunpack.c.l.b16 %v220
  %v900 = vunpack.c.l.b16 %v221
  %v901 = vunpack.c.l.b16 %v222
  %v902 = vunpack.c.l.b16 %v223
  %v903 = vunpack.c.l.b16 %v224
  %v904 = vunpack.c.l.b16 %v225
  %v905 = vunpack.c.l.b16 %v226
  %v906 = vunpack.c.l.b16 %v227
  %v907 = vunpack.c.l.b16 %v228
  %v908 = vunpack.c.l.b16 %v229
  %v909 = vunpack.c.l.b16 %v230
  %v910 = vunpack.c.l.b16 %v231
  %v911 = vunpack.c.l.b16 %v232
  %v912 = vunpack.c.l.b16 %v233
  %v913 = vunpack.c.l.b16 %v234
  %v914 = vunpack.c.l.b16 %v235
  %v915 = vunpack.c.l.b16 %v236
  %v916 = vunpack.c.l.b16 %v237
  %v917 = vunpack.c.l.b16 %v238
  %v918 = vunpack.c.l.b16 %v239
  %v919 = vunpack.c.l.b16 %v240
  %v920 = vunpack.c.l.b16 %v241
  %v921 = vunpack.c.l.b16 %v242
  %v922 = vunpack.c.l.b16 %v243
  %v923 = vunpack.c.l.b16 %v244
  %v924 = vunpack.c.l.b16 %v245
  %v925 = vunpack.c.l.b16 %v246
  %v926 = vunpack.c.l.b16 %v247
  %v927 = vunpack.c.l.b16 %v248
  %v928 = vunpack.c.l.b16 %v249
  %v929 = vunpack.c.l.b16 %v250
  %v930 = vunpack.c.l.b16 %v251
  %v931 = vunpack.c.l.b16 %v252
  %v932 = vunpack.c.l.b16 %v253
  %v933 = vunpack.c.l.b16 %v254
  %v934 = vunpack.c.l.b16 %v255
  %v935 = vunpack.c.l.b16 %v256
  %v936 = vunpack.c.l.b16 %v257
  %v937 = vunpack.c.l.b16 %v258
  %v938 = vunpack.c.l.b16 %v259
  %v939 = vunpack.c.l.b16 %v260
  %v940 = vunpack.c.l.b16 %v261
  %v941 = vunpack.c.l.b16 %v262
  %v942 = vunpack.c.l.b16 %v263
  %v943 = vunpack.c.l.b16 %v264
  %v944 = vunpack.c.l.b16 %v265
  %v945 = vunpack.c.l.b16 %v266
  %v946 = vunpack.c.l.b16 %v267
  %v947 = vunpack.c.l.b16 %v268
  %v948 = vunpack.c.l.b16 %v269
  %v949 = vunpack.c.l.b16 %v270
  %v950 = vunpack.c.l.b16 %v271
  %v951 = vunpack.c.l.b16 %v272
  %v952 = vunpack.c.l.b16 %v273
  %v953 = vunpack.c.l.b16 %v274
  %v954 = vunpack.c.l.b16 %v275
  %v955 = vunpack.c.l.b16 %v276
  %v956 = vunpack.c.l.b16 %v277
  %v957 = vunpack.c.l.b16 %v278
  %v958 = vunpack.c.l.b16 %v279
  %v959 = vunpack.c.l.b16 %v280
  %v960 = vunpack.c.l.b16 %v281
  %v961 = vunpack.c.l.b16 %v282
  %v962 = vunpack.c.l.b16 %v283
  %v963 = vunpack.c.l.b16 %v284
  %v964 = vunpack.c.l.b16 %v285
  %v965 = vunpack.c.l.b16 %v286
  %v966 = vunpack.c.l.b16 %v287
  %v967 = vunpack.c.l.b16 %v288
  %v968 = vunpack.c.l.b16 %v289
  %v969 = vunpack.c.l.b16 %v290
  %v970 = vunpack.c.l.b16 %v291
  %v971 = vunpack.c.l.b16 %v292
  %v972 = vunpack.c.l.b16 %v293
  %v973 = vunpack.c.l.b16 %v294
  %v974 = vunpack.c.l.b16 %v295
  %v975 = vunpack.c.l.b16 %v296
  %v976 = vunpack.c.l.b16 %v297
  %v977 = vunpack.c.l.b16 %v298
  %v978 = vunpack.c.l.b16 %v299
  %v979 = vunpack.c.l.b16 %v300
  %v980 = vunpack.c.l.b16 %v301
  %v981 = vunpack.c.l.b16 %v302
  %v982 = vpack.c.b16 %v727, %v726
  %v983 = vpack.c.b16 %v729, %v728
  %v984 = vpack.c.b16 %v731, %v730
  %v985 = vpack.c.b16 %v733, %v732
  %v986 = vpack.c.b16 %v735, %v734
  %v987 = vpack.c.b16 %v737, %v736
  %v988 = vpack.c.b16 %v739, %v738
  %v989 = vpack.c.b16 %v741, %v740
  %v990 = vpack.c.b16 %v743, %v742
  %v991 = vpack.c.b16 %v745, %v744
  %v992 = vpack.c.b16 %v747, %v746
  %v993 = vpack.c.b16 %v749, %v748
  %v994 = vpack.c.b16 %v751, %v750
  %v995 = vpack.c.b16 %v753, %v752
  %v996 = vpack.c.b16 %v755, %v754
  %v997 = vpack.c.b16 %v757, %v756
  %v998 = vpack.c.b16 %v759, %v758
  %v999 = vpack.c.b16 %v761, %v760
  %v1000 = vpack.c.b16 %v763, %v762
  %v1001 = vpack.c.b16 %v765, %v764
  %v1002 = vpack.c.b16 %v767, %v766
  %v1003 = vpack.c.b16 %v769, %v768
  %v1004 = vpack.c.b16 %v771, %v770
  %v1005 = vpack.c.b16 %v773, %v772
  %v1006 = vpack.c.b16 %v775, %v774
  %v1007 = vpack.c.b16 %v777, %v776
  %v1008 = vpack.c.b16 %v779, %v778
  %v1009 = vpack.c.b16 %v781, %v780
  %v1010 = vpack.c.b16 %v783, %v782
  %v1011 = vpack.c.b16 %v785, %v784
  %v1012 = vpack.c.b16 %v787, %v786
  %v1013 = vpack.c.b16 %v789, %v788
  %v1014 = vpack.c.b16 %v791, %v790
  %v1015 = vpack.c.b16 %v793, %v792
  %v1016 = vpack.c.b16 %v795, %v794
  %v1017 = vpack.c.b16 %v797, %v796
  %v1018 = vpack.c.b16 %v799, %v798
  %v1019 = vpack.c.b16 %v801, %v800
  %v1020 = vpack.c.b16 %v803, %v802
  %v1021 = vpack.c.b16 %v805, %v804
  %v1022 = vpack.c.b16 %v807, %v806
  %v1023 = vpack.c.b16 %v809, %v808
  %v1024 = vpack.c.b16 %v811, %v810
  %v1025 = vpack.c.b16 %v813, %v812
  %v1026 = vpack.c.b16 %v815, %v814
  %v1027 = vpack.c.b16 %v817, %v816
  %v1028 = vpack.c.b16 %v819, %v818
  %v1029 = vpack.c.b16 %v821, %v820
  %v1030 = vpack.c.b16 %v823, %v822
  %v1031 = vpack.c.b16 %v825, %v824
  %v1032 = vpack.c.b16 %v827, %v826
  %v1033 = vpack.c.b16 %v829, %v828
  %v1034 = vpack.c.b16 %v831, %v830
  %v1035 = vpack.c.b16 %v833, %v832
  %v1036 = vpack.c.b16 %v835, %v834
  %v1037 = vpack.c.b16 %v837, %v836
  %v1038 = vpack.c.b16 %v839, %v838
  %v1039 = vpack.c.b16 %v841, %v840
  %v1040 = vpack.c.b16 %v843, %v842
  %v1041 = vpack.c.b16 %v845, %v844
  %v1042 = vpack.c.b16 %v847, %v846
  %v1043 = vpack.c.b16 %v849, %v848
  %v1044 = vpack.c.b16 %v851, %v850
  %v1045 = vpack.c.b16 %v853, %v852
  %v1046 = vpack.c.b16 %v855, %v854
  %v1047 = vpack.c.b16 %v857, %v856
  %v1048 = vpack.c.b16 %v859, %v858
  %v1049 = vpack.c.b16 %v861, %v860
  %v1050 = vpack.c.b16 %v863, %v862
  %v1051 = vpack.c.b16 %v865, %v864
  %v1052 = vpack.c.b16 %v867, %v866
  %v1053 = vpack.c.b16 %v869, %v868
  %v1054 = vpack.c.b16 %v871, %v870
  %v1055 = vpack.c.b16 %v873, %v872
  %v1056 = vpack.c.b16 %v875, %v874
  %v1057 = vpack.c.b16 %v877, %v876
  %v1058 = vpack.c.b16 %v879, %v878
  %v1059 = vpack.c.b16 %v881, %v880
  %v1060 = vpack.c.b16 %v883, %v882
  %v1061 = vpack.c.b16 %v885, %v884
  %v1062 = vpack.c.b16 %v887, %v886
  %v1063 = vpack.c.b16 %v889, %v888
  %v1064 = vpack.c.b16 %v891, %v890
  %v1065 = vpack.c.b16 %v893, %v892
  %v1066 = vpack.c.b16 %v895, %v894
  %v1067 = vpack.c.b16 %v897, %v896
  %v1068 = vpack.c.b16 %v899, %v898
  %v1069 = vpack.c.b16 %v901, %v900
  %v1070 = vpack.c.b16 %v903, %v902
  %v1071 = vpack.c.b16 %v905, %v904
  %v1072 = vpack.c.b16 %v907, %v906
  %v1073 = vpack.c.b16 %v909, %v908
  %v1074 = vpack.c.b16 %v911, %v910
  %v1075 = vpack.c.b16 %v913, %v912
  %v1076 = vpack.c.b16 %v915, %v914
  %v1077 = vpack.c.b16 %v917, %v916
  %v1078 = vpack.c.b16 %v919, %v918
  %v1079 = vpack.c.b16 %v921, %v920
  %v1080 = vpack.c.b16 %v923, %v922
  %v1081 = vpack.c.b16 %v925, %v924
  %v1082 = vpack.c.b16 %v927, %v926
  %v1083 = vpack.c.b16 %v929, %v928
  %v1084 = vpack.c.b16 %v931, %v930
  %v1085 = vpack.c.b16 %v933, %v932
  %v1086 = vpack.c.b16 %v935, %v934
  %v1087 = vpack.c.b16 %v937, %v936
  %v1088 = vpack.c.b16 %v939, %v938
  %v1089 = vpack.c.b16 %v941, %v940
  %v1090 = vpack.c.b16 %v943, %v942
  %v1091 = vpack.c.b16 %v945, %v944
  %v1092 = vpack.c.b16 %v947, %v946
  %v1093 = vpack.c.b16 %v949, %v948
  %v1094 = vpack.c.b16 %v951, %v950
  %v1095 = vpack.c.b16 %v953, %v952
  %v1096 = vpack.c.b16 %v955, %v954
  %v1097 = vpack.c.b16 %v957, %v956
  %v1098 = vpack.c.b16 %v959, %v958
  %v1099 = vpack.c.b16 %v961, %v960
  %v1100 = vpack.c.b16 %v963, %v962
  %v1101 = vpack.c.b16 %v965, %v964
  %v1102 = vpack.c.b16 %v967, %v966
  %v1103 = vpack.c.b16 %v969, %v968
  %v1104 = vpack.c.b16 %v971, %v970
  %v1105 = vpack.c.b16 %v973, %v972
  %v1106 = vpack.c.b16 %v975, %v974
  %v1107 = vpack.c.b16 %v977, %v976
  %v1108 = vpack.c.b16 %v979, %v978
  %v1109 = vpack.c.b16 %v981, %v980
  %1238 = vmatprep.subr.bf16.mxu0 0
  %1239 = vmatpush1.bf16.msra.mxu0 %v989
  %1240 = vmatprep.subr.bf16.mxu0 0
  %1241 = vmatpush1.bf16.msra.mxu0 %v988
  %1242 = vmatprep.subr.bf16.mxu0 0
  %1243 = vmatpush1.bf16.msra.mxu0 %v987
  %1244 = vmatprep.subr.bf16.mxu0 0
  %1245 = vmatpush1.bf16.msra.mxu0 %v986
  %1246 = vmatprep.subr.bf16.mxu0 0
  %1247 = vmatpush1.bf16.msra.mxu0 %v985
  %1248 = vmatprep.subr.bf16.mxu0 0
  %1249 = vmatpush1.bf16.msra.mxu0 %v984
  %1250 = vmatprep.subr.bf16.mxu0 0
  %1251 = vmatpush1.bf16.msra.mxu0 %v983
  %1252 = vmatprep.subr.bf16.mxu0 0
  %1253 = vmatpush1.bf16.msra.mxu0 %v982
  %1254 = vmatprep.subr.bf16.mxu0 0
  %1255 = vmatpush2.bf16.msra.mxu0 %v997
  %1256 = vmatprep.subr.bf16.mxu0 0
  %1257 = vmatpush2.bf16.msra.mxu0 %v996
  %1258 = vmatprep.subr.bf16.mxu0 0
  %1259 = vmatpush2.bf16.msra.mxu0 %v995
  %1260 = vmatprep.subr.bf16.mxu0 0
  %1261 = vmatpush2.bf16.msra.mxu0 %v994
  %1262 = vmatprep.subr.bf16.mxu0 0
  %1263 = vmatpush2.bf16.msra.mxu0 %v993
  %1264 = vmatprep.subr.bf16.mxu0 0
  %1265 = vmatpush2.bf16.msra.mxu0 %v992
  %1266 = vmatprep.subr.bf16.mxu0 0
  %1267 = vmatpush2.bf16.msra.mxu0 %v991
  %1268 = vmatprep.subr.bf16.mxu0 0
  %1269 = vmatpush2.bf16.msra.mxu0 %v990
  %1270 = vmatprep.mubr.bf16.mxu0 %v407
  %1271 = vmatmul.mubr.bf16.gmra.mxu0 %v406
  %v1272 = vpop.f32.mrf.mxu0
  %v1273 = vadd.f32 %v308, %v1272
  %v1274 = vpop.f32.mrf.mxu0
  %v1275 = vpop.f32.mrf.mxu0
  %v1276 = vadd.f32 %v308, %v1275
  %v1277 = vpop.f32.mrf.mxu0
  %1278 = vmatprep.mubr.bf16.mxu0 %v423
  %1279 = vmatmul.mubr.bf16.gmra.mxu0 %v422
  %v1280 = vpop.f32.mrf.mxu0
  %v1281 = vadd.f32 %v308, %v1280
  %v1282 = vpop.f32.mrf.mxu0
  %v1283 = vpop.f32.mrf.mxu0
  %v1284 = vadd.f32 %v308, %v1283
  %v1285 = vpop.f32.mrf.mxu0
  %1286 = vdwg.mxu0
  %1287 = vmatprep.subr.bf16.mxu0 0
  %1288 = vmatpush1.bf16.msra.mxu0 %v1005
  %1289 = vmatprep.subr.bf16.mxu0 0
  %1290 = vmatpush1.bf16.msra.mxu0 %v1004
  %1291 = vmatprep.subr.bf16.mxu0 0
  %1292 = vmatpush1.bf16.msra.mxu0 %v1003
  %1293 = vmatprep.subr.bf16.mxu0 0
  %1294 = vmatpush1.bf16.msra.mxu0 %v1002
  %1295 = vmatprep.subr.bf16.mxu0 0
  %1296 = vmatpush1.bf16.msra.mxu0 %v1001
  %1297 = vmatprep.subr.bf16.mxu0 0
  %1298 = vmatpush1.bf16.msra.mxu0 %v1000
  %1299 = vmatprep.subr.bf16.mxu0 0
  %1300 = vmatpush1.bf16.msra.mxu0 %v999
  %1301 = vmatprep.subr.bf16.mxu0 0
  %1302 = vmatpush1.bf16.msra.mxu0 %v998
  %1303 = vmatprep.subr.bf16.mxu0 0
  %1304 = vmatpush2.bf16.msra.mxu0 %v1013
  %1305 = vmatprep.subr.bf16.mxu0 0
  %1306 = vmatpush2.bf16.msra.mxu0 %v1012
  %1307 = vmatprep.subr.bf16.mxu0 0
  %1308 = vmatpush2.bf16.msra.mxu0 %v1011
  %1309 = vmatprep.subr.bf16.mxu0 0
  %1310 = vmatpush2.bf16.msra.mxu0 %v1010
  %1311 = vmatprep.subr.bf16.mxu0 0
  %1312 = vmatpush2.bf16.msra.mxu0 %v1009
  %1313 = vmatprep.subr.bf16.mxu0 0
  %1314 = vmatpush2.bf16.msra.mxu0 %v1008
  %1315 = vmatprep.subr.bf16.mxu0 0
  %1316 = vmatpush2.bf16.msra.mxu0 %v1007
  %1317 = vmatprep.subr.bf16.mxu0 0
  %1318 = vmatpush2.bf16.msra.mxu0 %v1006
  %1319 = vmatprep.mubr.bf16.mxu0 %v409
  %1320 = vmatmul.mubr.bf16.gmra.mxu0 %v408
  %v1321 = vpop.f32.mrf.mxu0
  %v1322 = vadd.f32 %v1273, %v1321
  %v1323 = vpop.f32.mrf.mxu0
  %v1324 = vpop.f32.mrf.mxu0
  %v1325 = vadd.f32 %v1276, %v1324
  %v1326 = vpop.f32.mrf.mxu0
  %1327 = vmatprep.mubr.bf16.mxu0 %v425
  %1328 = vmatmul.mubr.bf16.gmra.mxu0 %v424
  %v1329 = vpop.f32.mrf.mxu0
  %v1330 = vadd.f32 %v1281, %v1329
  %v1331 = vpop.f32.mrf.mxu0
  %v1332 = vpop.f32.mrf.mxu0
  %v1333 = vadd.f32 %v1284, %v1332
  %v1334 = vpop.f32.mrf.mxu0
  %1335 = vdwg.mxu0
  %1336 = vmatprep.subr.bf16.mxu0 0
  %1337 = vmatpush1.bf16.msra.mxu0 %v1021
  %1338 = vmatprep.subr.bf16.mxu0 0
  %1339 = vmatpush1.bf16.msra.mxu0 %v1020
  %1340 = vmatprep.subr.bf16.mxu0 0
  %1341 = vmatpush1.bf16.msra.mxu0 %v1019
  %1342 = vmatprep.subr.bf16.mxu0 0
  %1343 = vmatpush1.bf16.msra.mxu0 %v1018
  %1344 = vmatprep.subr.bf16.mxu0 0
  %1345 = vmatpush1.bf16.msra.mxu0 %v1017
  %1346 = vmatprep.subr.bf16.mxu0 0
  %1347 = vmatpush1.bf16.msra.mxu0 %v1016
  %1348 = vmatprep.subr.bf16.mxu0 0
  %1349 = vmatpush1.bf16.msra.mxu0 %v1015
  %1350 = vmatprep.subr.bf16.mxu0 0
  %1351 = vmatpush1.bf16.msra.mxu0 %v1014
  %1352 = vmatprep.subr.bf16.mxu0 0
  %1353 = vmatpush2.bf16.msra.mxu0 %v1029
  %1354 = vmatprep.subr.bf16.mxu0 0
  %1355 = vmatpush2.bf16.msra.mxu0 %v1028
  %1356 = vmatprep.subr.bf16.mxu0 0
  %1357 = vmatpush2.bf16.msra.mxu0 %v1027
  %1358 = vmatprep.subr.bf16.mxu0 0
  %1359 = vmatpush2.bf16.msra.mxu0 %v1026
  %1360 = vmatprep.subr.bf16.mxu0 0
  %1361 = vmatpush2.bf16.msra.mxu0 %v1025
  %1362 = vmatprep.subr.bf16.mxu0 0
  %1363 = vmatpush2.bf16.msra.mxu0 %v1024
  %1364 = vmatprep.subr.bf16.mxu0 0
  %1365 = vmatpush2.bf16.msra.mxu0 %v1023
  %1366 = vmatprep.subr.bf16.mxu0 0
  %1367 = vmatpush2.bf16.msra.mxu0 %v1022
  %1368 = vmatprep.mubr.bf16.mxu0 %v411
  %1369 = vmatmul.mubr.bf16.gmra.mxu0 %v410
  %v1370 = vpop.f32.mrf.mxu0
  %v1371 = vadd.f32 %v1322, %v1370
  %v1372 = vpop.f32.mrf.mxu0
  %v1373 = vpop.f32.mrf.mxu0
  %v1374 = vadd.f32 %v1325, %v1373
  %v1375 = vpop.f32.mrf.mxu0
  %1376 = vmatprep.mubr.bf16.mxu0 %v427
  %1377 = vmatmul.mubr.bf16.gmra.mxu0 %v426
  %v1378 = vpop.f32.mrf.mxu0
  %v1379 = vadd.f32 %v1330, %v1378
  %v1380 = vpop.f32.mrf.mxu0
  %v1381 = vpop.f32.mrf.mxu0
  %v1382 = vadd.f32 %v1333, %v1381
  %v1383 = vpop.f32.mrf.mxu0
  %1384 = vdwg.mxu0
  %1385 = vmatprep.subr.bf16.mxu0 0
  %1386 = vmatpush1.bf16.msra.mxu0 %v1037
  %1387 = vmatprep.subr.bf16.mxu0 0
  %1388 = vmatpush1.bf16.msra.mxu0 %v1036
  %1389 = vmatprep.subr.bf16.mxu0 0
  %1390 = vmatpush1.bf16.msra.mxu0 %v1035
  %1391 = vmatprep.subr.bf16.mxu0 0
  %1392 = vmatpush1.bf16.msra.mxu0 %v1034
  %1393 = vmatprep.subr.bf16.mxu0 0
  %1394 = vmatpush1.bf16.msra.mxu0 %v1033
  %1395 = vmatprep.subr.bf16.mxu0 0
  %1396 = vmatpush1.bf16.msra.mxu0 %v1032
  %1397 = vmatprep.subr.bf16.mxu0 0
  %1398 = vmatpush1.bf16.msra.mxu0 %v1031
  %1399 = vmatprep.subr.bf16.mxu0 0
  %1400 = vmatpush1.bf16.msra.mxu0 %v1030
  %1401 = vmatprep.subr.bf16.mxu0 0
  %1402 = vmatpush2.bf16.msra.mxu0 %v1045
  %1403 = vmatprep.subr.bf16.mxu0 0
  %1404 = vmatpush2.bf16.msra.mxu0 %v1044
  %1405 = vmatprep.subr.bf16.mxu0 0
  %1406 = vmatpush2.bf16.msra.mxu0 %v1043
  %1407 = vmatprep.subr.bf16.mxu0 0
  %1408 = vmatpush2.bf16.msra.mxu0 %v1042
  %1409 = vmatprep.subr.bf16.mxu0 0
  %1410 = vmatpush2.bf16.msra.mxu0 %v1041
  %1411 = vmatprep.subr.bf16.mxu0 0
  %1412 = vmatpush2.bf16.msra.mxu0 %v1040
  %1413 = vmatprep.subr.bf16.mxu0 0
  %1414 = vmatpush2.bf16.msra.mxu0 %v1039
  %1415 = vmatprep.subr.bf16.mxu0 0
  %1416 = vmatpush2.bf16.msra.mxu0 %v1038
  %1417 = vmatprep.mubr.bf16.mxu0 %v413
  %1418 = vmatmul.mubr.bf16.gmra.mxu0 %v412
  %v1419 = vpop.f32.mrf.mxu0
  %v1420 = vadd.f32 %v1371, %v1419
  %v1421 = vpop.f32.mrf.mxu0
  %v1422 = vpop.f32.mrf.mxu0
  %v1423 = vadd.f32 %v1374, %v1422
  %v1424 = vpop.f32.mrf.mxu0
  %1425 = vmatprep.mubr.bf16.mxu0 %v429
  %1426 = vmatmul.mubr.bf16.gmra.mxu0 %v428
  %v1427 = vpop.f32.mrf.mxu0
  %v1428 = vadd.f32 %v1379, %v1427
  %v1429 = vpop.f32.mrf.mxu0
  %v1430 = vpop.f32.mrf.mxu0
  %v1431 = vadd.f32 %v1382, %v1430
  %v1432 = vpop.f32.mrf.mxu0
  %1433 = vdwg.mxu0
  %1434 = vmatprep.subr.bf16.mxu0 0
  %1435 = vmatpush1.bf16.msra.mxu0 %v1053
  %1436 = vmatprep.subr.bf16.mxu0 0
  %1437 = vmatpush1.bf16.msra.mxu0 %v1052
  %1438 = vmatprep.subr.bf16.mxu0 0
  %1439 = vmatpush1.bf16.msra.mxu0 %v1051
  %1440 = vmatprep.subr.bf16.mxu0 0
  %1441 = vmatpush1.bf16.msra.mxu0 %v1050
  %1442 = vmatprep.subr.bf16.mxu0 0
  %1443 = vmatpush1.bf16.msra.mxu0 %v1049
  %1444 = vmatprep.subr.bf16.mxu0 0
  %1445 = vmatpush1.bf16.msra.mxu0 %v1048
  %1446 = vmatprep.subr.bf16.mxu0 0
  %1447 = vmatpush1.bf16.msra.mxu0 %v1047
  %1448 = vmatprep.subr.bf16.mxu0 0
  %1449 = vmatpush1.bf16.msra.mxu0 %v1046
  %1450 = vmatprep.subr.bf16.mxu0 0
  %1451 = vmatpush2.bf16.msra.mxu0 %v1061
  %1452 = vmatprep.subr.bf16.mxu0 0
  %1453 = vmatpush2.bf16.msra.mxu0 %v1060
  %1454 = vmatprep.subr.bf16.mxu0 0
  %1455 = vmatpush2.bf16.msra.mxu0 %v1059
  %1456 = vmatprep.subr.bf16.mxu0 0
  %1457 = vmatpush2.bf16.msra.mxu0 %v1058
  %1458 = vmatprep.subr.bf16.mxu0 0
  %1459 = vmatpush2.bf16.msra.mxu0 %v1057
  %1460 = vmatprep.subr.bf16.mxu0 0
  %1461 = vmatpush2.bf16.msra.mxu0 %v1056
  %1462 = vmatprep.subr.bf16.mxu0 0
  %1463 = vmatpush2.bf16.msra.mxu0 %v1055
  %1464 = vmatprep.subr.bf16.mxu0 0
  %1465 = vmatpush2.bf16.msra.mxu0 %v1054
  %1466 = vmatprep.mubr.bf16.mxu0 %v415
  %1467 = vmatmul.mubr.bf16.gmra.mxu0 %v414
  %v1468 = vpop.f32.mrf.mxu0
  %v1469 = vadd.f32 %v1420, %v1468
  %v1470 = vpop.f32.mrf.mxu0
  %v1471 = vpop.f32.mrf.mxu0
  %v1472 = vadd.f32 %v1423, %v1471
  %v1473 = vpop.f32.mrf.mxu0
  %1474 = vmatprep.mubr.bf16.mxu0 %v431
  %1475 = vmatmul.mubr.bf16.gmra.mxu0 %v430
  %v1476 = vpop.f32.mrf.mxu0
  %v1477 = vadd.f32 %v1428, %v1476
  %v1478 = vpop.f32.mrf.mxu0
  %v1479 = vpop.f32.mrf.mxu0
  %v1480 = vadd.f32 %v1431, %v1479
  %v1481 = vpop.f32.mrf.mxu0
  %1482 = vdwg.mxu0
  %1483 = vmatprep.subr.bf16.mxu0 0
  %1484 = vmatpush1.bf16.msra.mxu0 %v1069
  %1485 = vmatprep.subr.bf16.mxu0 0
  %1486 = vmatpush1.bf16.msra.mxu0 %v1068
  %1487 = vmatprep.subr.bf16.mxu0 0
  %1488 = vmatpush1.bf16.msra.mxu0 %v1067
  %1489 = vmatprep.subr.bf16.mxu0 0
  %1490 = vmatpush1.bf16.msra.mxu0 %v1066
  %1491 = vmatprep.subr.bf16.mxu0 0
  %1492 = vmatpush1.bf16.msra.mxu0 %v1065
  %1493 = vmatprep.subr.bf16.mxu0 0
  %1494 = vmatpush1.bf16.msra.mxu0 %v1064
  %1495 = vmatprep.subr.bf16.mxu0 0
  %1496 = vmatpush1.bf16.msra.mxu0 %v1063
  %1497 = vmatprep.subr.bf16.mxu0 0
  %1498 = vmatpush1.bf16.msra.mxu0 %v1062
  %1499 = vmatprep.subr.bf16.mxu0 0
  %1500 = vmatpush2.bf16.msra.mxu0 %v1077
  %1501 = vmatprep.subr.bf16.mxu0 0
  %1502 = vmatpush2.bf16.msra.mxu0 %v1076
  %1503 = vmatprep.subr.bf16.mxu0 0
  %1504 = vmatpush2.bf16.msra.mxu0 %v1075
  %1505 = vmatprep.subr.bf16.mxu0 0
  %1506 = vmatpush2.bf16.msra.mxu0 %v1074
  %1507 = vmatprep.subr.bf16.mxu0 0
  %1508 = vmatpush2.bf16.msra.mxu0 %v1073
  %1509 = vmatprep.subr.bf16.mxu0 0
  %1510 = vmatpush2.bf16.msra.mxu0 %v1072
  %1511 = vmatprep.subr.bf16.mxu0 0
  %1512 = vmatpush2.bf16.msra.mxu0 %v1071
  %1513 = vmatprep.subr.bf16.mxu0 0
  %1514 = vmatpush2.bf16.msra.mxu0 %v1070
  %1515 = vmatprep.mubr.bf16.mxu0 %v417
  %1516 = vmatmul.mubr.bf16.gmra.mxu0 %v416
  %v1517 = vpop.f32.mrf.mxu0
  %v1518 = vadd.f32 %v1469, %v1517
  %v1519 = vpop.f32.mrf.mxu0
  %v1520 = vpop.f32.mrf.mxu0
  %v1521 = vadd.f32 %v1472, %v1520
  %v1522 = vpop.f32.mrf.mxu0
  %1523 = vmatprep.mubr.bf16.mxu0 %v433
  %1524 = vmatmul.mubr.bf16.gmra.mxu0 %v432
  %v1525 = vpop.f32.mrf.mxu0
  %v1526 = vadd.f32 %v1477, %v1525
  %v1527 = vpop.f32.mrf.mxu0
  %v1528 = vpop.f32.mrf.mxu0
  %v1529 = vadd.f32 %v1480, %v1528
  %v1530 = vpop.f32.mrf.mxu0
  %1531 = vdwg.mxu0
  %1532 = vmatprep.subr.bf16.mxu0 0
  %1533 = vmatpush1.bf16.msra.mxu0 %v1085
  %1534 = vmatprep.subr.bf16.mxu0 0
  %1535 = vmatpush1.bf16.msra.mxu0 %v1084
  %1536 = vmatprep.subr.bf16.mxu0 0
  %1537 = vmatpush1.bf16.msra.mxu0 %v1083
  %1538 = vmatprep.subr.bf16.mxu0 0
  %1539 = vmatpush1.bf16.msra.mxu0 %v1082
  %1540 = vmatprep.subr.bf16.mxu0 0
  %1541 = vmatpush1.bf16.msra.mxu0 %v1081
  %1542 = vmatprep.subr.bf16.mxu0 0
  %1543 = vmatpush1.bf16.msra.mxu0 %v1080
  %1544 = vmatprep.subr.bf16.mxu0 0
  %1545 = vmatpush1.bf16.msra.mxu0 %v1079
  %1546 = vmatprep.subr.bf16.mxu0 0
  %1547 = vmatpush1.bf16.msra.mxu0 %v1078
  %1548 = vmatprep.subr.bf16.mxu0 0
  %1549 = vmatpush2.bf16.msra.mxu0 %v1093
  %1550 = vmatprep.subr.bf16.mxu0 0
  %1551 = vmatpush2.bf16.msra.mxu0 %v1092
  %1552 = vmatprep.subr.bf16.mxu0 0
  %1553 = vmatpush2.bf16.msra.mxu0 %v1091
  %1554 = vmatprep.subr.bf16.mxu0 0
  %1555 = vmatpush2.bf16.msra.mxu0 %v1090
  %1556 = vmatprep.subr.bf16.mxu0 0
  %1557 = vmatpush2.bf16.msra.mxu0 %v1089
  %1558 = vmatprep.subr.bf16.mxu0 0
  %1559 = vmatpush2.bf16.msra.mxu0 %v1088
  %1560 = vmatprep.subr.bf16.mxu0 0
  %1561 = vmatpush2.bf16.msra.mxu0 %v1087
  %1562 = vmatprep.subr.bf16.mxu0 0
  %1563 = vmatpush2.bf16.msra.mxu0 %v1086
  %1564 = vmatprep.mubr.bf16.mxu0 %v419
  %1565 = vmatmul.mubr.bf16.gmra.mxu0 %v418
  %v1566 = vpop.f32.mrf.mxu0
  %v1567 = vadd.f32 %v1518, %v1566
  %v1568 = vpop.f32.mrf.mxu0
  %v1569 = vpop.f32.mrf.mxu0
  %v1570 = vadd.f32 %v1521, %v1569
  %v1571 = vpop.f32.mrf.mxu0
  %1572 = vmatprep.mubr.bf16.mxu0 %v435
  %1573 = vmatmul.mubr.bf16.gmra.mxu0 %v434
  %v1574 = vpop.f32.mrf.mxu0
  %v1575 = vadd.f32 %v1526, %v1574
  %v1576 = vpop.f32.mrf.mxu0
  %v1577 = vpop.f32.mrf.mxu0
  %v1578 = vadd.f32 %v1529, %v1577
  %v1579 = vpop.f32.mrf.mxu0
  %1580 = vdwg.mxu0
  %1581 = vmatprep.subr.bf16.mxu0 0
  %1582 = vmatpush1.bf16.msra.mxu0 %v1101
  %1583 = vmatprep.subr.bf16.mxu0 0
  %1584 = vmatpush1.bf16.msra.mxu0 %v1100
  %1585 = vmatprep.subr.bf16.mxu0 0
  %1586 = vmatpush1.bf16.msra.mxu0 %v1099
  %1587 = vmatprep.subr.bf16.mxu0 0
  %1588 = vmatpush1.bf16.msra.mxu0 %v1098
  %1589 = vmatprep.subr.bf16.mxu0 0
  %1590 = vmatpush1.bf16.msra.mxu0 %v1097
  %1591 = vmatprep.subr.bf16.mxu0 0
  %1592 = vmatpush1.bf16.msra.mxu0 %v1096
  %1593 = vmatprep.subr.bf16.mxu0 0
  %1594 = vmatpush1.bf16.msra.mxu0 %v1095
  %1595 = vmatprep.subr.bf16.mxu0 0
  %1596 = vmatpush1.bf16.msra.mxu0 %v1094
  %1597 = vmatprep.subr.bf16.mxu0 0
  %1598 = vmatpush2.bf16.msra.mxu0 %v1109
  %1599 = vmatprep.subr.bf16.mxu0 0
  %1600 = vmatpush2.bf16.msra.mxu0 %v1108
  %1601 = vmatprep.subr.bf16.mxu0 0
  %1602 = vmatpush2.bf16.msra.mxu0 %v1107
  %1603 = vmatprep.subr.bf16.mxu0 0
  %1604 = vmatpush2.bf16.msra.mxu0 %v1106
  %1605 = vmatprep.subr.bf16.mxu0 0
  %1606 = vmatpush2.bf16.msra.mxu0 %v1105
  %1607 = vmatprep.subr.bf16.mxu0 0
  %1608 = vmatpush2.bf16.msra.mxu0 %v1104
  %1609 = vmatprep.subr.bf16.mxu0 0
  %1610 = vmatpush2.bf16.msra.mxu0 %v1103
  %1611 = vmatprep.subr.bf16.mxu0 0
  %1612 = vmatpush2.bf16.msra.mxu0 %v1102
  %1613 = vmatprep.mubr.bf16.mxu0 %v421
  %1614 = vmatmul.mubr.bf16.gmra.mxu0 %v420
  %v1615 = vpop.f32.mrf.mxu0
  %v1616 = vadd.f32 %v1567, %v1615
  %v1617 = vpop.f32.mrf.mxu0
  %v1618 = vpop.f32.mrf.mxu0
  %v1619 = vadd.f32 %v1570, %v1618
  %v1620 = vpop.f32.mrf.mxu0
  %1621 = vmatprep.mubr.bf16.mxu0 %v437
  %1622 = vmatmul.mubr.bf16.gmra.mxu0 %v436
  %v1623 = vpop.f32.mrf.mxu0
  %v1624 = vadd.f32 %v1575, %v1623
  %v1625 = vpop.f32.mrf.mxu0
  %v1626 = vpop.f32.mrf.mxu0
  %v1627 = vadd.f32 %v1578, %v1626
  %v1628 = vpop.f32.mrf.mxu0
  %1629 = vdwg.mxu0
  %v1630 = vmax.f32 %v1616, 0.0
  %v1631 = vmax.f32 %v1619, 0.0
  %v1632 = vmax.f32 %v1624, 0.0
  %v1633 = vmax.f32 %v1627, 0.0
  %v1634 = vpack.c.bf16 %v1631, %v1630
  %v1635 = vpack.c.bf16 %v1633, %v1632
  %v1638 = vunpack.c.l.b16 %v1634
  %v1639 = vunpack.c.h.b16 %v1634
  %v1640 = vunpack.c.l.b16 %v1635
  %v1641 = vunpack.c.h.b16 %v1635
  %v1642 = vpack.c.b16 %v1638, %v1638
  %v1643 = vpack.c.b16 %v1639, %v1639
  %v1644 = vpack.c.b16 %v1640, %v1640
  %v1645 = vpack.c.b16 %v1641, %v1641
  %1650 = vst [vmem:[%s3] sm:$0xf] %v1642
  %1651 = vst [vmem:[%s3 + $0x4] sm:$0xf] %v1643
  %1652 = vst [vmem:[%s3 + $0x8] sm:$0xf] %v1644
  %1653 = vst [vmem:[%s3 + $0xc] sm:$0xf] %v1645
  // Predicated region
  $region14: #{cnndqn_forward.4} parent=0 // pred_check
    _
  $region15: #{cnndqn_forward.4} parent=0 // pred_check_branch
    %1655 = sbr.rel (0) target = $region17
  $region16: #{cnndqn_forward.4} parent=0 // pred_region
    _
  $region17: #{cnndqn_forward.4} parent=0 // pred_fallthru
    _
  // Predicated region
  $region18: #{cnndqn_forward.4} parent=0 // pred_check
    _
  $region19: #{cnndqn_forward.4} parent=0 // pred_check_branch
    %1657 = sbr.rel (0) target = $region21
  $region20: #{cnndqn_forward.4} parent=0 // pred_region
    _
  $region21: #{cnndqn_forward.4} parent=0 // pred_fallthru
    _

// kernel: cnndqn_forward.5
$region0: #{cnndqn_forward.5}
  #allocation0 [shape = 'u32[]', space=smem, size = 0x4, offset = 0x4, fixed_abs, tag = 'smem constant byte address 0x4 - core index']
  #allocation1 [shape = 'u32[144,128]{1,0:T(1,128)}', space=vmem, size = 0x12000, scoped, tag = 'internal scratch']
  %s0 = inlined_call_operand.vmem [shape: bf16[4,2,1152], index: 0, kind: input, shape index: {}]
  %s1 = inlined_call_operand.vmem [shape: bf16[1152,128], index: 1, kind: input, shape index: {}]
  %s2 = inlined_call_operand.vmem [shape: f32[1,128], index: 2, kind: input, shape index: {}]
  %s3 = inlined_call_operand.vmem [shape: bf16[4,128,512], index: 3, kind: input, shape index: {}]
  %s4 = inlined_call_operand.vmem [shape: f32[1,512], index: 4, kind: input, shape index: {}]
  %s5 = inlined_call_operand.vmem [shape: bf16[512,128], index: 5, kind: input, shape index: {}]
  %s6 = inlined_call_operand.vmem [shape: f32[1,128], index: 6, kind: input, shape index: {}]
  %s7 = inlined_call_operand.hbm [shape: f32[2,128], index: 7, kind: output, shape index: {}]
  %s8 = sld [smem:[#allocation0]]
  $region38: #{cnndqn_forward.5} parent=0
    _
  %s10 = ssub.s32 1, %s8
  %s11 = scalar_select 0, %s10, %s8
  $region1: #{cnndqn_forward.5} parent=0
    #allocation2 [shape = 'u8[1024]{0}', space=vmem, size = 0x400, scoped, tag = 'output window, operand 0, single buffered']
    #allocation3 [shape = 's32[1]{0}', space=sflag, size = 0x4, scoped, tag = 'scoped memory for cnndqn_forward.5']
    %12 = vsyncpa [#allocation3], 0
    // Predicated region
    $region2: #{cnndqn_forward.5} parent=1 // pred_check
      _
    $region3: #{cnndqn_forward.5} parent=1 // pred_check_branch
      %14 = sbr.rel (0) target = $region5
    $region4: #{cnndqn_forward.5} parent=1 // pred_region
      _
    $region5: #{cnndqn_forward.5} parent=1 // pred_fallthru
      _
    // Predicated region
    $region6: #{cnndqn_forward.5} parent=1 // pred_check
      _
    $region7: #{cnndqn_forward.5} parent=1 // pred_check_branch
      %16 = sbr.rel (0) target = $region9
    $region8: #{cnndqn_forward.5} parent=1 // pred_region
      _
    $region9: #{cnndqn_forward.5} parent=1 // pred_fallthru
      _
    // Predicated region
    $region10: #{cnndqn_forward.5} parent=1 // pred_check
      _
    $region11: #{cnndqn_forward.5} parent=1 // pred_check_branch
      %18 = sbr.rel (0) target = $region13
    $region12: #{cnndqn_forward.5} parent=1 // pred_region
      _
    $region13: #{cnndqn_forward.5} parent=1 // pred_fallthru
      _
    // Predicated region
    $region14: #{cnndqn_forward.5} parent=1 // pred_check
      _
    $region15: #{cnndqn_forward.5} parent=1 // pred_check_branch
      %20 = sbr.rel (0) target = $region17
    $region16: #{cnndqn_forward.5} parent=1 // pred_region
      _
    $region17: #{cnndqn_forward.5} parent=1 // pred_fallthru
      _
    // Predicated region
    $region18: #{cnndqn_forward.5} parent=1 // pred_check
      _
    $region19: #{cnndqn_forward.5} parent=1 // pred_check_branch
      %22 = sbr.rel (0) target = $region21
    $region20: #{cnndqn_forward.5} parent=1 // pred_region
      _
    $region21: #{cnndqn_forward.5} parent=1 // pred_fallthru
      _
    // Predicated region
    $region22: #{cnndqn_forward.5} parent=1 // pred_check
      _
    $region23: #{cnndqn_forward.5} parent=1 // pred_check_branch
      %24 = sbr.rel (0) target = $region25
    $region24: #{cnndqn_forward.5} parent=1 // pred_region
      _
    $region25: #{cnndqn_forward.5} parent=1 // pred_fallthru
      _
    // Predicated region
    $region26: #{cnndqn_forward.5} parent=1 // pred_check
      _
    $region27: #{cnndqn_forward.5} parent=1 // pred_check_branch
      %26 = sbr.rel (0) target = $region29
    $region28: #{cnndqn_forward.5} parent=1 // pred_region
      _
    $region29: #{cnndqn_forward.5} parent=1 // pred_fallthru
      _
    %v28 = vld [vmem:[%s0] sm:$0xff]
    %v29 = vld [vmem:[%s0 + $0x8] sm:$0x1]
    %v30 = vld [vmem:[%s1] sm:$0xf]
    %v31 = vld [vmem:[%s1 + $0x4] sm:$0xf]
    %v32 = vld [vmem:[%s1 + $0x8] sm:$0xf]
    %v33 = vld [vmem:[%s1 + $0xc] sm:$0xf]
    %v34 = vld [vmem:[%s1 + $0x10] sm:$0xf]
    %v35 = vld [vmem:[%s1 + $0x14] sm:$0xf]
    %v36 = vld [vmem:[%s1 + $0x18] sm:$0xf]
    %v37 = vld [vmem:[%s1 + $0x1c] sm:$0xf]
    %v38 = vld [vmem:[%s1 + $0x20] sm:$0xf]
    %v39 = vld [vmem:[%s1 + $0x24] sm:$0xf]
    %v40 = vld [vmem:[%s1 + $0x28] sm:$0xf]
    %v41 = vld [vmem:[%s1 + $0x2c] sm:$0xf]
    %v42 = vld [vmem:[%s1 + $0x30] sm:$0xf]
    %v43 = vld [vmem:[%s1 + $0x34] sm:$0xf]
    %v44 = vld [vmem:[%s1 + $0x38] sm:$0xf]
    %v45 = vld [vmem:[%s1 + $0x3c] sm:$0xf]
    %v46 = vld [vmem:[%s1 + $0x40] sm:$0xf]
    %v47 = vld [vmem:[%s1 + $0x44] sm:$0xf]
    %v48 = vld [vmem:[%s1 + $0x48] sm:$0xf]
    %v49 = vld [vmem:[%s1 + $0x4c] sm:$0xf]
    %v50 = vld [vmem:[%s1 + $0x50] sm:$0xf]
    %v51 = vld [vmem:[%s1 + $0x54] sm:$0xf]
    %v52 = vld [vmem:[%s1 + $0x58] sm:$0xf]
    %v53 = vld [vmem:[%s1 + $0x5c] sm:$0xf]
    %v54 = vld [vmem:[%s1 + $0x60] sm:$0xf]
    %v55 = vld [vmem:[%s1 + $0x64] sm:$0xf]
    %v56 = vld [vmem:[%s1 + $0x68] sm:$0xf]
    %v57 = vld [vmem:[%s1 + $0x6c] sm:$0xf]
    %v58 = vld [vmem:[%s1 + $0x70] sm:$0xf]
    %v59 = vld [vmem:[%s1 + $0x74] sm:$0xf]
    %v60 = vld [vmem:[%s1 + $0x78] sm:$0xf]
    %v61 = vld [vmem:[%s1 + $0x7c] sm:$0xf]
    %v62 = vld [vmem:[%s1 + $0x80] sm:$0xf]
    %v63 = vld [vmem:[%s1 + $0x84] sm:$0xf]
    %v64 = vld [vmem:[%s1 + $0x88] sm:$0xf]
    %v65 = vld [vmem:[%s1 + $0x8c] sm:$0xf]
    %v66 = vld [vmem:[%s1 + $0x90] sm:$0xf]
    %v67 = vld [vmem:[%s1 + $0x94] sm:$0xf]
    %v68 = vld [vmem:[%s1 + $0x98] sm:$0xf]
    %v69 = vld [vmem:[%s1 + $0x9c] sm:$0xf]
    %v70 = vld [vmem:[%s1 + $0xa0] sm:$0xf]
    %v71 = vld [vmem:[%s1 + $0xa4] sm:$0xf]
    %v72 = vld [vmem:[%s1 + $0xa8] sm:$0xf]
    %v73 = vld [vmem:[%s1 + $0xac] sm:$0xf]
    %v74 = vld [vmem:[%s1 + $0xb0] sm:$0xf]
    %v75 = vld [vmem:[%s1 + $0xb4] sm:$0xf]
    %v76 = vld [vmem:[%s1 + $0xb8] sm:$0xf]
    %v77 = vld [vmem:[%s1 + $0xbc] sm:$0xf]
    %v78 = vld [vmem:[%s1 + $0xc0] sm:$0xf]
    %v79 = vld [vmem:[%s1 + $0xc4] sm:$0xf]
    %v80 = vld [vmem:[%s1 + $0xc8] sm:$0xf]
    %v81 = vld [vmem:[%s1 + $0xcc] sm:$0xf]
    %v82 = vld [vmem:[%s1 + $0xd0] sm:$0xf]
    %v83 = vld [vmem:[%s1 + $0xd4] sm:$0xf]
    %v84 = vld [vmem:[%s1 + $0xd8] sm:$0xf]
    %v85 = vld [vmem:[%s1 + $0xdc] sm:$0xf]
    %v86 = vld [vmem:[%s1 + $0xe0] sm:$0xf]
    %v87 = vld [vmem:[%s1 + $0xe4] sm:$0xf]
    %v88 = vld [vmem:[%s1 + $0xe8] sm:$0xf]
    %v89 = vld [vmem:[%s1 + $0xec] sm:$0xf]
    %v90 = vld [vmem:[%s1 + $0xf0] sm:$0xf]
    %v91 = vld [vmem:[%s1 + $0xf4] sm:$0xf]
    %v92 = vld [vmem:[%s1 + $0xf8] sm:$0xf]
    %v93 = vld [vmem:[%s1 + $0xfc] sm:$0xf]
    %v94 = vld [vmem:[%s1 + $0x100] sm:$0xf]
    %v95 = vld [vmem:[%s1 + $0x104] sm:$0xf]
    %v96 = vld [vmem:[%s1 + $0x108] sm:$0xf]
    %v97 = vld [vmem:[%s1 + $0x10c] sm:$0xf]
    %v98 = vld [vmem:[%s1 + $0x110] sm:$0xf]
    %v99 = vld [vmem:[%s1 + $0x114] sm:$0xf]
    %v100 = vld [vmem:[%s1 + $0x118] sm:$0xf]
    %v101 = vld [vmem:[%s1 + $0x11c] sm:$0xf]
    %v102 = vld [vmem:[%s1 + $0x120] sm:$0xf]
    %v103 = vld [vmem:[%s1 + $0x124] sm:$0xf]
    %v104 = vld [vmem:[%s1 + $0x128] sm:$0xf]
    %v105 = vld [vmem:[%s1 + $0x12c] sm:$0xf]
    %v106 = vld [vmem:[%s1 + $0x130] sm:$0xf]
    %v107 = vld [vmem:[%s1 + $0x134] sm:$0xf]
    %v108 = vld [vmem:[%s1 + $0x138] sm:$0xf]
    %v109 = vld [vmem:[%s1 + $0x13c] sm:$0xf]
    %v110 = vld [vmem:[%s1 + $0x140] sm:$0xf]
    %v111 = vld [vmem:[%s1 + $0x144] sm:$0xf]
    %v112 = vld [vmem:[%s1 + $0x148] sm:$0xf]
    %v113 = vld [vmem:[%s1 + $0x14c] sm:$0xf]
    %v114 = vld [vmem:[%s1 + $0x150] sm:$0xf]
    %v115 = vld [vmem:[%s1 + $0x154] sm:$0xf]
    %v116 = vld [vmem:[%s1 + $0x158] sm:$0xf]
    %v117 = vld [vmem:[%s1 + $0x15c] sm:$0xf]
    %v118 = vld [vmem:[%s1 + $0x160] sm:$0xf]
    %v119 = vld [vmem:[%s1 + $0x164] sm:$0xf]
    %v120 = vld [vmem:[%s1 + $0x168] sm:$0xf]
    %v121 = vld [vmem:[%s1 + $0x16c] sm:$0xf]
    %v122 = vld [vmem:[%s1 + $0x170] sm:$0xf]
    %v123 = vld [vmem:[%s1 + $0x174] sm:$0xf]
    %v124 = vld [vmem:[%s1 + $0x178] sm:$0xf]
    %v125 = vld [vmem:[%s1 + $0x17c] sm:$0xf]
    %v126 = vld [vmem:[%s1 + $0x180] sm:$0xf]
    %v127 = vld [vmem:[%s1 + $0x184] sm:$0xf]
    %v128 = vld [vmem:[%s1 + $0x188] sm:$0xf]
    %v129 = vld [vmem:[%s1 + $0x18c] sm:$0xf]
    %v130 = vld [vmem:[%s1 + $0x190] sm:$0xf]
    %v131 = vld [vmem:[%s1 + $0x194] sm:$0xf]
    %v132 = vld [vmem:[%s1 + $0x198] sm:$0xf]
    %v133 = vld [vmem:[%s1 + $0x19c] sm:$0xf]
    %v134 = vld [vmem:[%s1 + $0x1a0] sm:$0xf]
    %v135 = vld [vmem:[%s1 + $0x1a4] sm:$0xf]
    %v136 = vld [vmem:[%s1 + $0x1a8] sm:$0xf]
    %v137 = vld [vmem:[%s1 + $0x1ac] sm:$0xf]
    %v138 = vld [vmem:[%s1 + $0x1b0] sm:$0xf]
    %v139 = vld [vmem:[%s1 + $0x1b4] sm:$0xf]
    %v140 = vld [vmem:[%s1 + $0x1b8] sm:$0xf]
    %v141 = vld [vmem:[%s1 + $0x1bc] sm:$0xf]
    %v142 = vld [vmem:[%s1 + $0x1c0] sm:$0xf]
    %v143 = vld [vmem:[%s1 + $0x1c4] sm:$0xf]
    %v144 = vld [vmem:[%s1 + $0x1c8] sm:$0xf]
    %v145 = vld [vmem:[%s1 + $0x1cc] sm:$0xf]
    %v146 = vld [vmem:[%s1 + $0x1d0] sm:$0xf]
    %v147 = vld [vmem:[%s1 + $0x1d4] sm:$0xf]
    %v148 = vld [vmem:[%s1 + $0x1d8] sm:$0xf]
    %v149 = vld [vmem:[%s1 + $0x1dc] sm:$0xf]
    %v150 = vld [vmem:[%s1 + $0x1e0] sm:$0xf]
    %v151 = vld [vmem:[%s1 + $0x1e4] sm:$0xf]
    %v152 = vld [vmem:[%s1 + $0x1e8] sm:$0xf]
    %v153 = vld [vmem:[%s1 + $0x1ec] sm:$0xf]
    %v154 = vld [vmem:[%s1 + $0x1f0] sm:$0xf]
    %v155 = vld [vmem:[%s1 + $0x1f4] sm:$0xf]
    %v156 = vld [vmem:[%s1 + $0x1f8] sm:$0xf]
    %v157 = vld [vmem:[%s1 + $0x1fc] sm:$0xf]
    %v158 = vld [vmem:[%s1 + $0x200] sm:$0xf]
    %v159 = vld [vmem:[%s1 + $0x204] sm:$0xf]
    %v160 = vld [vmem:[%s1 + $0x208] sm:$0xf]
    %v161 = vld [vmem:[%s1 + $0x20c] sm:$0xf]
    %v162 = vld [vmem:[%s1 + $0x210] sm:$0xf]
    %v163 = vld [vmem:[%s1 + $0x214] sm:$0xf]
    %v164 = vld [vmem:[%s1 + $0x218] sm:$0xf]
    %v165 = vld [vmem:[%s1 + $0x21c] sm:$0xf]
    %v166 = vld [vmem:[%s1 + $0x220] sm:$0xf]
    %v167 = vld [vmem:[%s1 + $0x224] sm:$0xf]
    %v168 = vld [vmem:[%s1 + $0x228] sm:$0xf]
    %v169 = vld [vmem:[%s1 + $0x22c] sm:$0xf]
    %v170 = vld [vmem:[%s1 + $0x230] sm:$0xf]
    %v171 = vld [vmem:[%s1 + $0x234] sm:$0xf]
    %v172 = vld [vmem:[%s1 + $0x238] sm:$0xf]
    %v173 = vld [vmem:[%s1 + $0x23c] sm:$0xf]
    %v174 = vld [vmem:[%s2] sm:$0x1]
    %v176 = vlaneseq
    %v177 = vshrl.u32 %v176, 7
    %v178 = vsub.s32 0, %v177
    %v179 = vrot.slane %v174, %v178
    %v183 = vcombine.high %v28, %v28
    %v185 = vunpack.c.l.s4 1966171168
    %v186 = vunpack.c.0.s8 %v185
    %v187 = vlaneseq
    %v188 = vshrl.u32 %v187, 7
    %v189 = vsub.s32 %v186, %v188
    %v190 = vrot.slane %v28, %v189
    %v192 = vunpack.c.l.s4 1966171168
    %v193 = vunpack.c.0.s8 %v192
    %v194 = vlaneseq
    %v195 = vshrl.u32 %v194, 7
    %v196 = vsub.s32 %v193, %v195
    %v197 = vrot.slane %v183, %v196
    %v198 = vcombine.high %v190, %v190
    %v199 = vcombine.high %v197, %v197
    %v201 = vunpack.c.l.s4 1966171168
    %v202 = vunpack.c.0.s8 %v201
    %v203 = vlaneseq
    %v204 = vshrl.u32 %v203, 7
    %v205 = vsub.s32 %v202, %v204
    %v206 = vrot.slane %v190, %v205
    %v208 = vunpack.c.l.s4 1966171168
    %v209 = vunpack.c.0.s8 %v208
    %v210 = vlaneseq
    %v211 = vshrl.u32 %v210, 7
    %v212 = vsub.s32 %v209, %v211
    %v213 = vrot.slane %v197, %v212
    %v215 = vunpack.c.l.s4 1966171168
    %v216 = vunpack.c.0.s8 %v215
    %v217 = vlaneseq
    %v218 = vshrl.u32 %v217, 7
    %v219 = vsub.s32 %v216, %v218
    %v220 = vrot.slane %v198, %v219
    %v222 = vunpack.c.l.s4 1966171168
    %v223 = vunpack.c.0.s8 %v222
    %v224 = vlaneseq
    %v225 = vshrl.u32 %v224, 7
    %v226 = vsub.s32 %v223, %v225
    %v227 = vrot.slane %v199, %v226
    %v228 = vcombine.high %v206, %v206
    %v229 = vcombine.high %v213, %v213
    %v230 = vcombine.high %v220, %v220
    %v231 = vcombine.high %v227, %v227
    %v233 = vunpack.c.l.s4 1966171168
    %v234 = vunpack.c.0.s8 %v233
    %v235 = vlaneseq
    %v236 = vshrl.u32 %v235, 7
    %v237 = vsub.s32 %v234, %v236
    %v238 = vrot.slane %v29, %v237
    %v240 = vunpack.c.l.s4 1966171168
    %v241 = vunpack.c.0.s8 %v240
    %v242 = vlaneseq
    %v243 = vshrl.u32 %v242, 7
    %v244 = vsub.s32 %v241, %v243
    %v245 = vrot.slane %v238, %v244
    %v399 = vunpack.c.l.b16 %v30
    %v400 = vunpack.c.l.b16 %v31
    %v401 = vunpack.c.l.b16 %v32
    %v402 = vunpack.c.l.b16 %v33
    %v403 = vunpack.c.l.b16 %v34
    %v404 = vunpack.c.l.b16 %v35
    %v405 = vunpack.c.l.b16 %v36
    %v406 = vunpack.c.l.b16 %v37
    %v407 = vunpack.c.l.b16 %v38
    %v408 = vunpack.c.l.b16 %v39
    %v409 = vunpack.c.l.b16 %v40
    %v410 = vunpack.c.l.b16 %v41
    %v411 = vunpack.c.l.b16 %v42
    %v412 = vunpack.c.l.b16 %v43
    %v413 = vunpack.c.l.b16 %v44
    %v414 = vunpack.c.l.b16 %v45
    %v415 = vunpack.c.l.b16 %v46
    %v416 = vunpack.c.l.b16 %v47
    %v417 = vunpack.c.l.b16 %v48
    %v418 = vunpack.c.l.b16 %v49
    %v419 = vunpack.c.l.b16 %v50
    %v420 = vunpack.c.l.b16 %v51
    %v421 = vunpack.c.l.b16 %v52
    %v422 = vunpack.c.l.b16 %v53
    %v423 = vunpack.c.l.b16 %v54
    %v424 = vunpack.c.l.b16 %v55
    %v425 = vunpack.c.l.b16 %v56
    %v426 = vunpack.c.l.b16 %v57
    %v427 = vunpack.c.l.b16 %v58
    %v428 = vunpack.c.l.b16 %v59
    %v429 = vunpack.c.l.b16 %v60
    %v430 = vunpack.c.l.b16 %v61
    %v431 = vunpack.c.l.b16 %v62
    %v432 = vunpack.c.l.b16 %v63
    %v433 = vunpack.c.l.b16 %v64
    %v434 = vunpack.c.l.b16 %v65
    %v435 = vunpack.c.l.b16 %v66
    %v436 = vunpack.c.l.b16 %v67
    %v437 = vunpack.c.l.b16 %v68
    %v438 = vunpack.c.l.b16 %v69
    %v439 = vunpack.c.l.b16 %v70
    %v440 = vunpack.c.l.b16 %v71
    %v441 = vunpack.c.l.b16 %v72
    %v442 = vunpack.c.l.b16 %v73
    %v443 = vunpack.c.l.b16 %v74
    %v444 = vunpack.c.l.b16 %v75
    %v445 = vunpack.c.l.b16 %v76
    %v446 = vunpack.c.l.b16 %v77
    %v447 = vunpack.c.l.b16 %v78
    %v448 = vunpack.c.l.b16 %v79
    %v449 = vunpack.c.l.b16 %v80
    %v450 = vunpack.c.l.b16 %v81
    %v451 = vunpack.c.l.b16 %v82
    %v452 = vunpack.c.l.b16 %v83
    %v453 = vunpack.c.l.b16 %v84
    %v454 = vunpack.c.l.b16 %v85
    %v455 = vunpack.c.l.b16 %v86
    %v456 = vunpack.c.l.b16 %v87
    %v457 = vunpack.c.l.b16 %v88
    %v458 = vunpack.c.l.b16 %v89
    %v459 = vunpack.c.l.b16 %v90
    %v460 = vunpack.c.l.b16 %v91
    %v461 = vunpack.c.l.b16 %v92
    %v462 = vunpack.c.l.b16 %v93
    %v463 = vunpack.c.l.b16 %v94
    %v464 = vunpack.c.l.b16 %v95
    %v465 = vunpack.c.l.b16 %v96
    %v466 = vunpack.c.l.b16 %v97
    %v467 = vunpack.c.l.b16 %v98
    %v468 = vunpack.c.l.b16 %v99
    %v469 = vunpack.c.l.b16 %v100
    %v470 = vunpack.c.l.b16 %v101
    %v471 = vunpack.c.l.b16 %v102
    %v472 = vunpack.c.l.b16 %v103
    %v473 = vunpack.c.l.b16 %v104
    %v474 = vunpack.c.l.b16 %v105
    %v475 = vunpack.c.l.b16 %v106
    %v476 = vunpack.c.l.b16 %v107
    %v477 = vunpack.c.l.b16 %v108
    %v478 = vunpack.c.l.b16 %v109
    %v479 = vunpack.c.l.b16 %v110
    %v480 = vunpack.c.l.b16 %v111
    %v481 = vunpack.c.l.b16 %v112
    %v482 = vunpack.c.l.b16 %v113
    %v483 = vunpack.c.l.b16 %v114
    %v484 = vunpack.c.l.b16 %v115
    %v485 = vunpack.c.l.b16 %v116
    %v486 = vunpack.c.l.b16 %v117
    %v487 = vunpack.c.l.b16 %v118
    %v488 = vunpack.c.l.b16 %v119
    %v489 = vunpack.c.l.b16 %v120
    %v490 = vunpack.c.l.b16 %v121
    %v491 = vunpack.c.l.b16 %v122
    %v492 = vunpack.c.l.b16 %v123
    %v493 = vunpack.c.l.b16 %v124
    %v494 = vunpack.c.l.b16 %v125
    %v495 = vunpack.c.l.b16 %v126
    %v496 = vunpack.c.l.b16 %v127
    %v497 = vunpack.c.l.b16 %v128
    %v498 = vunpack.c.l.b16 %v129
    %v499 = vunpack.c.l.b16 %v130
    %v500 = vunpack.c.l.b16 %v131
    %v501 = vunpack.c.l.b16 %v132
    %v502 = vunpack.c.l.b16 %v133
    %v503 = vunpack.c.l.b16 %v134
    %v504 = vunpack.c.l.b16 %v135
    %v505 = vunpack.c.l.b16 %v136
    %v506 = vunpack.c.l.b16 %v137
    %v507 = vunpack.c.l.b16 %v138
    %v508 = vunpack.c.l.b16 %v139
    %v509 = vunpack.c.l.b16 %v140
    %v510 = vunpack.c.l.b16 %v141
    %v511 = vunpack.c.l.b16 %v142
    %v512 = vunpack.c.l.b16 %v143
    %v513 = vunpack.c.l.b16 %v144
    %v514 = vunpack.c.l.b16 %v145
    %v515 = vunpack.c.l.b16 %v146
    %v516 = vunpack.c.l.b16 %v147
    %v517 = vunpack.c.l.b16 %v148
    %v518 = vunpack.c.l.b16 %v149
    %v519 = vunpack.c.l.b16 %v150
    %v520 = vunpack.c.l.b16 %v151
    %v521 = vunpack.c.l.b16 %v152
    %v522 = vunpack.c.l.b16 %v153
    %v523 = vunpack.c.l.b16 %v154
    %v524 = vunpack.c.l.b16 %v155
    %v525 = vunpack.c.l.b16 %v156
    %v526 = vunpack.c.l.b16 %v157
    %v527 = vunpack.c.l.b16 %v158
    %v528 = vunpack.c.l.b16 %v159
    %v529 = vunpack.c.l.b16 %v160
    %v530 = vunpack.c.l.b16 %v161
    %v531 = vunpack.c.l.b16 %v162
    %v532 = vunpack.c.l.b16 %v163
    %v533 = vunpack.c.l.b16 %v164
    %v534 = vunpack.c.l.b16 %v165
    %v535 = vunpack.c.l.b16 %v166
    %v536 = vunpack.c.l.b16 %v167
    %v537 = vunpack.c.l.b16 %v168
    %v538 = vunpack.c.l.b16 %v169
    %v539 = vunpack.c.l.b16 %v170
    %v540 = vunpack.c.l.b16 %v171
    %v541 = vunpack.c.l.b16 %v172
    %v542 = vunpack.c.l.b16 %v173
    %v543 = vpack.c.b16 %v400, %v399
    %v544 = vpack.c.b16 %v402, %v401
    %v545 = vpack.c.b16 %v404, %v403
    %v546 = vpack.c.b16 %v406, %v405
    %v547 = vpack.c.b16 %v408, %v407
    %v548 = vpack.c.b16 %v410, %v409
    %v549 = vpack.c.b16 %v412, %v411
    %v550 = vpack.c.b16 %v414, %v413
    %v551 = vpack.c.b16 %v416, %v415
    %v552 = vpack.c.b16 %v418, %v417
    %v553 = vpack.c.b16 %v420, %v419
    %v554 = vpack.c.b16 %v422, %v421
    %v555 = vpack.c.b16 %v424, %v423
    %v556 = vpack.c.b16 %v426, %v425
    %v557 = vpack.c.b16 %v428, %v427
    %v558 = vpack.c.b16 %v430, %v429
    %v559 = vpack.c.b16 %v432, %v431
    %v560 = vpack.c.b16 %v434, %v433
    %v561 = vpack.c.b16 %v436, %v435
    %v562 = vpack.c.b16 %v438, %v437
    %v563 = vpack.c.b16 %v440, %v439
    %v564 = vpack.c.b16 %v442, %v441
    %v565 = vpack.c.b16 %v444, %v443
    %v566 = vpack.c.b16 %v446, %v445
    %v567 = vpack.c.b16 %v448, %v447
    %v568 = vpack.c.b16 %v450, %v449
    %v569 = vpack.c.b16 %v452, %v451
    %v570 = vpack.c.b16 %v454, %v453
    %v571 = vpack.c.b16 %v456, %v455
    %v572 = vpack.c.b16 %v458, %v457
    %v573 = vpack.c.b16 %v460, %v459
    %v574 = vpack.c.b16 %v462, %v461
    %v575 = vpack.c.b16 %v464, %v463
    %v576 = vpack.c.b16 %v466, %v465
    %v577 = vpack.c.b16 %v468, %v467
    %v578 = vpack.c.b16 %v470, %v469
    %v579 = vpack.c.b16 %v472, %v471
    %v580 = vpack.c.b16 %v474, %v473
    %v581 = vpack.c.b16 %v476, %v475
    %v582 = vpack.c.b16 %v478, %v477
    %v583 = vpack.c.b16 %v480, %v479
    %v584 = vpack.c.b16 %v482, %v481
    %v585 = vpack.c.b16 %v484, %v483
    %v586 = vpack.c.b16 %v486, %v485
    %v587 = vpack.c.b16 %v488, %v487
    %v588 = vpack.c.b16 %v490, %v489
    %v589 = vpack.c.b16 %v492, %v491
    %v590 = vpack.c.b16 %v494, %v493
    %v591 = vpack.c.b16 %v496, %v495
    %v592 = vpack.c.b16 %v498, %v497
    %v593 = vpack.c.b16 %v500, %v499
    %v594 = vpack.c.b16 %v502, %v501
    %v595 = vpack.c.b16 %v504, %v503
    %v596 = vpack.c.b16 %v506, %v505
    %v597 = vpack.c.b16 %v508, %v507
    %v598 = vpack.c.b16 %v510, %v509
    %v599 = vpack.c.b16 %v512, %v511
    %v600 = vpack.c.b16 %v514, %v513
    %v601 = vpack.c.b16 %v516, %v515
    %v602 = vpack.c.b16 %v518, %v517
    %v603 = vpack.c.b16 %v520, %v519
    %v604 = vpack.c.b16 %v522, %v521
    %v605 = vpack.c.b16 %v524, %v523
    %v606 = vpack.c.b16 %v526, %v525
    %v607 = vpack.c.b16 %v528, %v527
    %v608 = vpack.c.b16 %v530, %v529
    %v609 = vpack.c.b16 %v532, %v531
    %v610 = vpack.c.b16 %v534, %v533
    %v611 = vpack.c.b16 %v536, %v535
    %v612 = vpack.c.b16 %v538, %v537
    %v613 = vpack.c.b16 %v540, %v539
    %v614 = vpack.c.b16 %v542, %v541
    %687 = vmatprep.subr.bf16.mxu0 0
    %688 = vmatpush1.bf16.msra.mxu0 %v550
    %689 = vmatprep.subr.bf16.mxu0 0
    %690 = vmatpush1.bf16.msra.mxu0 %v549
    %691 = vmatprep.subr.bf16.mxu0 0
    %692 = vmatpush1.bf16.msra.mxu0 %v548
    %693 = vmatprep.subr.bf16.mxu0 0
    %694 = vmatpush1.bf16.msra.mxu0 %v547
    %695 = vmatprep.subr.bf16.mxu0 0
    %696 = vmatpush1.bf16.msra.mxu0 %v546
    %697 = vmatprep.subr.bf16.mxu0 0
    %698 = vmatpush1.bf16.msra.mxu0 %v545
    %699 = vmatprep.subr.bf16.mxu0 0
    %700 = vmatpush1.bf16.msra.mxu0 %v544
    %701 = vmatprep.subr.bf16.mxu0 0
    %702 = vmatpush1.bf16.msra.mxu0 %v543
    %703 = vmatprep.subr.bf16.mxu0 0
    %704 = vmatpush2.bf16.msra.mxu0 %v558
    %705 = vmatprep.subr.bf16.mxu0 0
    %706 = vmatpush2.bf16.msra.mxu0 %v557
    %707 = vmatprep.subr.bf16.mxu0 0
    %708 = vmatpush2.bf16.msra.mxu0 %v556
    %709 = vmatprep.subr.bf16.mxu0 0
    %710 = vmatpush2.bf16.msra.mxu0 %v555
    %711 = vmatprep.subr.bf16.mxu0 0
    %712 = vmatpush2.bf16.msra.mxu0 %v554
    %713 = vmatprep.subr.bf16.mxu0 0
    %714 = vmatpush2.bf16.msra.mxu0 %v553
    %715 = vmatprep.subr.bf16.mxu0 0
    %716 = vmatpush2.bf16.msra.mxu0 %v552
    %717 = vmatprep.subr.bf16.mxu0 0
    %718 = vmatpush2.bf16.msra.mxu0 %v551
    %719 = vmatprep.mubr.bf16.mxu0 %v220
    %720 = vmatmul.mubr.bf16.gmra.mxu0 %v206
    %v721 = vpop.f32.mrf.mxu0
    %v722 = vadd.f32 %v179, %v721
    %v723 = vpop.f32.mrf.mxu0
    %v724 = vpop.f32.mrf.mxu0
    %v725 = vpop.f32.mrf.mxu0
    %726 = vdwg.mxu0
    %727 = vmatprep.subr.bf16.mxu0 0
    %728 = vmatpush1.bf16.msra.mxu0 %v566
    %729 = vmatprep.subr.bf16.mxu0 0
    %730 = vmatpush1.bf16.msra.mxu0 %v565
    %731 = vmatprep.subr.bf16.mxu0 0
    %732 = vmatpush1.bf16.msra.mxu0 %v564
    %733 = vmatprep.subr.bf16.mxu0 0
    %734 = vmatpush1.bf16.msra.mxu0 %v563
    %735 = vmatprep.subr.bf16.mxu0 0
    %736 = vmatpush1.bf16.msra.mxu0 %v562
    %737 = vmatprep.subr.bf16.mxu0 0
    %738 = vmatpush1.bf16.msra.mxu0 %v561
    %739 = vmatprep.subr.bf16.mxu0 0
    %740 = vmatpush1.bf16.msra.mxu0 %v560
    %741 = vmatprep.subr.bf16.mxu0 0
    %742 = vmatpush1.bf16.msra.mxu0 %v559
    %743 = vmatprep.subr.bf16.mxu0 0
    %744 = vmatpush2.bf16.msra.mxu0 %v574
    %745 = vmatprep.subr.bf16.mxu0 0
    %746 = vmatpush2.bf16.msra.mxu0 %v573
    %747 = vmatprep.subr.bf16.mxu0 0
    %748 = vmatpush2.bf16.msra.mxu0 %v572
    %749 = vmatprep.subr.bf16.mxu0 0
    %750 = vmatpush2.bf16.msra.mxu0 %v571
    %751 = vmatprep.subr.bf16.mxu0 0
    %752 = vmatpush2.bf16.msra.mxu0 %v570
    %753 = vmatprep.subr.bf16.mxu0 0
    %754 = vmatpush2.bf16.msra.mxu0 %v569
    %755 = vmatprep.subr.bf16.mxu0 0
    %756 = vmatpush2.bf16.msra.mxu0 %v568
    %757 = vmatprep.subr.bf16.mxu0 0
    %758 = vmatpush2.bf16.msra.mxu0 %v567
    %759 = vmatprep.mubr.bf16.mxu0 %v230
    %760 = vmatmul.mubr.bf16.gmra.mxu0 %v228
    %v761 = vpop.f32.mrf.mxu0
    %v762 = vadd.f32 %v722, %v761
    %v763 = vpop.f32.mrf.mxu0
    %v764 = vpop.f32.mrf.mxu0
    %v765 = vpop.f32.mrf.mxu0
    %766 = vdwg.mxu0
    %767 = vmatprep.subr.bf16.mxu0 0
    %768 = vmatpush1.bf16.msra.mxu0 %v582
    %769 = vmatprep.subr.bf16.mxu0 0
    %770 = vmatpush1.bf16.msra.mxu0 %v581
    %771 = vmatprep.subr.bf16.mxu0 0
    %772 = vmatpush1.bf16.msra.mxu0 %v580
    %773 = vmatprep.subr.bf16.mxu0 0
    %774 = vmatpush1.bf16.msra.mxu0 %v579
    %775 = vmatprep.subr.bf16.mxu0 0
    %776 = vmatpush1.bf16.msra.mxu0 %v578
    %777 = vmatprep.subr.bf16.mxu0 0
    %778 = vmatpush1.bf16.msra.mxu0 %v577
    %779 = vmatprep.subr.bf16.mxu0 0
    %780 = vmatpush1.bf16.msra.mxu0 %v576
    %781 = vmatprep.subr.bf16.mxu0 0
    %782 = vmatpush1.bf16.msra.mxu0 %v575
    %783 = vmatprep.subr.bf16.mxu0 0
    %784 = vmatpush2.bf16.msra.mxu0 %v590
    %785 = vmatprep.subr.bf16.mxu0 0
    %786 = vmatpush2.bf16.msra.mxu0 %v589
    %787 = vmatprep.subr.bf16.mxu0 0
    %788 = vmatpush2.bf16.msra.mxu0 %v588
    %789 = vmatprep.subr.bf16.mxu0 0
    %790 = vmatpush2.bf16.msra.mxu0 %v587
    %791 = vmatprep.subr.bf16.mxu0 0
    %792 = vmatpush2.bf16.msra.mxu0 %v586
    %793 = vmatprep.subr.bf16.mxu0 0
    %794 = vmatpush2.bf16.msra.mxu0 %v585
    %795 = vmatprep.subr.bf16.mxu0 0
    %796 = vmatpush2.bf16.msra.mxu0 %v584
    %797 = vmatprep.subr.bf16.mxu0 0
    %798 = vmatpush2.bf16.msra.mxu0 %v583
    %799 = vmatprep.mubr.bf16.mxu0 %v227
    %800 = vmatmul.mubr.bf16.gmra.mxu0 %v213
    %v801 = vpop.f32.mrf.mxu0
    %v802 = vadd.f32 %v762, %v801
    %v803 = vpop.f32.mrf.mxu0
    %v804 = vpop.f32.mrf.mxu0
    %v805 = vpop.f32.mrf.mxu0
    %806 = vdwg.mxu0
    %807 = vmatprep.subr.bf16.mxu0 0
    %808 = vmatpush1.bf16.msra.mxu0 %v598
    %809 = vmatprep.subr.bf16.mxu0 0
    %810 = vmatpush1.bf16.msra.mxu0 %v597
    %811 = vmatprep.subr.bf16.mxu0 0
    %812 = vmatpush1.bf16.msra.mxu0 %v596
    %813 = vmatprep.subr.bf16.mxu0 0
    %814 = vmatpush1.bf16.msra.mxu0 %v595
    %815 = vmatprep.subr.bf16.mxu0 0
    %816 = vmatpush1.bf16.msra.mxu0 %v594
    %817 = vmatprep.subr.bf16.mxu0 0
    %818 = vmatpush1.bf16.msra.mxu0 %v593
    %819 = vmatprep.subr.bf16.mxu0 0
    %820 = vmatpush1.bf16.msra.mxu0 %v592
    %821 = vmatprep.subr.bf16.mxu0 0
    %822 = vmatpush1.bf16.msra.mxu0 %v591
    %823 = vmatprep.subr.bf16.mxu0 0
    %824 = vmatpush2.bf16.msra.mxu0 %v606
    %825 = vmatprep.subr.bf16.mxu0 0
    %826 = vmatpush2.bf16.msra.mxu0 %v605
    %827 = vmatprep.subr.bf16.mxu0 0
    %828 = vmatpush2.bf16.msra.mxu0 %v604
    %829 = vmatprep.subr.bf16.mxu0 0
    %830 = vmatpush2.bf16.msra.mxu0 %v603
    %831 = vmatprep.subr.bf16.mxu0 0
    %832 = vmatpush2.bf16.msra.mxu0 %v602
    %833 = vmatprep.subr.bf16.mxu0 0
    %834 = vmatpush2.bf16.msra.mxu0 %v601
    %835 = vmatprep.subr.bf16.mxu0 0
    %836 = vmatpush2.bf16.msra.mxu0 %v600
    %837 = vmatprep.subr.bf16.mxu0 0
    %838 = vmatpush2.bf16.msra.mxu0 %v599
    %839 = vmatprep.mubr.bf16.mxu0 %v231
    %840 = vmatmul.mubr.bf16.gmra.mxu0 %v229
    %v841 = vpop.f32.mrf.mxu0
    %v842 = vadd.f32 %v802, %v841
    %v843 = vpop.f32.mrf.mxu0
    %v844 = vpop.f32.mrf.mxu0
    %v845 = vpop.f32.mrf.mxu0
    %846 = vdwg.mxu0
    %847 = vmatprep.subr.bf16.mxu0 0
    %848 = vmatpush1.bf16.msra.mxu0 %v614
    %849 = vmatprep.subr.bf16.mxu0 0
    %850 = vmatpush1.bf16.msra.mxu0 %v613
    %851 = vmatprep.subr.bf16.mxu0 0
    %852 = vmatpush1.bf16.msra.mxu0 %v612
    %853 = vmatprep.subr.bf16.mxu0 0
    %854 = vmatpush1.bf16.msra.mxu0 %v611
    %855 = vmatprep.subr.bf16.mxu0 0
    %856 = vmatpush1.bf16.msra.mxu0 %v610
    %857 = vmatprep.subr.bf16.mxu0 0
    %858 = vmatpush1.bf16.msra.mxu0 %v609
    %859 = vmatprep.subr.bf16.mxu0 0
    %860 = vmatpush1.bf16.msra.mxu0 %v608
    %861 = vmatprep.subr.bf16.mxu0 0
    %862 = vmatpush1.bf16.msra.mxu0 %v607
    %863 = vmatprep.subr.bf16.mxu0 0
    %864 = vmatpush2.bf16.msra.mxu0 0
    %865 = vmatprep.subr.bf16.mxu0 0
    %866 = vmatpush2.bf16.msra.mxu0 0
    %867 = vmatprep.subr.bf16.mxu0 0
    %868 = vmatpush2.bf16.msra.mxu0 0
    %869 = vmatprep.subr.bf16.mxu0 0
    %870 = vmatpush2.bf16.msra.mxu0 0
    %871 = vmatprep.subr.bf16.mxu0 0
    %872 = vmatpush2.bf16.msra.mxu0 0
    %873 = vmatprep.subr.bf16.mxu0 0
    %874 = vmatpush2.bf16.msra.mxu0 0
    %875 = vmatprep.subr.bf16.mxu0 0
    %876 = vmatpush2.bf16.msra.mxu0 0
    %877 = vmatprep.subr.bf16.mxu0 0
    %878 = vmatpush2.bf16.msra.mxu0 0
    %879 = vmatprep.mubr.bf16.mxu0 0
    %880 = vmatmul.mubr.bf16.gmra.mxu0 %v245
    %v881 = vpop.f32.mrf.mxu0
    %v882 = vadd.f32 %v842, %v881
    %v883 = vpop.f32.mrf.mxu0
    %v884 = vpop.f32.mrf.mxu0
    %v885 = vpop.f32.mrf.mxu0
    %886 = vdwg.mxu0
    %v887 = vmax.f32 %v882, 0.0
    %v888 = vpack.c.bf16 %v887, %v887
    %v889 = vld [vmem:[%s3] sm:$0xff]
    %v890 = vld [vmem:[%s3 + $0x8] sm:$0xff]
    %v891 = vld [vmem:[%s3 + $0x10] sm:$0xff]
    %v892 = vld [vmem:[%s3 + $0x18] sm:$0xff]
    %v893 = vld [vmem:[%s3 + $0x20] sm:$0xff]
    %v894 = vld [vmem:[%s3 + $0x28] sm:$0xff]
    %v895 = vld [vmem:[%s3 + $0x30] sm:$0xff]
    %v896 = vld [vmem:[%s3 + $0x38] sm:$0xff]
    %v897 = vld [vmem:[%s3 + $0x40] sm:$0xff]
    %v898 = vld [vmem:[%s3 + $0x48] sm:$0xff]
    %v899 = vld [vmem:[%s3 + $0x50] sm:$0xff]
    %v900 = vld [vmem:[%s3 + $0x58] sm:$0xff]
    %v901 = vld [vmem:[%s3 + $0x60] sm:$0xff]
    %v902 = vld [vmem:[%s3 + $0x68] sm:$0xff]
    %v903 = vld [vmem:[%s3 + $0x70] sm:$0xff]
    %v904 = vld [vmem:[%s3 + $0x78] sm:$0xff]
    %v905 = vld [vmem:[%s3 + $0x80] sm:$0xff]
    %v906 = vld [vmem:[%s3 + $0x88] sm:$0xff]
    %v907 = vld [vmem:[%s3 + $0x90] sm:$0xff]
    %v908 = vld [vmem:[%s3 + $0x98] sm:$0xff]
    %v909 = vld [vmem:[%s3 + $0xa0] sm:$0xff]
    %v910 = vld [vmem:[%s3 + $0xa8] sm:$0xff]
    %v911 = vld [vmem:[%s3 + $0xb0] sm:$0xff]
    %v912 = vld [vmem:[%s3 + $0xb8] sm:$0xff]
    %v913 = vld [vmem:[%s3 + $0xc0] sm:$0xff]
    %v914 = vld [vmem:[%s3 + $0xc8] sm:$0xff]
    %v915 = vld [vmem:[%s3 + $0xd0] sm:$0xff]
    %v916 = vld [vmem:[%s3 + $0xd8] sm:$0xff]
    %v917 = vld [vmem:[%s3 + $0xe0] sm:$0xff]
    %v918 = vld [vmem:[%s3 + $0xe8] sm:$0xff]
    %v919 = vld [vmem:[%s3 + $0xf0] sm:$0xff]
    %v920 = vld [vmem:[%s3 + $0xf8] sm:$0xff]
    %s921 = scalar_lea.vmem %s0, 9
    %v922 = vld [vmem:[%s921] sm:$0xff]
    %v923 = vld [vmem:[%s921 + $0x8] sm:$0x1]
    %v926 = vcombine.high %v922, %v922
    %v928 = vunpack.c.l.s4 1966171168
    %v929 = vunpack.c.0.s8 %v928
    %v930 = vlaneseq
    %v931 = vshrl.u32 %v930, 7
    %v932 = vsub.s32 %v929, %v931
    %v933 = vrot.slane %v922, %v932
    %v935 = vunpack.c.l.s4 1966171168
    %v936 = vunpack.c.0.s8 %v935
    %v937 = vlaneseq
    %v938 = vshrl.u32 %v937, 7
    %v939 = vsub.s32 %v936, %v938
    %v940 = vrot.slane %v926, %v939
    %v941 = vcombine.high %v933, %v933
    %v942 = vcombine.high %v940, %v940
    %v944 = vunpack.c.l.s4 1966171168
    %v945 = vunpack.c.0.s8 %v944
    %v946 = vlaneseq
    %v947 = vshrl.u32 %v946, 7
    %v948 = vsub.s32 %v945, %v947
    %v949 = vrot.slane %v933, %v948
    %v951 = vunpack.c.l.s4 1966171168
    %v952 = vunpack.c.0.s8 %v951
    %v953 = vlaneseq
    %v954 = vshrl.u32 %v953, 7
    %v955 = vsub.s32 %v952, %v954
    %v956 = vrot.slane %v940, %v955
    %v958 = vunpack.c.l.s4 1966171168
    %v959 = vunpack.c.0.s8 %v958
    %v960 = vlaneseq
    %v961 = vshrl.u32 %v960, 7
    %v962 = vsub.s32 %v959, %v961
    %v963 = vrot.slane %v941, %v962
    %v965 = vunpack.c.l.s4 1966171168
    %v966 = vunpack.c.0.s8 %v965
    %v967 = vlaneseq
    %v968 = vshrl.u32 %v967, 7
    %v969 = vsub.s32 %v966, %v968
    %v970 = vrot.slane %v942, %v969
    %v971 = vcombine.high %v949, %v949
    %v972 = vcombine.high %v956, %v956
    %v973 = vcombine.high %v963, %v963
    %v974 = vcombine.high %v970, %v970
    %v976 = vunpack.c.l.s4 1966171168
    %v977 = vunpack.c.0.s8 %v976
    %v978 = vlaneseq
    %v979 = vshrl.u32 %v978, 7
    %v980 = vsub.s32 %v977, %v979
    %v981 = vrot.slane %v923, %v980
    %v983 = vunpack.c.l.s4 1966171168
    %v984 = vunpack.c.0.s8 %v983
    %v985 = vlaneseq
    %v986 = vshrl.u32 %v985, 7
    %v987 = vsub.s32 %v984, %v986
    %v988 = vrot.slane %v981, %v987
    %998 = vmatprep.subr.bf16.mxu0 0
    %999 = vmatpush1.bf16.msra.mxu0 %v550
    %1000 = vmatprep.subr.bf16.mxu0 0
    %1001 = vmatpush1.bf16.msra.mxu0 %v549
    %1002 = vmatprep.subr.bf16.mxu0 0
    %1003 = vmatpush1.bf16.msra.mxu0 %v548
    %1004 = vmatprep.subr.bf16.mxu0 0
    %1005 = vmatpush1.bf16.msra.mxu0 %v547
    %1006 = vmatprep.subr.bf16.mxu0 0
    %1007 = vmatpush1.bf16.msra.mxu0 %v546
    %1008 = vmatprep.subr.bf16.mxu0 0
    %1009 = vmatpush1.bf16.msra.mxu0 %v545
    %1010 = vmatprep.subr.bf16.mxu0 0
    %1011 = vmatpush1.bf16.msra.mxu0 %v544
    %1012 = vmatprep.subr.bf16.mxu0 0
    %1013 = vmatpush1.bf16.msra.mxu0 %v543
    %1014 = vmatprep.subr.bf16.mxu0 0
    %1015 = vmatpush2.bf16.msra.mxu0 %v558
    %1016 = vmatprep.subr.bf16.mxu0 0
    %1017 = vmatpush2.bf16.msra.mxu0 %v557
    %1018 = vmatprep.subr.bf16.mxu0 0
    %1019 = vmatpush2.bf16.msra.mxu0 %v556
    %1020 = vmatprep.subr.bf16.mxu0 0
    %1021 = vmatpush2.bf16.msra.mxu0 %v555
    %1022 = vmatprep.subr.bf16.mxu0 0
    %1023 = vmatpush2.bf16.msra.mxu0 %v554
    %1024 = vmatprep.subr.bf16.mxu0 0
    %1025 = vmatpush2.bf16.msra.mxu0 %v553
    %1026 = vmatprep.subr.bf16.mxu0 0
    %1027 = vmatpush2.bf16.msra.mxu0 %v552
    %1028 = vmatprep.subr.bf16.mxu0 0
    %1029 = vmatpush2.bf16.msra.mxu0 %v551
    %1030 = vmatprep.mubr.bf16.mxu0 %v963
    %1031 = vmatmul.mubr.bf16.gmra.mxu0 %v949
    %v1032 = vpop.f32.mrf.mxu0
    %v1033 = vadd.f32 %v179, %v1032
    %v1034 = vpop.f32.mrf.mxu0
    %v1035 = vpop.f32.mrf.mxu0
    %v1036 = vpop.f32.mrf.mxu0
    %1037 = vdwg.mxu0
    %1038 = vmatprep.subr.bf16.mxu0 0
    %1039 = vmatpush1.bf16.msra.mxu0 %v566
    %1040 = vmatprep.subr.bf16.mxu0 0
    %1041 = vmatpush1.bf16.msra.mxu0 %v565
    %1042 = vmatprep.subr.bf16.mxu0 0
    %1043 = vmatpush1.bf16.msra.mxu0 %v564
    %1044 = vmatprep.subr.bf16.mxu0 0
    %1045 = vmatpush1.bf16.msra.mxu0 %v563
    %1046 = vmatprep.subr.bf16.mxu0 0
    %1047 = vmatpush1.bf16.msra.mxu0 %v562
    %1048 = vmatprep.subr.bf16.mxu0 0
    %1049 = vmatpush1.bf16.msra.mxu0 %v561
    %1050 = vmatprep.subr.bf16.mxu0 0
    %1051 = vmatpush1.bf16.msra.mxu0 %v560
    %1052 = vmatprep.subr.bf16.mxu0 0
    %1053 = vmatpush1.bf16.msra.mxu0 %v559
    %1054 = vmatprep.subr.bf16.mxu0 0
    %1055 = vmatpush2.bf16.msra.mxu0 %v574
    %1056 = vmatprep.subr.bf16.mxu0 0
    %1057 = vmatpush2.bf16.msra.mxu0 %v573
    %1058 = vmatprep.subr.bf16.mxu0 0
    %1059 = vmatpush2.bf16.msra.mxu0 %v572
    %1060 = vmatprep.subr.bf16.mxu0 0
    %1061 = vmatpush2.bf16.msra.mxu0 %v571
    %1062 = vmatprep.subr.bf16.mxu0 0
    %1063 = vmatpush2.bf16.msra.mxu0 %v570
    %1064 = vmatprep.subr.bf16.mxu0 0
    %1065 = vmatpush2.bf16.msra.mxu0 %v569
    %1066 = vmatprep.subr.bf16.mxu0 0
    %1067 = vmatpush2.bf16.msra.mxu0 %v568
    %1068 = vmatprep.subr.bf16.mxu0 0
    %1069 = vmatpush2.bf16.msra.mxu0 %v567
    %1070 = vmatprep.mubr.bf16.mxu0 %v973
    %1071 = vmatmul.mubr.bf16.gmra.mxu0 %v971
    %v1072 = vpop.f32.mrf.mxu0
    %v1073 = vadd.f32 %v1033, %v1072
    %v1074 = vpop.f32.mrf.mxu0
    %v1075 = vpop.f32.mrf.mxu0
    %v1076 = vpop.f32.mrf.mxu0
    %1077 = vdwg.mxu0
    %1078 = vmatprep.subr.bf16.mxu0 0
    %1079 = vmatpush1.bf16.msra.mxu0 %v582
    %1080 = vmatprep.subr.bf16.mxu0 0
    %1081 = vmatpush1.bf16.msra.mxu0 %v581
    %1082 = vmatprep.subr.bf16.mxu0 0
    %1083 = vmatpush1.bf16.msra.mxu0 %v580
    %1084 = vmatprep.subr.bf16.mxu0 0
    %1085 = vmatpush1.bf16.msra.mxu0 %v579
    %1086 = vmatprep.subr.bf16.mxu0 0
    %1087 = vmatpush1.bf16.msra.mxu0 %v578
    %1088 = vmatprep.subr.bf16.mxu0 0
    %1089 = vmatpush1.bf16.msra.mxu0 %v577
    %1090 = vmatprep.subr.bf16.mxu0 0
    %1091 = vmatpush1.bf16.msra.mxu0 %v576
    %1092 = vmatprep.subr.bf16.mxu0 0
    %1093 = vmatpush1.bf16.msra.mxu0 %v575
    %1094 = vmatprep.subr.bf16.mxu0 0
    %1095 = vmatpush2.bf16.msra.mxu0 %v590
    %1096 = vmatprep.subr.bf16.mxu0 0
    %1097 = vmatpush2.bf16.msra.mxu0 %v589
    %1098 = vmatprep.subr.bf16.mxu0 0
    %1099 = vmatpush2.bf16.msra.mxu0 %v588
    %1100 = vmatprep.subr.bf16.mxu0 0
    %1101 = vmatpush2.bf16.msra.mxu0 %v587
    %1102 = vmatprep.subr.bf16.mxu0 0
    %1103 = vmatpush2.bf16.msra.mxu0 %v586
    %1104 = vmatprep.subr.bf16.mxu0 0
    %1105 = vmatpush2.bf16.msra.mxu0 %v585
    %1106 = vmatprep.subr.bf16.mxu0 0
    %1107 = vmatpush2.bf16.msra.mxu0 %v584
    %1108 = vmatprep.subr.bf16.mxu0 0
    %1109 = vmatpush2.bf16.msra.mxu0 %v583
    %1110 = vmatprep.mubr.bf16.mxu0 %v970
    %1111 = vmatmul.mubr.bf16.gmra.mxu0 %v956
    %v1112 = vpop.f32.mrf.mxu0
    %v1113 = vadd.f32 %v1073, %v1112
    %v1114 = vpop.f32.mrf.mxu0
    %v1115 = vpop.f32.mrf.mxu0
    %v1116 = vpop.f32.mrf.mxu0
    %1117 = vdwg.mxu0
    %1118 = vmatprep.subr.bf16.mxu0 0
    %1119 = vmatpush1.bf16.msra.mxu0 %v598
    %1120 = vmatprep.subr.bf16.mxu0 0
    %1121 = vmatpush1.bf16.msra.mxu0 %v597
    %1122 = vmatprep.subr.bf16.mxu0 0
    %1123 = vmatpush1.bf16.msra.mxu0 %v596
    %1124 = vmatprep.subr.bf16.mxu0 0
    %1125 = vmatpush1.bf16.msra.mxu0 %v595
    %1126 = vmatprep.subr.bf16.mxu0 0
    %1127 = vmatpush1.bf16.msra.mxu0 %v594
    %1128 = vmatprep.subr.bf16.mxu0 0
    %1129 = vmatpush1.bf16.msra.mxu0 %v593
    %1130 = vmatprep.subr.bf16.mxu0 0
    %1131 = vmatpush1.bf16.msra.mxu0 %v592
    %1132 = vmatprep.subr.bf16.mxu0 0
    %1133 = vmatpush1.bf16.msra.mxu0 %v591
    %1134 = vmatprep.subr.bf16.mxu0 0
    %1135 = vmatpush2.bf16.msra.mxu0 %v606
    %1136 = vmatprep.subr.bf16.mxu0 0
    %1137 = vmatpush2.bf16.msra.mxu0 %v605
    %1138 = vmatprep.subr.bf16.mxu0 0
    %1139 = vmatpush2.bf16.msra.mxu0 %v604
    %1140 = vmatprep.subr.bf16.mxu0 0
    %1141 = vmatpush2.bf16.msra.mxu0 %v603
    %1142 = vmatprep.subr.bf16.mxu0 0
    %1143 = vmatpush2.bf16.msra.mxu0 %v602
    %1144 = vmatprep.subr.bf16.mxu0 0
    %1145 = vmatpush2.bf16.msra.mxu0 %v601
    %1146 = vmatprep.subr.bf16.mxu0 0
    %1147 = vmatpush2.bf16.msra.mxu0 %v600
    %1148 = vmatprep.subr.bf16.mxu0 0
    %1149 = vmatpush2.bf16.msra.mxu0 %v599
    %1150 = vmatprep.mubr.bf16.mxu0 %v974
    %1151 = vmatmul.mubr.bf16.gmra.mxu0 %v972
    %v1152 = vpop.f32.mrf.mxu0
    %v1153 = vadd.f32 %v1113, %v1152
    %v1154 = vpop.f32.mrf.mxu0
    %v1155 = vpop.f32.mrf.mxu0
    %v1156 = vpop.f32.mrf.mxu0
    %1157 = vdwg.mxu0
    %1158 = vmatprep.subr.bf16.mxu0 0
    %1159 = vmatpush1.bf16.msra.mxu0 %v614
    %1160 = vmatprep.subr.bf16.mxu0 0
    %1161 = vmatpush1.bf16.msra.mxu0 %v613
    %1162 = vmatprep.subr.bf16.mxu0 0
    %1163 = vmatpush1.bf16.msra.mxu0 %v612
    %1164 = vmatprep.subr.bf16.mxu0 0
    %1165 = vmatpush1.bf16.msra.mxu0 %v611
    %1166 = vmatprep.subr.bf16.mxu0 0
    %1167 = vmatpush1.bf16.msra.mxu0 %v610
    %1168 = vmatprep.subr.bf16.mxu0 0
    %1169 = vmatpush1.bf16.msra.mxu0 %v609
    %1170 = vmatprep.subr.bf16.mxu0 0
    %1171 = vmatpush1.bf16.msra.mxu0 %v608
    %1172 = vmatprep.subr.bf16.mxu0 0
    %1173 = vmatpush1.bf16.msra.mxu0 %v607
    %1174 = vmatprep.subr.bf16.mxu0 0
    %1175 = vmatpush2.bf16.msra.mxu0 0
    %1176 = vmatprep.subr.bf16.mxu0 0
    %1177 = vmatpush2.bf16.msra.mxu0 0
    %1178 = vmatprep.subr.bf16.mxu0 0
    %1179 = vmatpush2.bf16.msra.mxu0 0
    %1180 = vmatprep.subr.bf16.mxu0 0
    %1181 = vmatpush2.bf16.msra.mxu0 0
    %1182 = vmatprep.subr.bf16.mxu0 0
    %1183 = vmatpush2.bf16.msra.mxu0 0
    %1184 = vmatprep.subr.bf16.mxu0 0
    %1185 = vmatpush2.bf16.msra.mxu0 0
    %1186 = vmatprep.subr.bf16.mxu0 0
    %1187 = vmatpush2.bf16.msra.mxu0 0
    %1188 = vmatprep.subr.bf16.mxu0 0
    %1189 = vmatpush2.bf16.msra.mxu0 0
    %1190 = vmatprep.mubr.bf16.mxu0 0
    %1191 = vmatmul.mubr.bf16.gmra.mxu0 %v988
    %v1192 = vpop.f32.mrf.mxu0
    %v1193 = vadd.f32 %v1153, %v1192
    %v1194 = vpop.f32.mrf.mxu0
    %v1195 = vpop.f32.mrf.mxu0
    %v1196 = vpop.f32.mrf.mxu0
    %1197 = vdwg.mxu0
    %v1198 = vmax.f32 %v1193, 0.0
    %v1199 = vpack.c.bf16 %v1198, %v1198
    %s1200 = scalar_lea.vmem %s3, 256
    %v1201 = vld [vmem:[%s1200] sm:$0xff]
    %v1202 = vld [vmem:[%s1200 + $0x8] sm:$0xff]
    %v1203 = vld [vmem:[%s1200 + $0x10] sm:$0xff]
    %v1204 = vld [vmem:[%s1200 + $0x18] sm:$0xff]
    %v1205 = vld [vmem:[%s1200 + $0x20] sm:$0xff]
    %v1206 = vld [vmem:[%s1200 + $0x28] sm:$0xff]
    %v1207 = vld [vmem:[%s1200 + $0x30] sm:$0xff]
    %v1208 = vld [vmem:[%s1200 + $0x38] sm:$0xff]
    %v1209 = vld [vmem:[%s1200 + $0x40] sm:$0xff]
    %v1210 = vld [vmem:[%s1200 + $0x48] sm:$0xff]
    %v1211 = vld [vmem:[%s1200 + $0x50] sm:$0xff]
    %v1212 = vld [vmem:[%s1200 + $0x58] sm:$0xff]
    %v1213 = vld [vmem:[%s1200 + $0x60] sm:$0xff]
    %v1214 = vld [vmem:[%s1200 + $0x68] sm:$0xff]
    %v1215 = vld [vmem:[%s1200 + $0x70] sm:$0xff]
    %v1216 = vld [vmem:[%s1200 + $0x78] sm:$0xff]
    %v1217 = vld [vmem:[%s1200 + $0x80] sm:$0xff]
    %v1218 = vld [vmem:[%s1200 + $0x88] sm:$0xff]
    %v1219 = vld [vmem:[%s1200 + $0x90] sm:$0xff]
    %v1220 = vld [vmem:[%s1200 + $0x98] sm:$0xff]
    %v1221 = vld [vmem:[%s1200 + $0xa0] sm:$0xff]
    %v1222 = vld [vmem:[%s1200 + $0xa8] sm:$0xff]
    %v1223 = vld [vmem:[%s1200 + $0xb0] sm:$0xff]
    %v1224 = vld [vmem:[%s1200 + $0xb8] sm:$0xff]
    %v1225 = vld [vmem:[%s1200 + $0xc0] sm:$0xff]
    %v1226 = vld [vmem:[%s1200 + $0xc8] sm:$0xff]
    %v1227 = vld [vmem:[%s1200 + $0xd0] sm:$0xff]
    %v1228 = vld [vmem:[%s1200 + $0xd8] sm:$0xff]
    %v1229 = vld [vmem:[%s1200 + $0xe0] sm:$0xff]
    %v1230 = vld [vmem:[%s1200 + $0xe8] sm:$0xff]
    %v1231 = vld [vmem:[%s1200 + $0xf0] sm:$0xff]
    %v1232 = vld [vmem:[%s1200 + $0xf8] sm:$0xff]
    %v1265 = vunpack.c.l.b16 %v1201
    %v1266 = vunpack.c.h.b16 %v1201
    %v1267 = vunpack.c.l.b16 %v1202
    %v1268 = vunpack.c.h.b16 %v1202
    %v1269 = vunpack.c.l.b16 %v1203
    %v1270 = vunpack.c.h.b16 %v1203
    %v1271 = vunpack.c.l.b16 %v1204
    %v1272 = vunpack.c.h.b16 %v1204
    %v1273 = vunpack.c.l.b16 %v1205
    %v1274 = vunpack.c.h.b16 %v1205
    %v1275 = vunpack.c.l.b16 %v1206
    %v1276 = vunpack.c.h.b16 %v1206
    %v1277 = vunpack.c.l.b16 %v1207
    %v1278 = vunpack.c.h.b16 %v1207
    %v1279 = vunpack.c.l.b16 %v1208
    %v1280 = vunpack.c.h.b16 %v1208
    %v1281 = vunpack.c.l.b16 %v1209
    %v1282 = vunpack.c.h.b16 %v1209
    %v1283 = vunpack.c.l.b16 %v1210
    %v1284 = vunpack.c.h.b16 %v1210
    %v1285 = vunpack.c.l.b16 %v1211
    %v1286 = vunpack.c.h.b16 %v1211
    %v1287 = vunpack.c.l.b16 %v1212
    %v1288 = vunpack.c.h.b16 %v1212
    %v1289 = vunpack.c.l.b16 %v1213
    %v1290 = vunpack.c.h.b16 %v1213
    %v1291 = vunpack.c.l.b16 %v1214
    %v1292 = vunpack.c.h.b16 %v1214
    %v1293 = vunpack.c.l.b16 %v1215
    %v1294 = vunpack.c.h.b16 %v1215
    %v1295 = vunpack.c.l.b16 %v1216
    %v1296 = vunpack.c.h.b16 %v1216
    %v1297 = vunpack.c.l.b16 %v1217
    %v1298 = vunpack.c.h.b16 %v1217
    %v1299 = vunpack.c.l.b16 %v1218
    %v1300 = vunpack.c.h.b16 %v1218
    %v1301 = vunpack.c.l.b16 %v1219
    %v1302 = vunpack.c.h.b16 %v1219
    %v1303 = vunpack.c.l.b16 %v1220
    %v1304 = vunpack.c.h.b16 %v1220
    %v1305 = vunpack.c.l.b16 %v1221
    %v1306 = vunpack.c.h.b16 %v1221
    %v1307 = vunpack.c.l.b16 %v1222
    %v1308 = vunpack.c.h.b16 %v1222
    %v1309 = vunpack.c.l.b16 %v1223
    %v1310 = vunpack.c.h.b16 %v1223
    %v1311 = vunpack.c.l.b16 %v1224
    %v1312 = vunpack.c.h.b16 %v1224
    %v1313 = vunpack.c.l.b16 %v1225
    %v1314 = vunpack.c.h.b16 %v1225
    %v1315 = vunpack.c.l.b16 %v1226
    %v1316 = vunpack.c.h.b16 %v1226
    %v1317 = vunpack.c.l.b16 %v1227
    %v1318 = vunpack.c.h.b16 %v1227
    %v1319 = vunpack.c.l.b16 %v1228
    %v1320 = vunpack.c.h.b16 %v1228
    %v1321 = vunpack.c.l.b16 %v1229
    %v1322 = vunpack.c.h.b16 %v1229
    %v1323 = vunpack.c.l.b16 %v1230
    %v1324 = vunpack.c.h.b16 %v1230
    %v1325 = vunpack.c.l.b16 %v1231
    %v1326 = vunpack.c.h.b16 %v1231
    %v1327 = vunpack.c.l.b16 %v1232
    %v1328 = vunpack.c.h.b16 %v1232
    %v1329 = vpack.c.b16 %v1269, %v1265
    %v1330 = vpack.c.b16 %v1270, %v1266
    %v1331 = vpack.c.b16 %v1271, %v1267
    %v1332 = vpack.c.b16 %v1272, %v1268
    %v1333 = vpack.c.b16 %v1277, %v1273
    %v1334 = vpack.c.b16 %v1278, %v1274
    %v1335 = vpack.c.b16 %v1279, %v1275
    %v1336 = vpack.c.b16 %v1280, %v1276
    %v1337 = vpack.c.b16 %v1285, %v1281
    %v1338 = vpack.c.b16 %v1286, %v1282
    %v1339 = vpack.c.b16 %v1287, %v1283
    %v1340 = vpack.c.b16 %v1288, %v1284
    %v1341 = vpack.c.b16 %v1293, %v1289
    %v1342 = vpack.c.b16 %v1294, %v1290
    %v1343 = vpack.c.b16 %v1295, %v1291
    %v1344 = vpack.c.b16 %v1296, %v1292
    %v1345 = vpack.c.b16 %v1301, %v1297
    %v1346 = vpack.c.b16 %v1302, %v1298
    %v1347 = vpack.c.b16 %v1303, %v1299
    %v1348 = vpack.c.b16 %v1304, %v1300
    %v1349 = vpack.c.b16 %v1309, %v1305
    %v1350 = vpack.c.b16 %v1310, %v1306
    %v1351 = vpack.c.b16 %v1311, %v1307
    %v1352 = vpack.c.b16 %v1312, %v1308
    %v1353 = vpack.c.b16 %v1317, %v1313
    %v1354 = vpack.c.b16 %v1318, %v1314
    %v1355 = vpack.c.b16 %v1319, %v1315
    %v1356 = vpack.c.b16 %v1320, %v1316
    %v1357 = vpack.c.b16 %v1325, %v1321
    %v1358 = vpack.c.b16 %v1326, %v1322
    %v1359 = vpack.c.b16 %v1327, %v1323
    %v1360 = vpack.c.b16 %v1328, %v1324
    %1393 = vmatprep.subr.bf16.mxu0 %v1358
    %1394 = vmatpush1.bf16.msra.mxu0 %v1357
    %1395 = vmatprep.subr.bf16.mxu0 %v1354
    %1396 = vmatpush1.bf16.msra.mxu0 %v1353
    %1397 = vmatprep.subr.bf16.mxu0 %v1350
    %1398 = vmatpush1.bf16.msra.mxu0 %v1349
    %1399 = vmatprep.subr.bf16.mxu0 %v1346
    %1400 = vmatpush1.bf16.msra.mxu0 %v1345
    %1401 = vmatprep.subr.bf16.mxu0 %v1342
    %1402 = vmatpush1.bf16.msra.mxu0 %v1341
    %1403 = vmatprep.subr.bf16.mxu0 %v1338
    %1404 = vmatpush1.bf16.msra.mxu0 %v1337
    %1405 = vmatprep.subr.bf16.mxu0 %v1334
    %1406 = vmatpush1.bf16.msra.mxu0 %v1333
    %1407 = vmatprep.subr.bf16.mxu0 %v1330
    %1408 = vmatpush1.bf16.msra.mxu0 %v1329
    %1409 = vmatprep.subr.bf16.mxu0 0
    %1410 = vmatpush2.bf16.msra.mxu0 0
    %1411 = vmatprep.subr.bf16.mxu0 0
    %1412 = vmatpush2.bf16.msra.mxu0 0
    %1413 = vmatprep.subr.bf16.mxu0 0
    %1414 = vmatpush2.bf16.msra.mxu0 0
    %1415 = vmatprep.subr.bf16.mxu0 0
    %1416 = vmatpush2.bf16.msra.mxu0 0
    %1417 = vmatprep.subr.bf16.mxu0 0
    %1418 = vmatpush2.bf16.msra.mxu0 0
    %1419 = vmatprep.subr.bf16.mxu0 0
    %1420 = vmatpush2.bf16.msra.mxu0 0
    %1421 = vmatprep.subr.bf16.mxu0 0
    %1422 = vmatpush2.bf16.msra.mxu0 0
    %1423 = vmatprep.subr.bf16.mxu0 0
    %1424 = vmatpush2.bf16.msra.mxu0 0
    %1425 = vmatprep.mubr.bf16.mxu0 0
    %1426 = vmatmul.mubr.bf16.gmra.mxu0 %v1199
    %v1427 = vpop.f32.mrf.mxu0
    %v1428 = vadd.f32 0.0, %v1427
    %v1429 = vpop.f32.mrf.mxu0
    %v1430 = vadd.f32 0.0, %v1429
    %v1431 = vpop.f32.mrf.mxu0
    %v1432 = vpop.f32.mrf.mxu0
    %1433 = vdwg.mxu0
    %1434 = vmatprep.subr.bf16.mxu0 %v1360
    %1435 = vmatpush1.bf16.msra.mxu0 %v1359
    %1436 = vmatprep.subr.bf16.mxu0 %v1356
    %1437 = vmatpush1.bf16.msra.mxu0 %v1355
    %1438 = vmatprep.subr.bf16.mxu0 %v1352
    %1439 = vmatpush1.bf16.msra.mxu0 %v1351
    %1440 = vmatprep.subr.bf16.mxu0 %v1348
    %1441 = vmatpush1.bf16.msra.mxu0 %v1347
    %1442 = vmatprep.subr.bf16.mxu0 %v1344
    %1443 = vmatpush1.bf16.msra.mxu0 %v1343
    %1444 = vmatprep.subr.bf16.mxu0 %v1340
    %1445 = vmatpush1.bf16.msra.mxu0 %v1339
    %1446 = vmatprep.subr.bf16.mxu0 %v1336
    %1447 = vmatpush1.bf16.msra.mxu0 %v1335
    %1448 = vmatprep.subr.bf16.mxu0 %v1332
    %1449 = vmatpush1.bf16.msra.mxu0 %v1331
    %1450 = vmatprep.subr.bf16.mxu0 0
    %1451 = vmatpush2.bf16.msra.mxu0 0
    %1452 = vmatprep.subr.bf16.mxu0 0
    %1453 = vmatpush2.bf16.msra.mxu0 0
    %1454 = vmatprep.subr.bf16.mxu0 0
    %1455 = vmatpush2.bf16.msra.mxu0 0
    %1456 = vmatprep.subr.bf16.mxu0 0
    %1457 = vmatpush2.bf16.msra.mxu0 0
    %1458 = vmatprep.subr.bf16.mxu0 0
    %1459 = vmatpush2.bf16.msra.mxu0 0
    %1460 = vmatprep.subr.bf16.mxu0 0
    %1461 = vmatpush2.bf16.msra.mxu0 0
    %1462 = vmatprep.subr.bf16.mxu0 0
    %1463 = vmatpush2.bf16.msra.mxu0 0
    %1464 = vmatprep.subr.bf16.mxu0 0
    %1465 = vmatpush2.bf16.msra.mxu0 0
    %1466 = vmatprep.mubr.bf16.mxu0 0
    %1467 = vmatmul.mubr.bf16.gmra.mxu0 %v1199
    %v1468 = vpop.f32.mrf.mxu0
    %v1469 = vadd.f32 0.0, %v1468
    %v1470 = vpop.f32.mrf.mxu0
    %v1471 = vadd.f32 0.0, %v1470
    %v1472 = vpop.f32.mrf.mxu0
    %v1473 = vpop.f32.mrf.mxu0
    %1474 = vdwg.mxu0
    %v1507 = vunpack.c.l.b16 %v889
    %v1508 = vunpack.c.h.b16 %v889
    %v1509 = vunpack.c.l.b16 %v890
    %v1510 = vunpack.c.h.b16 %v890
    %v1511 = vunpack.c.l.b16 %v891
    %v1512 = vunpack.c.h.b16 %v891
    %v1513 = vunpack.c.l.b16 %v892
    %v1514 = vunpack.c.h.b16 %v892
    %v1515 = vunpack.c.l.b16 %v893
    %v1516 = vunpack.c.h.b16 %v893
    %v1517 = vunpack.c.l.b16 %v894
    %v1518 = vunpack.c.h.b16 %v894
    %v1519 = vunpack.c.l.b16 %v895
    %v1520 = vunpack.c.h.b16 %v895
    %v1521 = vunpack.c.l.b16 %v896
    %v1522 = vunpack.c.h.b16 %v896
    %v1523 = vunpack.c.l.b16 %v897
    %v1524 = vunpack.c.h.b16 %v897
    %v1525 = vunpack.c.l.b16 %v898
    %v1526 = vunpack.c.h.b16 %v898
    %v1527 = vunpack.c.l.b16 %v899
    %v1528 = vunpack.c.h.b16 %v899
    %v1529 = vunpack.c.l.b16 %v900
    %v1530 = vunpack.c.h.b16 %v900
    %v1531 = vunpack.c.l.b16 %v901
    %v1532 = vunpack.c.h.b16 %v901
    %v1533 = vunpack.c.l.b16 %v902
    %v1534 = vunpack.c.h.b16 %v902
    %v1535 = vunpack.c.l.b16 %v903
    %v1536 = vunpack.c.h.b16 %v903
    %v1537 = vunpack.c.l.b16 %v904
    %v1538 = vunpack.c.h.b16 %v904
    %v1539 = vunpack.c.l.b16 %v905
    %v1540 = vunpack.c.h.b16 %v905
    %v1541 = vunpack.c.l.b16 %v906
    %v1542 = vunpack.c.h.b16 %v906
    %v1543 = vunpack.c.l.b16 %v907
    %v1544 = vunpack.c.h.b16 %v907
    %v1545 = vunpack.c.l.b16 %v908
    %v1546 = vunpack.c.h.b16 %v908
    %v1547 = vunpack.c.l.b16 %v909
    %v1548 = vunpack.c.h.b16 %v909
    %v1549 = vunpack.c.l.b16 %v910
    %v1550 = vunpack.c.h.b16 %v910
    %v1551 = vunpack.c.l.b16 %v911
    %v1552 = vunpack.c.h.b16 %v911
    %v1553 = vunpack.c.l.b16 %v912
    %v1554 = vunpack.c.h.b16 %v912
    %v1555 = vunpack.c.l.b16 %v913
    %v1556 = vunpack.c.h.b16 %v913
    %v1557 = vunpack.c.l.b16 %v914
    %v1558 = vunpack.c.h.b16 %v914
    %v1559 = vunpack.c.l.b16 %v915
    %v1560 = vunpack.c.h.b16 %v915
    %v1561 = vunpack.c.l.b16 %v916
    %v1562 = vunpack.c.h.b16 %v916
    %v1563 = vunpack.c.l.b16 %v917
    %v1564 = vunpack.c.h.b16 %v917
    %v1565 = vunpack.c.l.b16 %v918
    %v1566 = vunpack.c.h.b16 %v918
    %v1567 = vunpack.c.l.b16 %v919
    %v1568 = vunpack.c.h.b16 %v919
    %v1569 = vunpack.c.l.b16 %v920
    %v1570 = vunpack.c.h.b16 %v920
    %v1571 = vpack.c.b16 %v1511, %v1507
    %v1572 = vpack.c.b16 %v1512, %v1508
    %v1573 = vpack.c.b16 %v1513, %v1509
    %v1574 = vpack.c.b16 %v1514, %v1510
    %v1575 = vpack.c.b16 %v1519, %v1515
    %v1576 = vpack.c.b16 %v1520, %v1516
    %v1577 = vpack.c.b16 %v1521, %v1517
    %v1578 = vpack.c.b16 %v1522, %v1518
    %v1579 = vpack.c.b16 %v1527, %v1523
    %v1580 = vpack.c.b16 %v1528, %v1524
    %v1581 = vpack.c.b16 %v1529, %v1525
    %v1582 = vpack.c.b16 %v1530, %v1526
    %v1583 = vpack.c.b16 %v1535, %v1531
    %v1584 = vpack.c.b16 %v1536, %v1532
    %v1585 = vpack.c.b16 %v1537, %v1533
    %v1586 = vpack.c.b16 %v1538, %v1534
    %v1587 = vpack.c.b16 %v1543, %v1539
    %v1588 = vpack.c.b16 %v1544, %v1540
    %v1589 = vpack.c.b16 %v1545, %v1541
    %v1590 = vpack.c.b16 %v1546, %v1542
    %v1591 = vpack.c.b16 %v1551, %v1547
    %v1592 = vpack.c.b16 %v1552, %v1548
    %v1593 = vpack.c.b16 %v1553, %v1549
    %v1594 = vpack.c.b16 %v1554, %v1550
    %v1595 = vpack.c.b16 %v1559, %v1555
    %v1596 = vpack.c.b16 %v1560, %v1556
    %v1597 = vpack.c.b16 %v1561, %v1557
    %v1598 = vpack.c.b16 %v1562, %v1558
    %v1599 = vpack.c.b16 %v1567, %v1563
    %v1600 = vpack.c.b16 %v1568, %v1564
    %v1601 = vpack.c.b16 %v1569, %v1565
    %v1602 = vpack.c.b16 %v1570, %v1566
    %1635 = vmatprep.subr.bf16.mxu0 %v1600
    %1636 = vmatpush1.bf16.msra.mxu0 %v1599
    %1637 = vmatprep.subr.bf16.mxu0 %v1596
    %1638 = vmatpush1.bf16.msra.mxu0 %v1595
    %1639 = vmatprep.subr.bf16.mxu0 %v1592
    %1640 = vmatpush1.bf16.msra.mxu0 %v1591
    %1641 = vmatprep.subr.bf16.mxu0 %v1588
    %1642 = vmatpush1.bf16.msra.mxu0 %v1587
    %1643 = vmatprep.subr.bf16.mxu0 %v1584
    %1644 = vmatpush1.bf16.msra.mxu0 %v1583
    %1645 = vmatprep.subr.bf16.mxu0 %v1580
    %1646 = vmatpush1.bf16.msra.mxu0 %v1579
    %1647 = vmatprep.subr.bf16.mxu0 %v1576
    %1648 = vmatpush1.bf16.msra.mxu0 %v1575
    %1649 = vmatprep.subr.bf16.mxu0 %v1572
    %1650 = vmatpush1.bf16.msra.mxu0 %v1571
    %1651 = vmatprep.subr.bf16.mxu0 0
    %1652 = vmatpush2.bf16.msra.mxu0 0
    %1653 = vmatprep.subr.bf16.mxu0 0
    %1654 = vmatpush2.bf16.msra.mxu0 0
    %1655 = vmatprep.subr.bf16.mxu0 0
    %1656 = vmatpush2.bf16.msra.mxu0 0
    %1657 = vmatprep.subr.bf16.mxu0 0
    %1658 = vmatpush2.bf16.msra.mxu0 0
    %1659 = vmatprep.subr.bf16.mxu0 0
    %1660 = vmatpush2.bf16.msra.mxu0 0
    %1661 = vmatprep.subr.bf16.mxu0 0
    %1662 = vmatpush2.bf16.msra.mxu0 0
    %1663 = vmatprep.subr.bf16.mxu0 0
    %1664 = vmatpush2.bf16.msra.mxu0 0
    %1665 = vmatprep.subr.bf16.mxu0 0
    %1666 = vmatpush2.bf16.msra.mxu0 0
    %1667 = vmatprep.mubr.bf16.mxu0 0
    %1668 = vmatmul.mubr.bf16.gmra.mxu0 %v888
    %v1669 = vpop.f32.mrf.mxu0
    %v1670 = vadd.f32 %v1428, %v1669
    %v1671 = vpop.f32.mrf.mxu0
    %v1672 = vadd.f32 %v1430, %v1671
    %v1673 = vpop.f32.mrf.mxu0
    %v1674 = vpop.f32.mrf.mxu0
    %1675 = vdwg.mxu0
    %1676 = vmatprep.subr.bf16.mxu0 %v1602
    %1677 = vmatpush1.bf16.msra.mxu0 %v1601
    %1678 = vmatprep.subr.bf16.mxu0 %v1598
    %1679 = vmatpush1.bf16.msra.mxu0 %v1597
    %1680 = vmatprep.subr.bf16.mxu0 %v1594
    %1681 = vmatpush1.bf16.msra.mxu0 %v1593
    %1682 = vmatprep.subr.bf16.mxu0 %v1590
    %1683 = vmatpush1.bf16.msra.mxu0 %v1589
    %1684 = vmatprep.subr.bf16.mxu0 %v1586
    %1685 = vmatpush1.bf16.msra.mxu0 %v1585
    %1686 = vmatprep.subr.bf16.mxu0 %v1582
    %1687 = vmatpush1.bf16.msra.mxu0 %v1581
    %1688 = vmatprep.subr.bf16.mxu0 %v1578
    %1689 = vmatpush1.bf16.msra.mxu0 %v1577
    %1690 = vmatprep.subr.bf16.mxu0 %v1574
    %1691 = vmatpush1.bf16.msra.mxu0 %v1573
    %1692 = vmatprep.subr.bf16.mxu0 0
    %1693 = vmatpush2.bf16.msra.mxu0 0
    %1694 = vmatprep.subr.bf16.mxu0 0
    %1695 = vmatpush2.bf16.msra.mxu0 0
    %1696 = vmatprep.subr.bf16.mxu0 0
    %1697 = vmatpush2.bf16.msra.mxu0 0
    %1698 = vmatprep.subr.bf16.mxu0 0
    %1699 = vmatpush2.bf16.msra.mxu0 0
    %1700 = vmatprep.subr.bf16.mxu0 0
    %1701 = vmatpush2.bf16.msra.mxu0 0
    %1702 = vmatprep.subr.bf16.mxu0 0
    %1703 = vmatpush2.bf16.msra.mxu0 0
    %1704 = vmatprep.subr.bf16.mxu0 0
    %1705 = vmatpush2.bf16.msra.mxu0 0
    %1706 = vmatprep.subr.bf16.mxu0 0
    %1707 = vmatpush2.bf16.msra.mxu0 0
    %1708 = vmatprep.mubr.bf16.mxu0 0
    %1709 = vmatmul.mubr.bf16.gmra.mxu0 %v888
    %v1710 = vpop.f32.mrf.mxu0
    %v1711 = vadd.f32 %v1469, %v1710
    %v1712 = vpop.f32.mrf.mxu0
    %v1713 = vadd.f32 %v1471, %v1712
    %v1714 = vpop.f32.mrf.mxu0
    %v1715 = vpop.f32.mrf.mxu0
    %1716 = vdwg.mxu0
    %s1717 = scalar_lea.vmem %s0, 18
    %v1718 = vld [vmem:[%s1717] sm:$0xff]
    %v1719 = vld [vmem:[%s1717 + $0x8] sm:$0x1]
    %v1722 = vcombine.high %v1718, %v1718
    %v1724 = vunpack.c.l.s4 1966171168
    %v1725 = vunpack.c.0.s8 %v1724
    %v1726 = vlaneseq
    %v1727 = vshrl.u32 %v1726, 7
    %v1728 = vsub.s32 %v1725, %v1727
    %v1729 = vrot.slane %v1718, %v1728
    %v1731 = vunpack.c.l.s4 1966171168
    %v1732 = vunpack.c.0.s8 %v1731
    %v1733 = vlaneseq
    %v1734 = vshrl.u32 %v1733, 7
    %v1735 = vsub.s32 %v1732, %v1734
    %v1736 = vrot.slane %v1722, %v1735
    %v1737 = vcombine.high %v1729, %v1729
    %v1738 = vcombine.high %v1736, %v1736
    %v1740 = vunpack.c.l.s4 1966171168
    %v1741 = vunpack.c.0.s8 %v1740
    %v1742 = vlaneseq
    %v1743 = vshrl.u32 %v1742, 7
    %v1744 = vsub.s32 %v1741, %v1743
    %v1745 = vrot.slane %v1729, %v1744
    %v1747 = vunpack.c.l.s4 1966171168
    %v1748 = vunpack.c.0.s8 %v1747
    %v1749 = vlaneseq
    %v1750 = vshrl.u32 %v1749, 7
    %v1751 = vsub.s32 %v1748, %v1750
    %v1752 = vrot.slane %v1736, %v1751
    %v1754 = vunpack.c.l.s4 1966171168
    %v1755 = vunpack.c.0.s8 %v1754
    %v1756 = vlaneseq
    %v1757 = vshrl.u32 %v1756, 7
    %v1758 = vsub.s32 %v1755, %v1757
    %v1759 = vrot.slane %v1737, %v1758
    %v1761 = vunpack.c.l.s4 1966171168
    %v1762 = vunpack.c.0.s8 %v1761
    %v1763 = vlaneseq
    %v1764 = vshrl.u32 %v1763, 7
    %v1765 = vsub.s32 %v1762, %v1764
    %v1766 = vrot.slane %v1738, %v1765
    %v1767 = vcombine.high %v1745, %v1745
    %v1768 = vcombine.high %v1752, %v1752
    %v1769 = vcombine.high %v1759, %v1759
    %v1770 = vcombine.high %v1766, %v1766
    %v1772 = vunpack.c.l.s4 1966171168
    %v1773 = vunpack.c.0.s8 %v1772
    %v1774 = vlaneseq
    %v1775 = vshrl.u32 %v1774, 7
    %v1776 = vsub.s32 %v1773, %v1775
    %v1777 = vrot.slane %v1719, %v1776
    %v1779 = vunpack.c.l.s4 1966171168
    %v1780 = vunpack.c.0.s8 %v1779
    %v1781 = vlaneseq
    %v1782 = vshrl.u32 %v1781, 7
    %v1783 = vsub.s32 %v1780, %v1782
    %v1784 = vrot.slane %v1777, %v1783
    %1794 = vmatprep.subr.bf16.mxu0 0
    %1795 = vmatpush1.bf16.msra.mxu0 %v550
    %1796 = vmatprep.subr.bf16.mxu0 0
    %1797 = vmatpush1.bf16.msra.mxu0 %v549
    %1798 = vmatprep.subr.bf16.mxu0 0
    %1799 = vmatpush1.bf16.msra.mxu0 %v548
    %1800 = vmatprep.subr.bf16.mxu0 0
    %1801 = vmatpush1.bf16.msra.mxu0 %v547
    %1802 = vmatprep.subr.bf16.mxu0 0
    %1803 = vmatpush1.bf16.msra.mxu0 %v546
    %1804 = vmatprep.subr.bf16.mxu0 0
    %1805 = vmatpush1.bf16.msra.mxu0 %v545
    %1806 = vmatprep.subr.bf16.mxu0 0
    %1807 = vmatpush1.bf16.msra.mxu0 %v544
    %1808 = vmatprep.subr.bf16.mxu0 0
    %1809 = vmatpush1.bf16.msra.mxu0 %v543
    %1810 = vmatprep.subr.bf16.mxu0 0
    %1811 = vmatpush2.bf16.msra.mxu0 %v558
    %1812 = vmatprep.subr.bf16.mxu0 0
    %1813 = vmatpush2.bf16.msra.mxu0 %v557
    %1814 = vmatprep.subr.bf16.mxu0 0
    %1815 = vmatpush2.bf16.msra.mxu0 %v556
    %1816 = vmatprep.subr.bf16.mxu0 0
    %1817 = vmatpush2.bf16.msra.mxu0 %v555
    %1818 = vmatprep.subr.bf16.mxu0 0
    %1819 = vmatpush2.bf16.msra.mxu0 %v554
    %1820 = vmatprep.subr.bf16.mxu0 0
    %1821 = vmatpush2.bf16.msra.mxu0 %v553
    %1822 = vmatprep.subr.bf16.mxu0 0
    %1823 = vmatpush2.bf16.msra.mxu0 %v552
    %1824 = vmatprep.subr.bf16.mxu0 0
    %1825 = vmatpush2.bf16.msra.mxu0 %v551
    %1826 = vmatprep.mubr.bf16.mxu0 %v1759
    %1827 = vmatmul.mubr.bf16.gmra.mxu0 %v1745
    %v1828 = vpop.f32.mrf.mxu0
    %v1829 = vadd.f32 %v179, %v1828
    %v1830 = vpop.f32.mrf.mxu0
    %v1831 = vpop.f32.mrf.mxu0
    %v1832 = vpop.f32.mrf.mxu0
    %1833 = vdwg.mxu0
    %1834 = vmatprep.subr.bf16.mxu0 0
    %1835 = vmatpush1.bf16.msra.mxu0 %v566
    %1836 = vmatprep.subr.bf16.mxu0 0
    %1837 = vmatpush1.bf16.msra.mxu0 %v565
    %1838 = vmatprep.subr.bf16.mxu0 0
    %1839 = vmatpush1.bf16.msra.mxu0 %v564
    %1840 = vmatprep.subr.bf16.mxu0 0
    %1841 = vmatpush1.bf16.msra.mxu0 %v563
    %1842 = vmatprep.subr.bf16.mxu0 0
    %1843 = vmatpush1.bf16.msra.mxu0 %v562
    %1844 = vmatprep.subr.bf16.mxu0 0
    %1845 = vmatpush1.bf16.msra.mxu0 %v561
    %1846 = vmatprep.subr.bf16.mxu0 0
    %1847 = vmatpush1.bf16.msra.mxu0 %v560
    %1848 = vmatprep.subr.bf16.mxu0 0
    %1849 = vmatpush1.bf16.msra.mxu0 %v559
    %1850 = vmatprep.subr.bf16.mxu0 0
    %1851 = vmatpush2.bf16.msra.mxu0 %v574
    %1852 = vmatprep.subr.bf16.mxu0 0
    %1853 = vmatpush2.bf16.msra.mxu0 %v573
    %1854 = vmatprep.subr.bf16.mxu0 0
    %1855 = vmatpush2.bf16.msra.mxu0 %v572
    %1856 = vmatprep.subr.bf16.mxu0 0
    %1857 = vmatpush2.bf16.msra.mxu0 %v571
    %1858 = vmatprep.subr.bf16.mxu0 0
    %1859 = vmatpush2.bf16.msra.mxu0 %v570
    %1860 = vmatprep.subr.bf16.mxu0 0
    %1861 = vmatpush2.bf16.msra.mxu0 %v569
    %1862 = vmatprep.subr.bf16.mxu0 0
    %1863 = vmatpush2.bf16.msra.mxu0 %v568
    %1864 = vmatprep.subr.bf16.mxu0 0
    %1865 = vmatpush2.bf16.msra.mxu0 %v567
    %1866 = vmatprep.mubr.bf16.mxu0 %v1769
    %1867 = vmatmul.mubr.bf16.gmra.mxu0 %v1767
    %v1868 = vpop.f32.mrf.mxu0
    %v1869 = vadd.f32 %v1829, %v1868
    %v1870 = vpop.f32.mrf.mxu0
    %v1871 = vpop.f32.mrf.mxu0
    %v1872 = vpop.f32.mrf.mxu0
    %1873 = vdwg.mxu0
    %1874 = vmatprep.subr.bf16.mxu0 0
    %1875 = vmatpush1.bf16.msra.mxu0 %v582
    %1876 = vmatprep.subr.bf16.mxu0 0
    %1877 = vmatpush1.bf16.msra.mxu0 %v581
    %1878 = vmatprep.subr.bf16.mxu0 0
    %1879 = vmatpush1.bf16.msra.mxu0 %v580
    %1880 = vmatprep.subr.bf16.mxu0 0
    %1881 = vmatpush1.bf16.msra.mxu0 %v579
    %1882 = vmatprep.subr.bf16.mxu0 0
    %1883 = vmatpush1.bf16.msra.mxu0 %v578
    %1884 = vmatprep.subr.bf16.mxu0 0
    %1885 = vmatpush1.bf16.msra.mxu0 %v577
    %1886 = vmatprep.subr.bf16.mxu0 0
    %1887 = vmatpush1.bf16.msra.mxu0 %v576
    %1888 = vmatprep.subr.bf16.mxu0 0
    %1889 = vmatpush1.bf16.msra.mxu0 %v575
    %1890 = vmatprep.subr.bf16.mxu0 0
    %1891 = vmatpush2.bf16.msra.mxu0 %v590
    %1892 = vmatprep.subr.bf16.mxu0 0
    %1893 = vmatpush2.bf16.msra.mxu0 %v589
    %1894 = vmatprep.subr.bf16.mxu0 0
    %1895 = vmatpush2.bf16.msra.mxu0 %v588
    %1896 = vmatprep.subr.bf16.mxu0 0
    %1897 = vmatpush2.bf16.msra.mxu0 %v587
    %1898 = vmatprep.subr.bf16.mxu0 0
    %1899 = vmatpush2.bf16.msra.mxu0 %v586
    %1900 = vmatprep.subr.bf16.mxu0 0
    %1901 = vmatpush2.bf16.msra.mxu0 %v585
    %1902 = vmatprep.subr.bf16.mxu0 0
    %1903 = vmatpush2.bf16.msra.mxu0 %v584
    %1904 = vmatprep.subr.bf16.mxu0 0
    %1905 = vmatpush2.bf16.msra.mxu0 %v583
    %1906 = vmatprep.mubr.bf16.mxu0 %v1766
    %1907 = vmatmul.mubr.bf16.gmra.mxu0 %v1752
    %v1908 = vpop.f32.mrf.mxu0
    %v1909 = vadd.f32 %v1869, %v1908
    %v1910 = vpop.f32.mrf.mxu0
    %v1911 = vpop.f32.mrf.mxu0
    %v1912 = vpop.f32.mrf.mxu0
    %1913 = vdwg.mxu0
    %1914 = vmatprep.subr.bf16.mxu0 0
    %1915 = vmatpush1.bf16.msra.mxu0 %v598
    %1916 = vmatprep.subr.bf16.mxu0 0
    %1917 = vmatpush1.bf16.msra.mxu0 %v597
    %1918 = vmatprep.subr.bf16.mxu0 0
    %1919 = vmatpush1.bf16.msra.mxu0 %v596
    %1920 = vmatprep.subr.bf16.mxu0 0
    %1921 = vmatpush1.bf16.msra.mxu0 %v595
    %1922 = vmatprep.subr.bf16.mxu0 0
    %1923 = vmatpush1.bf16.msra.mxu0 %v594
    %1924 = vmatprep.subr.bf16.mxu0 0
    %1925 = vmatpush1.bf16.msra.mxu0 %v593
    %1926 = vmatprep.subr.bf16.mxu0 0
    %1927 = vmatpush1.bf16.msra.mxu0 %v592
    %1928 = vmatprep.subr.bf16.mxu0 0
    %1929 = vmatpush1.bf16.msra.mxu0 %v591
    %1930 = vmatprep.subr.bf16.mxu0 0
    %1931 = vmatpush2.bf16.msra.mxu0 %v606
    %1932 = vmatprep.subr.bf16.mxu0 0
    %1933 = vmatpush2.bf16.msra.mxu0 %v605
    %1934 = vmatprep.subr.bf16.mxu0 0
    %1935 = vmatpush2.bf16.msra.mxu0 %v604
    %1936 = vmatprep.subr.bf16.mxu0 0
    %1937 = vmatpush2.bf16.msra.mxu0 %v603
    %1938 = vmatprep.subr.bf16.mxu0 0
    %1939 = vmatpush2.bf16.msra.mxu0 %v602
    %1940 = vmatprep.subr.bf16.mxu0 0
    %1941 = vmatpush2.bf16.msra.mxu0 %v601
    %1942 = vmatprep.subr.bf16.mxu0 0
    %1943 = vmatpush2.bf16.msra.mxu0 %v600
    %1944 = vmatprep.subr.bf16.mxu0 0
    %1945 = vmatpush2.bf16.msra.mxu0 %v599
    %1946 = vmatprep.mubr.bf16.mxu0 %v1770
    %1947 = vmatmul.mubr.bf16.gmra.mxu0 %v1768
    %v1948 = vpop.f32.mrf.mxu0
    %v1949 = vadd.f32 %v1909, %v1948
    %v1950 = vpop.f32.mrf.mxu0
    %v1951 = vpop.f32.mrf.mxu0
    %v1952 = vpop.f32.mrf.mxu0
    %1953 = vdwg.mxu0
    %1954 = vmatprep.subr.bf16.mxu0 0
    %1955 = vmatpush1.bf16.msra.mxu0 %v614
    %1956 = vmatprep.subr.bf16.mxu0 0
    %1957 = vmatpush1.bf16.msra.mxu0 %v613
    %1958 = vmatprep.subr.bf16.mxu0 0
    %1959 = vmatpush1.bf16.msra.mxu0 %v612
    %1960 = vmatprep.subr.bf16.mxu0 0
    %1961 = vmatpush1.bf16.msra.mxu0 %v611
    %1962 = vmatprep.subr.bf16.mxu0 0
    %1963 = vmatpush1.bf16.msra.mxu0 %v610
    %1964 = vmatprep.subr.bf16.mxu0 0
    %1965 = vmatpush1.bf16.msra.mxu0 %v609
    %1966 = vmatprep.subr.bf16.mxu0 0
    %1967 = vmatpush1.bf16.msra.mxu0 %v608
    %1968 = vmatprep.subr.bf16.mxu0 0
    %1969 = vmatpush1.bf16.msra.mxu0 %v607
    %1970 = vmatprep.subr.bf16.mxu0 0
    %1971 = vmatpush2.bf16.msra.mxu0 0
    %1972 = vmatprep.subr.bf16.mxu0 0
    %1973 = vmatpush2.bf16.msra.mxu0 0
    %1974 = vmatprep.subr.bf16.mxu0 0
    %1975 = vmatpush2.bf16.msra.mxu0 0
    %1976 = vmatprep.subr.bf16.mxu0 0
    %1977 = vmatpush2.bf16.msra.mxu0 0
    %1978 = vmatprep.subr.bf16.mxu0 0
    %1979 = vmatpush2.bf16.msra.mxu0 0
    %1980 = vmatprep.subr.bf16.mxu0 0
    %1981 = vmatpush2.bf16.msra.mxu0 0
    %1982 = vmatprep.subr.bf16.mxu0 0
    %1983 = vmatpush2.bf16.msra.mxu0 0
    %1984 = vmatprep.subr.bf16.mxu0 0
    %1985 = vmatpush2.bf16.msra.mxu0 0
    %1986 = vmatprep.mubr.bf16.mxu0 0
    %1987 = vmatmul.mubr.bf16.gmra.mxu0 %v1784
    %v1988 = vpop.f32.mrf.mxu0
    %v1989 = vadd.f32 %v1949, %v1988
    %v1990 = vpop.f32.mrf.mxu0
    %v1991 = vpop.f32.mrf.mxu0
    %v1992 = vpop.f32.mrf.mxu0
    %1993 = vdwg.mxu0
    %v1994 = vmax.f32 %v1989, 0.0
    %v1995 = vpack.c.bf16 %v1994, %v1994
    %s1996 = scalar_lea.vmem %s3, 512
    %v1997 = vld [vmem:[%s1996] sm:$0xff]
    %v1998 = vld [vmem:[%s1996 + $0x8] sm:$0xff]
    %v1999 = vld [vmem:[%s1996 + $0x10] sm:$0xff]
    %v2000 = vld [vmem:[%s1996 + $0x18] sm:$0xff]
    %v2001 = vld [vmem:[%s1996 + $0x20] sm:$0xff]
    %v2002 = vld [vmem:[%s1996 + $0x28] sm:$0xff]
    %v2003 = vld [vmem:[%s1996 + $0x30] sm:$0xff]
    %v2004 = vld [vmem:[%s1996 + $0x38] sm:$0xff]
    %v2005 = vld [vmem:[%s1996 + $0x40] sm:$0xff]
    %v2006 = vld [vmem:[%s1996 + $0x48] sm:$0xff]
    %v2007 = vld [vmem:[%s1996 + $0x50] sm:$0xff]
    %v2008 = vld [vmem:[%s1996 + $0x58] sm:$0xff]
    %v2009 = vld [vmem:[%s1996 + $0x60] sm:$0xff]
    %v2010 = vld [vmem:[%s1996 + $0x68] sm:$0xff]
    %v2011 = vld [vmem:[%s1996 + $0x70] sm:$0xff]
    %v2012 = vld [vmem:[%s1996 + $0x78] sm:$0xff]
    %v2013 = vld [vmem:[%s1996 + $0x80] sm:$0xff]
    %v2014 = vld [vmem:[%s1996 + $0x88] sm:$0xff]
    %v2015 = vld [vmem:[%s1996 + $0x90] sm:$0xff]
    %v2016 = vld [vmem:[%s1996 + $0x98] sm:$0xff]
    %v2017 = vld [vmem:[%s1996 + $0xa0] sm:$0xff]
    %v2018 = vld [vmem:[%s1996 + $0xa8] sm:$0xff]
    %v2019 = vld [vmem:[%s1996 + $0xb0] sm:$0xff]
    %v2020 = vld [vmem:[%s1996 + $0xb8] sm:$0xff]
    %v2021 = vld [vmem:[%s1996 + $0xc0] sm:$0xff]
    %v2022 = vld [vmem:[%s1996 + $0xc8] sm:$0xff]
    %v2023 = vld [vmem:[%s1996 + $0xd0] sm:$0xff]
    %v2024 = vld [vmem:[%s1996 + $0xd8] sm:$0xff]
    %v2025 = vld [vmem:[%s1996 + $0xe0] sm:$0xff]
    %v2026 = vld [vmem:[%s1996 + $0xe8] sm:$0xff]
    %v2027 = vld [vmem:[%s1996 + $0xf0] sm:$0xff]
    %v2028 = vld [vmem:[%s1996 + $0xf8] sm:$0xff]
    %v2061 = vunpack.c.l.b16 %v1997
    %v2062 = vunpack.c.h.b16 %v1997
    %v2063 = vunpack.c.l.b16 %v1998
    %v2064 = vunpack.c.h.b16 %v1998
    %v2065 = vunpack.c.l.b16 %v1999
    %v2066 = vunpack.c.h.b16 %v1999
    %v2067 = vunpack.c.l.b16 %v2000
    %v2068 = vunpack.c.h.b16 %v2000
    %v2069 = vunpack.c.l.b16 %v2001
    %v2070 = vunpack.c.h.b16 %v2001
    %v2071 = vunpack.c.l.b16 %v2002
    %v2072 = vunpack.c.h.b16 %v2002
    %v2073 = vunpack.c.l.b16 %v2003
    %v2074 = vunpack.c.h.b16 %v2003
    %v2075 = vunpack.c.l.b16 %v2004
    %v2076 = vunpack.c.h.b16 %v2004
    %v2077 = vunpack.c.l.b16 %v2005
    %v2078 = vunpack.c.h.b16 %v2005
    %v2079 = vunpack.c.l.b16 %v2006
    %v2080 = vunpack.c.h.b16 %v2006
    %v2081 = vunpack.c.l.b16 %v2007
    %v2082 = vunpack.c.h.b16 %v2007
    %v2083 = vunpack.c.l.b16 %v2008
    %v2084 = vunpack.c.h.b16 %v2008
    %v2085 = vunpack.c.l.b16 %v2009
    %v2086 = vunpack.c.h.b16 %v2009
    %v2087 = vunpack.c.l.b16 %v2010
    %v2088 = vunpack.c.h.b16 %v2010
    %v2089 = vunpack.c.l.b16 %v2011
    %v2090 = vunpack.c.h.b16 %v2011
    %v2091 = vunpack.c.l.b16 %v2012
    %v2092 = vunpack.c.h.b16 %v2012
    %v2093 = vunpack.c.l.b16 %v2013
    %v2094 = vunpack.c.h.b16 %v2013
    %v2095 = vunpack.c.l.b16 %v2014
    %v2096 = vunpack.c.h.b16 %v2014
    %v2097 = vunpack.c.l.b16 %v2015
    %v2098 = vunpack.c.h.b16 %v2015
    %v2099 = vunpack.c.l.b16 %v2016
    %v2100 = vunpack.c.h.b16 %v2016
    %v2101 = vunpack.c.l.b16 %v2017
    %v2102 = vunpack.c.h.b16 %v2017
    %v2103 = vunpack.c.l.b16 %v2018
    %v2104 = vunpack.c.h.b16 %v2018
    %v2105 = vunpack.c.l.b16 %v2019
    %v2106 = vunpack.c.h.b16 %v2019
    %v2107 = vunpack.c.l.b16 %v2020
    %v2108 = vunpack.c.h.b16 %v2020
    %v2109 = vunpack.c.l.b16 %v2021
    %v2110 = vunpack.c.h.b16 %v2021
    %v2111 = vunpack.c.l.b16 %v2022
    %v2112 = vunpack.c.h.b16 %v2022
    %v2113 = vunpack.c.l.b16 %v2023
    %v2114 = vunpack.c.h.b16 %v2023
    %v2115 = vunpack.c.l.b16 %v2024
    %v2116 = vunpack.c.h.b16 %v2024
    %v2117 = vunpack.c.l.b16 %v2025
    %v2118 = vunpack.c.h.b16 %v2025
    %v2119 = vunpack.c.l.b16 %v2026
    %v2120 = vunpack.c.h.b16 %v2026
    %v2121 = vunpack.c.l.b16 %v2027
    %v2122 = vunpack.c.h.b16 %v2027
    %v2123 = vunpack.c.l.b16 %v2028
    %v2124 = vunpack.c.h.b16 %v2028
    %v2125 = vpack.c.b16 %v2065, %v2061
    %v2126 = vpack.c.b16 %v2066, %v2062
    %v2127 = vpack.c.b16 %v2067, %v2063
    %v2128 = vpack.c.b16 %v2068, %v2064
    %v2129 = vpack.c.b16 %v2073, %v2069
    %v2130 = vpack.c.b16 %v2074, %v2070
    %v2131 = vpack.c.b16 %v2075, %v2071
    %v2132 = vpack.c.b16 %v2076, %v2072
    %v2133 = vpack.c.b16 %v2081, %v2077
    %v2134 = vpack.c.b16 %v2082, %v2078
    %v2135 = vpack.c.b16 %v2083, %v2079
    %v2136 = vpack.c.b16 %v2084, %v2080
    %v2137 = vpack.c.b16 %v2089, %v2085
    %v2138 = vpack.c.b16 %v2090, %v2086
    %v2139 = vpack.c.b16 %v2091, %v2087
    %v2140 = vpack.c.b16 %v2092, %v2088
    %v2141 = vpack.c.b16 %v2097, %v2093
    %v2142 = vpack.c.b16 %v2098, %v2094
    %v2143 = vpack.c.b16 %v2099, %v2095
    %v2144 = vpack.c.b16 %v2100, %v2096
    %v2145 = vpack.c.b16 %v2105, %v2101
    %v2146 = vpack.c.b16 %v2106, %v2102
    %v2147 = vpack.c.b16 %v2107, %v2103
    %v2148 = vpack.c.b16 %v2108, %v2104
    %v2149 = vpack.c.b16 %v2113, %v2109
    %v2150 = vpack.c.b16 %v2114, %v2110
    %v2151 = vpack.c.b16 %v2115, %v2111
    %v2152 = vpack.c.b16 %v2116, %v2112
    %v2153 = vpack.c.b16 %v2121, %v2117
    %v2154 = vpack.c.b16 %v2122, %v2118
    %v2155 = vpack.c.b16 %v2123, %v2119
    %v2156 = vpack.c.b16 %v2124, %v2120
    %2189 = vmatprep.subr.bf16.mxu0 %v2154
    %2190 = vmatpush1.bf16.msra.mxu0 %v2153
    %2191 = vmatprep.subr.bf16.mxu0 %v2150
    %2192 = vmatpush1.bf16.msra.mxu0 %v2149
    %2193 = vmatprep.subr.bf16.mxu0 %v2146
    %2194 = vmatpush1.bf16.msra.mxu0 %v2145
    %2195 = vmatprep.subr.bf16.mxu0 %v2142
    %2196 = vmatpush1.bf16.msra.mxu0 %v2141
    %2197 = vmatprep.subr.bf16.mxu0 %v2138
    %2198 = vmatpush1.bf16.msra.mxu0 %v2137
    %2199 = vmatprep.subr.bf16.mxu0 %v2134
    %2200 = vmatpush1.bf16.msra.mxu0 %v2133
    %2201 = vmatprep.subr.bf16.mxu0 %v2130
    %2202 = vmatpush1.bf16.msra.mxu0 %v2129
    %2203 = vmatprep.subr.bf16.mxu0 %v2126
    %2204 = vmatpush1.bf16.msra.mxu0 %v2125
    %2205 = vmatprep.subr.bf16.mxu0 0
    %2206 = vmatpush2.bf16.msra.mxu0 0
    %2207 = vmatprep.subr.bf16.mxu0 0
    %2208 = vmatpush2.bf16.msra.mxu0 0
    %2209 = vmatprep.subr.bf16.mxu0 0
    %2210 = vmatpush2.bf16.msra.mxu0 0
    %2211 = vmatprep.subr.bf16.mxu0 0
    %2212 = vmatpush2.bf16.msra.mxu0 0
    %2213 = vmatprep.subr.bf16.mxu0 0
    %2214 = vmatpush2.bf16.msra.mxu0 0
    %2215 = vmatprep.subr.bf16.mxu0 0
    %2216 = vmatpush2.bf16.msra.mxu0 0
    %2217 = vmatprep.subr.bf16.mxu0 0
    %2218 = vmatpush2.bf16.msra.mxu0 0
    %2219 = vmatprep.subr.bf16.mxu0 0
    %2220 = vmatpush2.bf16.msra.mxu0 0
    %2221 = vmatprep.mubr.bf16.mxu0 0
    %2222 = vmatmul.mubr.bf16.gmra.mxu0 %v1995
    %v2223 = vpop.f32.mrf.mxu0
    %v2224 = vadd.f32 0.0, %v2223
    %v2225 = vpop.f32.mrf.mxu0
    %v2226 = vadd.f32 0.0, %v2225
    %v2227 = vpop.f32.mrf.mxu0
    %v2228 = vpop.f32.mrf.mxu0
    %2229 = vdwg.mxu0
    %2230 = vmatprep.subr.bf16.mxu0 %v2156
    %2231 = vmatpush1.bf16.msra.mxu0 %v2155
    %2232 = vmatprep.subr.bf16.mxu0 %v2152
    %2233 = vmatpush1.bf16.msra.mxu0 %v2151
    %2234 = vmatprep.subr.bf16.mxu0 %v2148
    %2235 = vmatpush1.bf16.msra.mxu0 %v2147
    %2236 = vmatprep.subr.bf16.mxu0 %v2144
    %2237 = vmatpush1.bf16.msra.mxu0 %v2143
    %2238 = vmatprep.subr.bf16.mxu0 %v2140
    %2239 = vmatpush1.bf16.msra.mxu0 %v2139
    %2240 = vmatprep.subr.bf16.mxu0 %v2136
    %2241 = vmatpush1.bf16.msra.mxu0 %v2135
    %2242 = vmatprep.subr.bf16.mxu0 %v2132
    %2243 = vmatpush1.bf16.msra.mxu0 %v2131
    %2244 = vmatprep.subr.bf16.mxu0 %v2128
    %2245 = vmatpush1.bf16.msra.mxu0 %v2127
    %2246 = vmatprep.subr.bf16.mxu0 0
    %2247 = vmatpush2.bf16.msra.mxu0 0
    %2248 = vmatprep.subr.bf16.mxu0 0
    %2249 = vmatpush2.bf16.msra.mxu0 0
    %2250 = vmatprep.subr.bf16.mxu0 0
    %2251 = vmatpush2.bf16.msra.mxu0 0
    %2252 = vmatprep.subr.bf16.mxu0 0
    %2253 = vmatpush2.bf16.msra.mxu0 0
    %2254 = vmatprep.subr.bf16.mxu0 0
    %2255 = vmatpush2.bf16.msra.mxu0 0
    %2256 = vmatprep.subr.bf16.mxu0 0
    %2257 = vmatpush2.bf16.msra.mxu0 0
    %2258 = vmatprep.subr.bf16.mxu0 0
    %2259 = vmatpush2.bf16.msra.mxu0 0
    %2260 = vmatprep.subr.bf16.mxu0 0
    %2261 = vmatpush2.bf16.msra.mxu0 0
    %2262 = vmatprep.mubr.bf16.mxu0 0
    %2263 = vmatmul.mubr.bf16.gmra.mxu0 %v1995
    %v2264 = vpop.f32.mrf.mxu0
    %v2265 = vadd.f32 0.0, %v2264
    %v2266 = vpop.f32.mrf.mxu0
    %v2267 = vadd.f32 0.0, %v2266
    %v2268 = vpop.f32.mrf.mxu0
    %v2269 = vpop.f32.mrf.mxu0
    %2270 = vdwg.mxu0
    %v2271 = vadd.f32 %v1670, %v2224
    %v2272 = vadd.f32 %v1672, %v2226
    %v2273 = vadd.f32 %v1711, %v2265
    %v2274 = vadd.f32 %v1713, %v2267
    %s2275 = scalar_lea.vmem %s0, 27
    %v2276 = vld [vmem:[%s2275] sm:$0xff]
    %v2277 = vld [vmem:[%s2275 + $0x8] sm:$0x1]
    %v2280 = vcombine.high %v2276, %v2276
    %v2282 = vunpack.c.l.s4 1966171168
    %v2283 = vunpack.c.0.s8 %v2282
    %v2284 = vlaneseq
    %v2285 = vshrl.u32 %v2284, 7
    %v2286 = vsub.s32 %v2283, %v2285
    %v2287 = vrot.slane %v2276, %v2286
    %v2289 = vunpack.c.l.s4 1966171168
    %v2290 = vunpack.c.0.s8 %v2289
    %v2291 = vlaneseq
    %v2292 = vshrl.u32 %v2291, 7
    %v2293 = vsub.s32 %v2290, %v2292
    %v2294 = vrot.slane %v2280, %v2293
    %v2295 = vcombine.high %v2287, %v2287
    %v2296 = vcombine.high %v2294, %v2294
    %v2298 = vunpack.c.l.s4 1966171168
    %v2299 = vunpack.c.0.s8 %v2298
    %v2300 = vlaneseq
    %v2301 = vshrl.u32 %v2300, 7
    %v2302 = vsub.s32 %v2299, %v2301
    %v2303 = vrot.slane %v2287, %v2302
    %v2305 = vunpack.c.l.s4 1966171168
    %v2306 = vunpack.c.0.s8 %v2305
    %v2307 = vlaneseq
    %v2308 = vshrl.u32 %v2307, 7
    %v2309 = vsub.s32 %v2306, %v2308
    %v2310 = vrot.slane %v2294, %v2309
    %v2312 = vunpack.c.l.s4 1966171168
    %v2313 = vunpack.c.0.s8 %v2312
    %v2314 = vlaneseq
    %v2315 = vshrl.u32 %v2314, 7
    %v2316 = vsub.s32 %v2313, %v2315
    %v2317 = vrot.slane %v2295, %v2316
    %v2319 = vunpack.c.l.s4 1966171168
    %v2320 = vunpack.c.0.s8 %v2319
    %v2321 = vlaneseq
    %v2322 = vshrl.u32 %v2321, 7
    %v2323 = vsub.s32 %v2320, %v2322
    %v2324 = vrot.slane %v2296, %v2323
    %v2325 = vcombine.high %v2303, %v2303
    %v2326 = vcombine.high %v2310, %v2310
    %v2327 = vcombine.high %v2317, %v2317
    %v2328 = vcombine.high %v2324, %v2324
    %v2330 = vunpack.c.l.s4 1966171168
    %v2331 = vunpack.c.0.s8 %v2330
    %v2332 = vlaneseq
    %v2333 = vshrl.u32 %v2332, 7
    %v2334 = vsub.s32 %v2331, %v2333
    %v2335 = vrot.slane %v2277, %v2334
    %v2337 = vunpack.c.l.s4 1966171168
    %v2338 = vunpack.c.0.s8 %v2337
    %v2339 = vlaneseq
    %v2340 = vshrl.u32 %v2339, 7
    %v2341 = vsub.s32 %v2338, %v2340
    %v2342 = vrot.slane %v2335, %v2341
    %2352 = vmatprep.subr.bf16.mxu0 0
    %2353 = vmatpush1.bf16.msra.mxu0 %v550
    %2354 = vmatprep.subr.bf16.mxu0 0
    %2355 = vmatpush1.bf16.msra.mxu0 %v549
    %2356 = vmatprep.subr.bf16.mxu0 0
    %2357 = vmatpush1.bf16.msra.mxu0 %v548
    %2358 = vmatprep.subr.bf16.mxu0 0
    %2359 = vmatpush1.bf16.msra.mxu0 %v547
    %2360 = vmatprep.subr.bf16.mxu0 0
    %2361 = vmatpush1.bf16.msra.mxu0 %v546
    %2362 = vmatprep.subr.bf16.mxu0 0
    %2363 = vmatpush1.bf16.msra.mxu0 %v545
    %2364 = vmatprep.subr.bf16.mxu0 0
    %2365 = vmatpush1.bf16.msra.mxu0 %v544
    %2366 = vmatprep.subr.bf16.mxu0 0
    %2367 = vmatpush1.bf16.msra.mxu0 %v543
    %2368 = vmatprep.subr.bf16.mxu0 0
    %2369 = vmatpush2.bf16.msra.mxu0 %v558
    %2370 = vmatprep.subr.bf16.mxu0 0
    %2371 = vmatpush2.bf16.msra.mxu0 %v557
    %2372 = vmatprep.subr.bf16.mxu0 0
    %2373 = vmatpush2.bf16.msra.mxu0 %v556
    %2374 = vmatprep.subr.bf16.mxu0 0
    %2375 = vmatpush2.bf16.msra.mxu0 %v555
    %2376 = vmatprep.subr.bf16.mxu0 0
    %2377 = vmatpush2.bf16.msra.mxu0 %v554
    %2378 = vmatprep.subr.bf16.mxu0 0
    %2379 = vmatpush2.bf16.msra.mxu0 %v553
    %2380 = vmatprep.subr.bf16.mxu0 0
    %2381 = vmatpush2.bf16.msra.mxu0 %v552
    %2382 = vmatprep.subr.bf16.mxu0 0
    %2383 = vmatpush2.bf16.msra.mxu0 %v551
    %2384 = vmatprep.mubr.bf16.mxu0 %v2317
    %2385 = vmatmul.mubr.bf16.gmra.mxu0 %v2303
    %v2386 = vpop.f32.mrf.mxu0
    %v2387 = vadd.f32 %v179, %v2386
    %v2388 = vpop.f32.mrf.mxu0
    %v2389 = vpop.f32.mrf.mxu0
    %v2390 = vpop.f32.mrf.mxu0
    %2391 = vdwg.mxu0
    %2392 = vmatprep.subr.bf16.mxu0 0
    %2393 = vmatpush1.bf16.msra.mxu0 %v566
    %2394 = vmatprep.subr.bf16.mxu0 0
    %2395 = vmatpush1.bf16.msra.mxu0 %v565
    %2396 = vmatprep.subr.bf16.mxu0 0
    %2397 = vmatpush1.bf16.msra.mxu0 %v564
    %2398 = vmatprep.subr.bf16.mxu0 0
    %2399 = vmatpush1.bf16.msra.mxu0 %v563
    %2400 = vmatprep.subr.bf16.mxu0 0
    %2401 = vmatpush1.bf16.msra.mxu0 %v562
    %2402 = vmatprep.subr.bf16.mxu0 0
    %2403 = vmatpush1.bf16.msra.mxu0 %v561
    %2404 = vmatprep.subr.bf16.mxu0 0
    %2405 = vmatpush1.bf16.msra.mxu0 %v560
    %2406 = vmatprep.subr.bf16.mxu0 0
    %2407 = vmatpush1.bf16.msra.mxu0 %v559
    %2408 = vmatprep.subr.bf16.mxu0 0
    %2409 = vmatpush2.bf16.msra.mxu0 %v574
    %2410 = vmatprep.subr.bf16.mxu0 0
    %2411 = vmatpush2.bf16.msra.mxu0 %v573
    %2412 = vmatprep.subr.bf16.mxu0 0
    %2413 = vmatpush2.bf16.msra.mxu0 %v572
    %2414 = vmatprep.subr.bf16.mxu0 0
    %2415 = vmatpush2.bf16.msra.mxu0 %v571
    %2416 = vmatprep.subr.bf16.mxu0 0
    %2417 = vmatpush2.bf16.msra.mxu0 %v570
    %2418 = vmatprep.subr.bf16.mxu0 0
    %2419 = vmatpush2.bf16.msra.mxu0 %v569
    %2420 = vmatprep.subr.bf16.mxu0 0
    %2421 = vmatpush2.bf16.msra.mxu0 %v568
    %2422 = vmatprep.subr.bf16.mxu0 0
    %2423 = vmatpush2.bf16.msra.mxu0 %v567
    %2424 = vmatprep.mubr.bf16.mxu0 %v2327
    %2425 = vmatmul.mubr.bf16.gmra.mxu0 %v2325
    %v2426 = vpop.f32.mrf.mxu0
    %v2427 = vadd.f32 %v2387, %v2426
    %v2428 = vpop.f32.mrf.mxu0
    %v2429 = vpop.f32.mrf.mxu0
    %v2430 = vpop.f32.mrf.mxu0
    %2431 = vdwg.mxu0
    %2432 = vmatprep.subr.bf16.mxu0 0
    %2433 = vmatpush1.bf16.msra.mxu0 %v582
    %2434 = vmatprep.subr.bf16.mxu0 0
    %2435 = vmatpush1.bf16.msra.mxu0 %v581
    %2436 = vmatprep.subr.bf16.mxu0 0
    %2437 = vmatpush1.bf16.msra.mxu0 %v580
    %2438 = vmatprep.subr.bf16.mxu0 0
    %2439 = vmatpush1.bf16.msra.mxu0 %v579
    %2440 = vmatprep.subr.bf16.mxu0 0
    %2441 = vmatpush1.bf16.msra.mxu0 %v578
    %2442 = vmatprep.subr.bf16.mxu0 0
    %2443 = vmatpush1.bf16.msra.mxu0 %v577
    %2444 = vmatprep.subr.bf16.mxu0 0
    %2445 = vmatpush1.bf16.msra.mxu0 %v576
    %2446 = vmatprep.subr.bf16.mxu0 0
    %2447 = vmatpush1.bf16.msra.mxu0 %v575
    %2448 = vmatprep.subr.bf16.mxu0 0
    %2449 = vmatpush2.bf16.msra.mxu0 %v590
    %2450 = vmatprep.subr.bf16.mxu0 0
    %2451 = vmatpush2.bf16.msra.mxu0 %v589
    %2452 = vmatprep.subr.bf16.mxu0 0
    %2453 = vmatpush2.bf16.msra.mxu0 %v588
    %2454 = vmatprep.subr.bf16.mxu0 0
    %2455 = vmatpush2.bf16.msra.mxu0 %v587
    %2456 = vmatprep.subr.bf16.mxu0 0
    %2457 = vmatpush2.bf16.msra.mxu0 %v586
    %2458 = vmatprep.subr.bf16.mxu0 0
    %2459 = vmatpush2.bf16.msra.mxu0 %v585
    %2460 = vmatprep.subr.bf16.mxu0 0
    %2461 = vmatpush2.bf16.msra.mxu0 %v584
    %2462 = vmatprep.subr.bf16.mxu0 0
    %2463 = vmatpush2.bf16.msra.mxu0 %v583
    %2464 = vmatprep.mubr.bf16.mxu0 %v2324
    %2465 = vmatmul.mubr.bf16.gmra.mxu0 %v2310
    %v2466 = vpop.f32.mrf.mxu0
    %v2467 = vadd.f32 %v2427, %v2466
    %v2468 = vpop.f32.mrf.mxu0
    %v2469 = vpop.f32.mrf.mxu0
    %v2470 = vpop.f32.mrf.mxu0
    %2471 = vdwg.mxu0
    %2472 = vmatprep.subr.bf16.mxu0 0
    %2473 = vmatpush1.bf16.msra.mxu0 %v598
    %2474 = vmatprep.subr.bf16.mxu0 0
    %2475 = vmatpush1.bf16.msra.mxu0 %v597
    %2476 = vmatprep.subr.bf16.mxu0 0
    %2477 = vmatpush1.bf16.msra.mxu0 %v596
    %2478 = vmatprep.subr.bf16.mxu0 0
    %2479 = vmatpush1.bf16.msra.mxu0 %v595
    %2480 = vmatprep.subr.bf16.mxu0 0
    %2481 = vmatpush1.bf16.msra.mxu0 %v594
    %2482 = vmatprep.subr.bf16.mxu0 0
    %2483 = vmatpush1.bf16.msra.mxu0 %v593
    %2484 = vmatprep.subr.bf16.mxu0 0
    %2485 = vmatpush1.bf16.msra.mxu0 %v592
    %2486 = vmatprep.subr.bf16.mxu0 0
    %2487 = vmatpush1.bf16.msra.mxu0 %v591
    %2488 = vmatprep.subr.bf16.mxu0 0
    %2489 = vmatpush2.bf16.msra.mxu0 %v606
    %2490 = vmatprep.subr.bf16.mxu0 0
    %2491 = vmatpush2.bf16.msra.mxu0 %v605
    %2492 = vmatprep.subr.bf16.mxu0 0
    %2493 = vmatpush2.bf16.msra.mxu0 %v604
    %2494 = vmatprep.subr.bf16.mxu0 0
    %2495 = vmatpush2.bf16.msra.mxu0 %v603
    %2496 = vmatprep.subr.bf16.mxu0 0
    %2497 = vmatpush2.bf16.msra.mxu0 %v602
    %2498 = vmatprep.subr.bf16.mxu0 0
    %2499 = vmatpush2.bf16.msra.mxu0 %v601
    %2500 = vmatprep.subr.bf16.mxu0 0
    %2501 = vmatpush2.bf16.msra.mxu0 %v600
    %2502 = vmatprep.subr.bf16.mxu0 0
    %2503 = vmatpush2.bf16.msra.mxu0 %v599
    %2504 = vmatprep.mubr.bf16.mxu0 %v2328
    %2505 = vmatmul.mubr.bf16.gmra.mxu0 %v2326
    %v2506 = vpop.f32.mrf.mxu0
    %v2507 = vadd.f32 %v2467, %v2506
    %v2508 = vpop.f32.mrf.mxu0
    %v2509 = vpop.f32.mrf.mxu0
    %v2510 = vpop.f32.mrf.mxu0
    %2511 = vdwg.mxu0
    %2512 = vmatprep.subr.bf16.mxu0 0
    %2513 = vmatpush1.bf16.msra.mxu0 %v614
    %2514 = vmatprep.subr.bf16.mxu0 0
    %2515 = vmatpush1.bf16.msra.mxu0 %v613
    %2516 = vmatprep.subr.bf16.mxu0 0
    %2517 = vmatpush1.bf16.msra.mxu0 %v612
    %2518 = vmatprep.subr.bf16.mxu0 0
    %2519 = vmatpush1.bf16.msra.mxu0 %v611
    %2520 = vmatprep.subr.bf16.mxu0 0
    %2521 = vmatpush1.bf16.msra.mxu0 %v610
    %2522 = vmatprep.subr.bf16.mxu0 0
    %2523 = vmatpush1.bf16.msra.mxu0 %v609
    %2524 = vmatprep.subr.bf16.mxu0 0
    %2525 = vmatpush1.bf16.msra.mxu0 %v608
    %2526 = vmatprep.subr.bf16.mxu0 0
    %2527 = vmatpush1.bf16.msra.mxu0 %v607
    %2528 = vmatprep.subr.bf16.mxu0 0
    %2529 = vmatpush2.bf16.msra.mxu0 0
    %2530 = vmatprep.subr.bf16.mxu0 0
    %2531 = vmatpush2.bf16.msra.mxu0 0
    %2532 = vmatprep.subr.bf16.mxu0 0
    %2533 = vmatpush2.bf16.msra.mxu0 0
    %2534 = vmatprep.subr.bf16.mxu0 0
    %2535 = vmatpush2.bf16.msra.mxu0 0
    %2536 = vmatprep.subr.bf16.mxu0 0
    %2537 = vmatpush2.bf16.msra.mxu0 0
    %2538 = vmatprep.subr.bf16.mxu0 0
    %2539 = vmatpush2.bf16.msra.mxu0 0
    %2540 = vmatprep.subr.bf16.mxu0 0
    %2541 = vmatpush2.bf16.msra.mxu0 0
    %2542 = vmatprep.subr.bf16.mxu0 0
    %2543 = vmatpush2.bf16.msra.mxu0 0
    %2544 = vmatprep.mubr.bf16.mxu0 0
    %2545 = vmatmul.mubr.bf16.gmra.mxu0 %v2342
    %v2546 = vpop.f32.mrf.mxu0
    %v2547 = vadd.f32 %v2507, %v2546
    %v2548 = vpop.f32.mrf.mxu0
    %v2549 = vpop.f32.mrf.mxu0
    %v2550 = vpop.f32.mrf.mxu0
    %2551 = vdwg.mxu0
    %v2552 = vmax.f32 %v2547, 0.0
    %v2553 = vpack.c.bf16 %v2552, %v2552
    %s2554 = scalar_lea.vmem %s3, 768
    %v2555 = vld [vmem:[%s2554] sm:$0xff]
    %v2556 = vld [vmem:[%s2554 + $0x8] sm:$0xff]
    %v2557 = vld [vmem:[%s2554 + $0x10] sm:$0xff]
    %v2558 = vld [vmem:[%s2554 + $0x18] sm:$0xff]
    %v2559 = vld [vmem:[%s2554 + $0x20] sm:$0xff]
    %v2560 = vld [vmem:[%s2554 + $0x28] sm:$0xff]
    %v2561 = vld [vmem:[%s2554 + $0x30] sm:$0xff]
    %v2562 = vld [vmem:[%s2554 + $0x38] sm:$0xff]
    %v2563 = vld [vmem:[%s2554 + $0x40] sm:$0xff]
    %v2564 = vld [vmem:[%s2554 + $0x48] sm:$0xff]
    %v2565 = vld [vmem:[%s2554 + $0x50] sm:$0xff]
    %v2566 = vld [vmem:[%s2554 + $0x58] sm:$0xff]
    %v2567 = vld [vmem:[%s2554 + $0x60] sm:$0xff]
    %v2568 = vld [vmem:[%s2554 + $0x68] sm:$0xff]
    %v2569 = vld [vmem:[%s2554 + $0x70] sm:$0xff]
    %v2570 = vld [vmem:[%s2554 + $0x78] sm:$0xff]
    %v2571 = vld [vmem:[%s2554 + $0x80] sm:$0xff]
    %v2572 = vld [vmem:[%s2554 + $0x88] sm:$0xff]
    %v2573 = vld [vmem:[%s2554 + $0x90] sm:$0xff]
    %v2574 = vld [vmem:[%s2554 + $0x98] sm:$0xff]
    %v2575 = vld [vmem:[%s2554 + $0xa0] sm:$0xff]
    %v2576 = vld [vmem:[%s2554 + $0xa8] sm:$0xff]
    %v2577 = vld [vmem:[%s2554 + $0xb0] sm:$0xff]
    %v2578 = vld [vmem:[%s2554 + $0xb8] sm:$0xff]
    %v2579 = vld [vmem:[%s2554 + $0xc0] sm:$0xff]
    %v2580 = vld [vmem:[%s2554 + $0xc8] sm:$0xff]
    %v2581 = vld [vmem:[%s2554 + $0xd0] sm:$0xff]
    %v2582 = vld [vmem:[%s2554 + $0xd8] sm:$0xff]
    %v2583 = vld [vmem:[%s2554 + $0xe0] sm:$0xff]
    %v2584 = vld [vmem:[%s2554 + $0xe8] sm:$0xff]
    %v2585 = vld [vmem:[%s2554 + $0xf0] sm:$0xff]
    %v2586 = vld [vmem:[%s2554 + $0xf8] sm:$0xff]
    %v2619 = vunpack.c.l.b16 %v2555
    %v2620 = vunpack.c.h.b16 %v2555
    %v2621 = vunpack.c.l.b16 %v2556
    %v2622 = vunpack.c.h.b16 %v2556
    %v2623 = vunpack.c.l.b16 %v2557
    %v2624 = vunpack.c.h.b16 %v2557
    %v2625 = vunpack.c.l.b16 %v2558
    %v2626 = vunpack.c.h.b16 %v2558
    %v2627 = vunpack.c.l.b16 %v2559
    %v2628 = vunpack.c.h.b16 %v2559
    %v2629 = vunpack.c.l.b16 %v2560
    %v2630 = vunpack.c.h.b16 %v2560
    %v2631 = vunpack.c.l.b16 %v2561
    %v2632 = vunpack.c.h.b16 %v2561
    %v2633 = vunpack.c.l.b16 %v2562
    %v2634 = vunpack.c.h.b16 %v2562
    %v2635 = vunpack.c.l.b16 %v2563
    %v2636 = vunpack.c.h.b16 %v2563
    %v2637 = vunpack.c.l.b16 %v2564
    %v2638 = vunpack.c.h.b16 %v2564
    %v2639 = vunpack.c.l.b16 %v2565
    %v2640 = vunpack.c.h.b16 %v2565
    %v2641 = vunpack.c.l.b16 %v2566
    %v2642 = vunpack.c.h.b16 %v2566
    %v2643 = vunpack.c.l.b16 %v2567
    %v2644 = vunpack.c.h.b16 %v2567
    %v2645 = vunpack.c.l.b16 %v2568
    %v2646 = vunpack.c.h.b16 %v2568
    %v2647 = vunpack.c.l.b16 %v2569
    %v2648 = vunpack.c.h.b16 %v2569
    %v2649 = vunpack.c.l.b16 %v2570
    %v2650 = vunpack.c.h.b16 %v2570
    %v2651 = vunpack.c.l.b16 %v2571
    %v2652 = vunpack.c.h.b16 %v2571
    %v2653 = vunpack.c.l.b16 %v2572
    %v2654 = vunpack.c.h.b16 %v2572
    %v2655 = vunpack.c.l.b16 %v2573
    %v2656 = vunpack.c.h.b16 %v2573
    %v2657 = vunpack.c.l.b16 %v2574
    %v2658 = vunpack.c.h.b16 %v2574
    %v2659 = vunpack.c.l.b16 %v2575
    %v2660 = vunpack.c.h.b16 %v2575
    %v2661 = vunpack.c.l.b16 %v2576
    %v2662 = vunpack.c.h.b16 %v2576
    %v2663 = vunpack.c.l.b16 %v2577
    %v2664 = vunpack.c.h.b16 %v2577
    %v2665 = vunpack.c.l.b16 %v2578
    %v2666 = vunpack.c.h.b16 %v2578
    %v2667 = vunpack.c.l.b16 %v2579
    %v2668 = vunpack.c.h.b16 %v2579
    %v2669 = vunpack.c.l.b16 %v2580
    %v2670 = vunpack.c.h.b16 %v2580
    %v2671 = vunpack.c.l.b16 %v2581
    %v2672 = vunpack.c.h.b16 %v2581
    %v2673 = vunpack.c.l.b16 %v2582
    %v2674 = vunpack.c.h.b16 %v2582
    %v2675 = vunpack.c.l.b16 %v2583
    %v2676 = vunpack.c.h.b16 %v2583
    %v2677 = vunpack.c.l.b16 %v2584
    %v2678 = vunpack.c.h.b16 %v2584
    %v2679 = vunpack.c.l.b16 %v2585
    %v2680 = vunpack.c.h.b16 %v2585
    %v2681 = vunpack.c.l.b16 %v2586
    %v2682 = vunpack.c.h.b16 %v2586
    %v2683 = vpack.c.b16 %v2623, %v2619
    %v2684 = vpack.c.b16 %v2624, %v2620
    %v2685 = vpack.c.b16 %v2625, %v2621
    %v2686 = vpack.c.b16 %v2626, %v2622
    %v2687 = vpack.c.b16 %v2631, %v2627
    %v2688 = vpack.c.b16 %v2632, %v2628
    %v2689 = vpack.c.b16 %v2633, %v2629
    %v2690 = vpack.c.b16 %v2634, %v2630
    %v2691 = vpack.c.b16 %v2639, %v2635
    %v2692 = vpack.c.b16 %v2640, %v2636
    %v2693 = vpack.c.b16 %v2641, %v2637
    %v2694 = vpack.c.b16 %v2642, %v2638
    %v2695 = vpack.c.b16 %v2647, %v2643
    %v2696 = vpack.c.b16 %v2648, %v2644
    %v2697 = vpack.c.b16 %v2649, %v2645
    %v2698 = vpack.c.b16 %v2650, %v2646
    %v2699 = vpack.c.b16 %v2655, %v2651
    %v2700 = vpack.c.b16 %v2656, %v2652
    %v2701 = vpack.c.b16 %v2657, %v2653
    %v2702 = vpack.c.b16 %v2658, %v2654
    %v2703 = vpack.c.b16 %v2663, %v2659
    %v2704 = vpack.c.b16 %v2664, %v2660
    %v2705 = vpack.c.b16 %v2665, %v2661
    %v2706 = vpack.c.b16 %v2666, %v2662
    %v2707 = vpack.c.b16 %v2671, %v2667
    %v2708 = vpack.c.b16 %v2672, %v2668
    %v2709 = vpack.c.b16 %v2673, %v2669
    %v2710 = vpack.c.b16 %v2674, %v2670
    %v2711 = vpack.c.b16 %v2679, %v2675
    %v2712 = vpack.c.b16 %v2680, %v2676
    %v2713 = vpack.c.b16 %v2681, %v2677
    %v2714 = vpack.c.b16 %v2682, %v2678
    %2747 = vmatprep.subr.bf16.mxu0 %v2712
    %2748 = vmatpush1.bf16.msra.mxu0 %v2711
    %2749 = vmatprep.subr.bf16.mxu0 %v2708
    %2750 = vmatpush1.bf16.msra.mxu0 %v2707
    %2751 = vmatprep.subr.bf16.mxu0 %v2704
    %2752 = vmatpush1.bf16.msra.mxu0 %v2703
    %2753 = vmatprep.subr.bf16.mxu0 %v2700
    %2754 = vmatpush1.bf16.msra.mxu0 %v2699
    %2755 = vmatprep.subr.bf16.mxu0 %v2696
    %2756 = vmatpush1.bf16.msra.mxu0 %v2695
    %2757 = vmatprep.subr.bf16.mxu0 %v2692
    %2758 = vmatpush1.bf16.msra.mxu0 %v2691
    %2759 = vmatprep.subr.bf16.mxu0 %v2688
    %2760 = vmatpush1.bf16.msra.mxu0 %v2687
    %2761 = vmatprep.subr.bf16.mxu0 %v2684
    %2762 = vmatpush1.bf16.msra.mxu0 %v2683
    %2763 = vmatprep.subr.bf16.mxu0 0
    %2764 = vmatpush2.bf16.msra.mxu0 0
    %2765 = vmatprep.subr.bf16.mxu0 0
    %2766 = vmatpush2.bf16.msra.mxu0 0
    %2767 = vmatprep.subr.bf16.mxu0 0
    %2768 = vmatpush2.bf16.msra.mxu0 0
    %2769 = vmatprep.subr.bf16.mxu0 0
    %2770 = vmatpush2.bf16.msra.mxu0 0
    %2771 = vmatprep.subr.bf16.mxu0 0
    %2772 = vmatpush2.bf16.msra.mxu0 0
    %2773 = vmatprep.subr.bf16.mxu0 0
    %2774 = vmatpush2.bf16.msra.mxu0 0
    %2775 = vmatprep.subr.bf16.mxu0 0
    %2776 = vmatpush2.bf16.msra.mxu0 0
    %2777 = vmatprep.subr.bf16.mxu0 0
    %2778 = vmatpush2.bf16.msra.mxu0 0
    %2779 = vmatprep.mubr.bf16.mxu0 0
    %2780 = vmatmul.mubr.bf16.gmra.mxu0 %v2553
    %v2781 = vpop.f32.mrf.mxu0
    %v2782 = vadd.f32 0.0, %v2781
    %v2783 = vpop.f32.mrf.mxu0
    %v2784 = vadd.f32 0.0, %v2783
    %v2785 = vpop.f32.mrf.mxu0
    %v2786 = vpop.f32.mrf.mxu0
    %2787 = vdwg.mxu0
    %2788 = vmatprep.subr.bf16.mxu0 %v2714
    %2789 = vmatpush1.bf16.msra.mxu0 %v2713
    %2790 = vmatprep.subr.bf16.mxu0 %v2710
    %2791 = vmatpush1.bf16.msra.mxu0 %v2709
    %2792 = vmatprep.subr.bf16.mxu0 %v2706
    %2793 = vmatpush1.bf16.msra.mxu0 %v2705
    %2794 = vmatprep.subr.bf16.mxu0 %v2702
    %2795 = vmatpush1.bf16.msra.mxu0 %v2701
    %2796 = vmatprep.subr.bf16.mxu0 %v2698
    %2797 = vmatpush1.bf16.msra.mxu0 %v2697
    %2798 = vmatprep.subr.bf16.mxu0 %v2694
    %2799 = vmatpush1.bf16.msra.mxu0 %v2693
    %2800 = vmatprep.subr.bf16.mxu0 %v2690
    %2801 = vmatpush1.bf16.msra.mxu0 %v2689
    %2802 = vmatprep.subr.bf16.mxu0 %v2686
    %2803 = vmatpush1.bf16.msra.mxu0 %v2685
    %2804 = vmatprep.subr.bf16.mxu0 0
    %2805 = vmatpush2.bf16.msra.mxu0 0
    %2806 = vmatprep.subr.bf16.mxu0 0
    %2807 = vmatpush2.bf16.msra.mxu0 0
    %2808 = vmatprep.subr.bf16.mxu0 0
    %2809 = vmatpush2.bf16.msra.mxu0 0
    %2810 = vmatprep.subr.bf16.mxu0 0
    %2811 = vmatpush2.bf16.msra.mxu0 0
    %2812 = vmatprep.subr.bf16.mxu0 0
    %2813 = vmatpush2.bf16.msra.mxu0 0
    %2814 = vmatprep.subr.bf16.mxu0 0
    %2815 = vmatpush2.bf16.msra.mxu0 0
    %2816 = vmatprep.subr.bf16.mxu0 0
    %2817 = vmatpush2.bf16.msra.mxu0 0
    %2818 = vmatprep.subr.bf16.mxu0 0
    %2819 = vmatpush2.bf16.msra.mxu0 0
    %2820 = vmatprep.mubr.bf16.mxu0 0
    %2821 = vmatmul.mubr.bf16.gmra.mxu0 %v2553
    %v2822 = vpop.f32.mrf.mxu0
    %v2823 = vadd.f32 0.0, %v2822
    %v2824 = vpop.f32.mrf.mxu0
    %v2825 = vadd.f32 0.0, %v2824
    %v2826 = vpop.f32.mrf.mxu0
    %v2827 = vpop.f32.mrf.mxu0
    %2828 = vdwg.mxu0
    %v2829 = vadd.f32 %v2271, %v2782
    %v2830 = vadd.f32 %v2272, %v2784
    %v2831 = vadd.f32 %v2273, %v2823
    %v2832 = vadd.f32 %v2274, %v2825
    %v2833 = vld [vmem:[%s4] sm:$0xf]
    %v2835 = vlaneseq
    %v2836 = vshrl.u32 %v2835, 7
    %v2837 = vsub.s32 0, %v2836
    %v2838 = vrot.slane %v2833, %v2837
    %v2839 = vlaneseq
    %v2840 = vshrl.u32 %v2839, 7
    %v2841 = vsub.s32 1, %v2840
    %v2842 = vrot.slane %v2833, %v2841
    %v2843 = vlaneseq
    %v2844 = vshrl.u32 %v2843, 7
    %v2845 = vsub.s32 2, %v2844
    %v2846 = vrot.slane %v2833, %v2845
    %v2847 = vlaneseq
    %v2848 = vshrl.u32 %v2847, 7
    %v2849 = vsub.s32 3, %v2848
    %v2850 = vrot.slane %v2833, %v2849
    %v2855 = vadd.f32 %v2829, %v2838
    %v2856 = vadd.f32 %v2830, %v2842
    %v2857 = vadd.f32 %v2831, %v2846
    %v2858 = vadd.f32 %v2832, %v2850
    %v2859 = vmax.f32 %v2855, 0.0
    %v2860 = vmax.f32 %v2856, 0.0
    %v2861 = vmax.f32 %v2857, 0.0
    %v2862 = vmax.f32 %v2858, 0.0
    %v2863 = vpack.c.bf16 %v2859, %v2859
    %v2864 = vpack.c.bf16 %v2860, %v2860
    %v2865 = vpack.c.bf16 %v2861, %v2861
    %v2866 = vpack.c.bf16 %v2862, %v2862
    %v2867 = vld [vmem:[%s5] sm:$0xf]
    %v2868 = vld [vmem:[%s5 + $0x4] sm:$0xf]
    %v2869 = vld [vmem:[%s5 + $0x8] sm:$0xf]
    %v2870 = vld [vmem:[%s5 + $0xc] sm:$0xf]
    %v2871 = vld [vmem:[%s5 + $0x10] sm:$0xf]
    %v2872 = vld [vmem:[%s5 + $0x14] sm:$0xf]
    %v2873 = vld [vmem:[%s5 + $0x18] sm:$0xf]
    %v2874 = vld [vmem:[%s5 + $0x1c] sm:$0xf]
    %v2875 = vld [vmem:[%s5 + $0x20] sm:$0xf]
    %v2876 = vld [vmem:[%s5 + $0x24] sm:$0xf]
    %v2877 = vld [vmem:[%s5 + $0x28] sm:$0xf]
    %v2878 = vld [vmem:[%s5 + $0x2c] sm:$0xf]
    %v2879 = vld [vmem:[%s5 + $0x30] sm:$0xf]
    %v2880 = vld [vmem:[%s5 + $0x34] sm:$0xf]
    %v2881 = vld [vmem:[%s5 + $0x38] sm:$0xf]
    %v2882 = vld [vmem:[%s5 + $0x3c] sm:$0xf]
    %v2883 = vld [vmem:[%s5 + $0x40] sm:$0xf]
    %v2884 = vld [vmem:[%s5 + $0x44] sm:$0xf]
    %v2885 = vld [vmem:[%s5 + $0x48] sm:$0xf]
    %v2886 = vld [vmem:[%s5 + $0x4c] sm:$0xf]
    %v2887 = vld [vmem:[%s5 + $0x50] sm:$0xf]
    %v2888 = vld [vmem:[%s5 + $0x54] sm:$0xf]
    %v2889 = vld [vmem:[%s5 + $0x58] sm:$0xf]
    %v2890 = vld [vmem:[%s5 + $0x5c] sm:$0xf]
    %v2891 = vld [vmem:[%s5 + $0x60] sm:$0xf]
    %v2892 = vld [vmem:[%s5 + $0x64] sm:$0xf]
    %v2893 = vld [vmem:[%s5 + $0x68] sm:$0xf]
    %v2894 = vld [vmem:[%s5 + $0x6c] sm:$0xf]
    %v2895 = vld [vmem:[%s5 + $0x70] sm:$0xf]
    %v2896 = vld [vmem:[%s5 + $0x74] sm:$0xf]
    %v2897 = vld [vmem:[%s5 + $0x78] sm:$0xf]
    %v2898 = vld [vmem:[%s5 + $0x7c] sm:$0xf]
    %v2899 = vld [vmem:[%s5 + $0x80] sm:$0xf]
    %v2900 = vld [vmem:[%s5 + $0x84] sm:$0xf]
    %v2901 = vld [vmem:[%s5 + $0x88] sm:$0xf]
    %v2902 = vld [vmem:[%s5 + $0x8c] sm:$0xf]
    %v2903 = vld [vmem:[%s5 + $0x90] sm:$0xf]
    %v2904 = vld [vmem:[%s5 + $0x94] sm:$0xf]
    %v2905 = vld [vmem:[%s5 + $0x98] sm:$0xf]
    %v2906 = vld [vmem:[%s5 + $0x9c] sm:$0xf]
    %v2907 = vld [vmem:[%s5 + $0xa0] sm:$0xf]
    %v2908 = vld [vmem:[%s5 + $0xa4] sm:$0xf]
    %v2909 = vld [vmem:[%s5 + $0xa8] sm:$0xf]
    %v2910 = vld [vmem:[%s5 + $0xac] sm:$0xf]
    %v2911 = vld [vmem:[%s5 + $0xb0] sm:$0xf]
    %v2912 = vld [vmem:[%s5 + $0xb4] sm:$0xf]
    %v2913 = vld [vmem:[%s5 + $0xb8] sm:$0xf]
    %v2914 = vld [vmem:[%s5 + $0xbc] sm:$0xf]
    %v2915 = vld [vmem:[%s5 + $0xc0] sm:$0xf]
    %v2916 = vld [vmem:[%s5 + $0xc4] sm:$0xf]
    %v2917 = vld [vmem:[%s5 + $0xc8] sm:$0xf]
    %v2918 = vld [vmem:[%s5 + $0xcc] sm:$0xf]
    %v2919 = vld [vmem:[%s5 + $0xd0] sm:$0xf]
    %v2920 = vld [vmem:[%s5 + $0xd4] sm:$0xf]
    %v2921 = vld [vmem:[%s5 + $0xd8] sm:$0xf]
    %v2922 = vld [vmem:[%s5 + $0xdc] sm:$0xf]
    %v2923 = vld [vmem:[%s5 + $0xe0] sm:$0xf]
    %v2924 = vld [vmem:[%s5 + $0xe4] sm:$0xf]
    %v2925 = vld [vmem:[%s5 + $0xe8] sm:$0xf]
    %v2926 = vld [vmem:[%s5 + $0xec] sm:$0xf]
    %v2927 = vld [vmem:[%s5 + $0xf0] sm:$0xf]
    %v2928 = vld [vmem:[%s5 + $0xf4] sm:$0xf]
    %v2929 = vld [vmem:[%s5 + $0xf8] sm:$0xf]
    %v2930 = vld [vmem:[%s5 + $0xfc] sm:$0xf]
    %v2931 = vld [vmem:[%s6] sm:$0x1]
    %v2933 = vlaneseq
    %v2934 = vshrl.u32 %v2933, 7
    %v2935 = vsub.s32 0, %v2934
    %v2936 = vrot.slane %v2931, %v2935
    %v3002 = vunpack.c.l.b16 %v2867
    %v3003 = vunpack.c.l.b16 %v2868
    %v3004 = vunpack.c.l.b16 %v2869
    %v3005 = vunpack.c.l.b16 %v2870
    %v3006 = vunpack.c.l.b16 %v2871
    %v3007 = vunpack.c.l.b16 %v2872
    %v3008 = vunpack.c.l.b16 %v2873
    %v3009 = vunpack.c.l.b16 %v2874
    %v3010 = vunpack.c.l.b16 %v2875
    %v3011 = vunpack.c.l.b16 %v2876
    %v3012 = vunpack.c.l.b16 %v2877
    %v3013 = vunpack.c.l.b16 %v2878
    %v3014 = vunpack.c.l.b16 %v2879
    %v3015 = vunpack.c.l.b16 %v2880
    %v3016 = vunpack.c.l.b16 %v2881
    %v3017 = vunpack.c.l.b16 %v2882
    %v3018 = vunpack.c.l.b16 %v2883
    %v3019 = vunpack.c.l.b16 %v2884
    %v3020 = vunpack.c.l.b16 %v2885
    %v3021 = vunpack.c.l.b16 %v2886
    %v3022 = vunpack.c.l.b16 %v2887
    %v3023 = vunpack.c.l.b16 %v2888
    %v3024 = vunpack.c.l.b16 %v2889
    %v3025 = vunpack.c.l.b16 %v2890
    %v3026 = vunpack.c.l.b16 %v2891
    %v3027 = vunpack.c.l.b16 %v2892
    %v3028 = vunpack.c.l.b16 %v2893
    %v3029 = vunpack.c.l.b16 %v2894
    %v3030 = vunpack.c.l.b16 %v2895
    %v3031 = vunpack.c.l.b16 %v2896
    %v3032 = vunpack.c.l.b16 %v2897
    %v3033 = vunpack.c.l.b16 %v2898
    %v3034 = vunpack.c.l.b16 %v2899
    %v3035 = vunpack.c.l.b16 %v2900
    %v3036 = vunpack.c.l.b16 %v2901
    %v3037 = vunpack.c.l.b16 %v2902
    %v3038 = vunpack.c.l.b16 %v2903
    %v3039 = vunpack.c.l.b16 %v2904
    %v3040 = vunpack.c.l.b16 %v2905
    %v3041 = vunpack.c.l.b16 %v2906
    %v3042 = vunpack.c.l.b16 %v2907
    %v3043 = vunpack.c.l.b16 %v2908
    %v3044 = vunpack.c.l.b16 %v2909
    %v3045 = vunpack.c.l.b16 %v2910
    %v3046 = vunpack.c.l.b16 %v2911
    %v3047 = vunpack.c.l.b16 %v2912
    %v3048 = vunpack.c.l.b16 %v2913
    %v3049 = vunpack.c.l.b16 %v2914
    %v3050 = vunpack.c.l.b16 %v2915
    %v3051 = vunpack.c.l.b16 %v2916
    %v3052 = vunpack.c.l.b16 %v2917
    %v3053 = vunpack.c.l.b16 %v2918
    %v3054 = vunpack.c.l.b16 %v2919
    %v3055 = vunpack.c.l.b16 %v2920
    %v3056 = vunpack.c.l.b16 %v2921
    %v3057 = vunpack.c.l.b16 %v2922
    %v3058 = vunpack.c.l.b16 %v2923
    %v3059 = vunpack.c.l.b16 %v2924
    %v3060 = vunpack.c.l.b16 %v2925
    %v3061 = vunpack.c.l.b16 %v2926
    %v3062 = vunpack.c.l.b16 %v2927
    %v3063 = vunpack.c.l.b16 %v2928
    %v3064 = vunpack.c.l.b16 %v2929
    %v3065 = vunpack.c.l.b16 %v2930
    %v3066 = vpack.c.b16 %v3003, %v3002
    %v3067 = vpack.c.b16 %v3005, %v3004
    %v3068 = vpack.c.b16 %v3007, %v3006
    %v3069 = vpack.c.b16 %v3009, %v3008
    %v3070 = vpack.c.b16 %v3011, %v3010
    %v3071 = vpack.c.b16 %v3013, %v3012
    %v3072 = vpack.c.b16 %v3015, %v3014
    %v3073 = vpack.c.b16 %v3017, %v3016
    %v3074 = vpack.c.b16 %v3019, %v3018
    %v3075 = vpack.c.b16 %v3021, %v3020
    %v3076 = vpack.c.b16 %v3023, %v3022
    %v3077 = vpack.c.b16 %v3025, %v3024
    %v3078 = vpack.c.b16 %v3027, %v3026
    %v3079 = vpack.c.b16 %v3029, %v3028
    %v3080 = vpack.c.b16 %v3031, %v3030
    %v3081 = vpack.c.b16 %v3033, %v3032
    %v3082 = vpack.c.b16 %v3035, %v3034
    %v3083 = vpack.c.b16 %v3037, %v3036
    %v3084 = vpack.c.b16 %v3039, %v3038
    %v3085 = vpack.c.b16 %v3041, %v3040
    %v3086 = vpack.c.b16 %v3043, %v3042
    %v3087 = vpack.c.b16 %v3045, %v3044
    %v3088 = vpack.c.b16 %v3047, %v3046
    %v3089 = vpack.c.b16 %v3049, %v3048
    %v3090 = vpack.c.b16 %v3051, %v3050
    %v3091 = vpack.c.b16 %v3053, %v3052
    %v3092 = vpack.c.b16 %v3055, %v3054
    %v3093 = vpack.c.b16 %v3057, %v3056
    %v3094 = vpack.c.b16 %v3059, %v3058
    %v3095 = vpack.c.b16 %v3061, %v3060
    %v3096 = vpack.c.b16 %v3063, %v3062
    %v3097 = vpack.c.b16 %v3065, %v3064
    %3130 = vmatprep.subr.bf16.mxu0 0
    %3131 = vmatpush1.bf16.msra.mxu0 %v3073
    %3132 = vmatprep.subr.bf16.mxu0 0
    %3133 = vmatpush1.bf16.msra.mxu0 %v3072
    %3134 = vmatprep.subr.bf16.mxu0 0
    %3135 = vmatpush1.bf16.msra.mxu0 %v3071
    %3136 = vmatprep.subr.bf16.mxu0 0
    %3137 = vmatpush1.bf16.msra.mxu0 %v3070
    %3138 = vmatprep.subr.bf16.mxu0 0
    %3139 = vmatpush1.bf16.msra.mxu0 %v3069
    %3140 = vmatprep.subr.bf16.mxu0 0
    %3141 = vmatpush1.bf16.msra.mxu0 %v3068
    %3142 = vmatprep.subr.bf16.mxu0 0
    %3143 = vmatpush1.bf16.msra.mxu0 %v3067
    %3144 = vmatprep.subr.bf16.mxu0 0
    %3145 = vmatpush1.bf16.msra.mxu0 %v3066
    %3146 = vmatprep.subr.bf16.mxu0 0
    %3147 = vmatpush2.bf16.msra.mxu0 %v3081
    %3148 = vmatprep.subr.bf16.mxu0 0
    %3149 = vmatpush2.bf16.msra.mxu0 %v3080
    %3150 = vmatprep.subr.bf16.mxu0 0
    %3151 = vmatpush2.bf16.msra.mxu0 %v3079
    %3152 = vmatprep.subr.bf16.mxu0 0
    %3153 = vmatpush2.bf16.msra.mxu0 %v3078
    %3154 = vmatprep.subr.bf16.mxu0 0
    %3155 = vmatpush2.bf16.msra.mxu0 %v3077
    %3156 = vmatprep.subr.bf16.mxu0 0
    %3157 = vmatpush2.bf16.msra.mxu0 %v3076
    %3158 = vmatprep.subr.bf16.mxu0 0
    %3159 = vmatpush2.bf16.msra.mxu0 %v3075
    %3160 = vmatprep.subr.bf16.mxu0 0
    %3161 = vmatpush2.bf16.msra.mxu0 %v3074
    %3162 = vmatprep.mubr.bf16.mxu0 %v2864
    %3163 = vmatmul.mubr.bf16.gmra.mxu0 %v2863
    %v3164 = vpop.f32.mrf.mxu0
    %v3165 = vadd.f32 %v2936, %v3164
    %v3166 = vpop.f32.mrf.mxu0
    %v3167 = vpop.f32.mrf.mxu0
    %v3168 = vpop.f32.mrf.mxu0
    %3169 = vdwg.mxu0
    %3170 = vmatprep.subr.bf16.mxu0 0
    %3171 = vmatpush1.bf16.msra.mxu0 %v3089
    %3172 = vmatprep.subr.bf16.mxu0 0
    %3173 = vmatpush1.bf16.msra.mxu0 %v3088
    %3174 = vmatprep.subr.bf16.mxu0 0
    %3175 = vmatpush1.bf16.msra.mxu0 %v3087
    %3176 = vmatprep.subr.bf16.mxu0 0
    %3177 = vmatpush1.bf16.msra.mxu0 %v3086
    %3178 = vmatprep.subr.bf16.mxu0 0
    %3179 = vmatpush1.bf16.msra.mxu0 %v3085
    %3180 = vmatprep.subr.bf16.mxu0 0
    %3181 = vmatpush1.bf16.msra.mxu0 %v3084
    %3182 = vmatprep.subr.bf16.mxu0 0
    %3183 = vmatpush1.bf16.msra.mxu0 %v3083
    %3184 = vmatprep.subr.bf16.mxu0 0
    %3185 = vmatpush1.bf16.msra.mxu0 %v3082
    %3186 = vmatprep.subr.bf16.mxu0 0
    %3187 = vmatpush2.bf16.msra.mxu0 %v3097
    %3188 = vmatprep.subr.bf16.mxu0 0
    %3189 = vmatpush2.bf16.msra.mxu0 %v3096
    %3190 = vmatprep.subr.bf16.mxu0 0
    %3191 = vmatpush2.bf16.msra.mxu0 %v3095
    %3192 = vmatprep.subr.bf16.mxu0 0
    %3193 = vmatpush2.bf16.msra.mxu0 %v3094
    %3194 = vmatprep.subr.bf16.mxu0 0
    %3195 = vmatpush2.bf16.msra.mxu0 %v3093
    %3196 = vmatprep.subr.bf16.mxu0 0
    %3197 = vmatpush2.bf16.msra.mxu0 %v3092
    %3198 = vmatprep.subr.bf16.mxu0 0
    %3199 = vmatpush2.bf16.msra.mxu0 %v3091
    %3200 = vmatprep.subr.bf16.mxu0 0
    %3201 = vmatpush2.bf16.msra.mxu0 %v3090
    %3202 = vmatprep.mubr.bf16.mxu0 %v2866
    %3203 = vmatmul.mubr.bf16.gmra.mxu0 %v2865
    %v3204 = vpop.f32.mrf.mxu0
    %v3205 = vadd.f32 %v3165, %v3204
    %v3206 = vpop.f32.mrf.mxu0
    %v3207 = vpop.f32.mrf.mxu0
    %v3208 = vpop.f32.mrf.mxu0
    %3209 = vdwg.mxu0
    %3210 = vst [vmem:[#allocation2] sm:$0x3] %v3205
    // Predicated region
    $region30: #{cnndqn_forward.5} parent=1 // pred_check
      _
    $region31: #{cnndqn_forward.5} parent=1 // pred_check_branch
      %3212 = sbr.rel (0) target = $region33
    $region32: #{cnndqn_forward.5} parent=1 // pred_region
      %s3214 = ssub.s32 32, 32
      %3215 = vsyncadd [#allocation3], %s3214
      %s3217 = sshll.u32 [#allocation2], 4
      %s3218 = int_to_ptr.vmem [resolvable:$true] %s3217
      %3220 = dma.vmem_to_hbm [thread:$0]  %s3218, 32, %s7, [#allocation3]
    $region33: #{cnndqn_forward.5} parent=1 // pred_fallthru
      _
    // Predicated region
    $region34: #{cnndqn_forward.5} parent=1 // pred_check
      _
    $region35: #{cnndqn_forward.5} parent=1 // pred_check_branch
      %3222 = sbr.rel (0) target = $region37
    $region36: #{cnndqn_forward.5} parent=1 // pred_region
      %3223 = dma.done [#allocation3], 32
    $region37: #{cnndqn_forward.5} parent=1 // pred_fallthru
      _
    %3224 = vsyncpa [#allocation3], 1

</llo_original>
